<compile_context>
chip_gen: v6e
topology: v6e:2x2x1
jax: 0.10.0
libtpu: 0.0.40
codegen_flags: <defaults>
</compile_context>

<pallas_src>
import functools

import numpy as np

import jax
import jax.numpy as jnp
from jax import lax
from jax.experimental import pallas as pl
from jax.experimental.pallas import tpu as pltpu

HIDDEN = 32
NHEAD = 8
HEAD_DIM = HIDDEN // NHEAD
FFN = 4 * HIDDEN                 # 128
NUM_LAYERS = 5                   # 1 "ethics" (BERT stand-in) + 4 privacy layers
LN_EPS = 1e-5
SCORE_LANES = 128                # lane-dense slab for the two (N, 1) score heads

# Head-parameter slab row layout (per head): rows [0,H) = w1 (lanes 0:2H),
# rows [H,3H) = lane-dense-padded w2, row HEAD_B1_R = b1, row HEAD_B2_R = padded b2.
HEAD_B1_R = 3 * HIDDEN           # 96  (multiple of 8 -> aligned sublane slice)
HEAD_B2_R = HEAD_B1_R + 8        # 104
HEAD_ROWS = HEAD_B2_R + 8        # 112


# ---------------------------------------------------------------------------
# In-kernel helpers (traced inside the single fused kernel)
# ---------------------------------------------------------------------------
def _layer_norm(h, gamma, beta):
    # mean / mean-of-squares: the two cross-lane reduces are independent (can
    # overlap on the XLU) instead of the dependent two-pass form.
    mu = jnp.mean(h, axis=-1, keepdims=True)
    ms = jnp.mean(h * h, axis=-1, keepdims=True)
    var = ms - mu * mu
    return (h - mu) * lax.rsqrt(var + LN_EPS) * gamma + beta


def _mlp_head(x, w1, b1, w2p, b2p):
    """Linear(H,2H) -> ReLU -> Linear(2H, 128 lane-dense padded).  Returns logits."""
    h = jnp.maximum(jnp.dot(x, w1, preferred_element_type=jnp.float32) + b1, 0.0)
    return jnp.dot(h, w2p, preferred_element_type=jnp.float32) + b2p   # (N, 128)


def _encoder_layer(x, att_mask, vmask, ones_bd,
                   wqkv, bqkv, wo, bo, g1, be1, w1, b1, w2, b2, g2, be2):
    """Post-LN nn.TransformerEncoderLayer (eval): MHA + add&LN + FFN + add&LN.

    All 8 heads are handled jointly via block-diagonal packing: K/V replicated per
    head and masked by `vmask` so head h's scores land in lane segment
    [h*N, (h+1)*N) of one (N, NHEAD*N) matmul result.
    """
    n, hid = x.shape

    # Fused QKV projection (attention scale pre-folded into the Q columns).
    qkv = jnp.dot(x, wqkv, preferred_element_type=jnp.float32) + bqkv    # (N, 3H)
    q = qkv[:, 0:hid]
    k = qkv[:, hid:2 * hid]
    v = qkv[:, 2 * hid:3 * hid]

    # Block-diagonal packing: (NHEAD*N, H), zero outside each head's feature block.
    kp = jnp.concatenate([k] * NHEAD, axis=0) * vmask                   # (NH*N, H)
    vp = jnp.concatenate([v] * NHEAD, axis=0) * vmask                   # (NH*N, H)

    # ALL head scores in one lane-dense matmul (contract last dims, no transpose).
    s = lax.dot_general(q, kp, (((1,), (1,)), ((), ())),
                        preferred_element_type=jnp.float32)             # (N, NH*N)
    s = s + att_mask                                                    # same-batch mask
    s = s - jnp.max(s, axis=-1, keepdims=True)   # global row max; shift-invariant per segment
    p = jnp.exp(s)
    # Per-head (N-lane segment) sums via one matmul against block-diagonal ones.
    seg_sum = jnp.dot(p, ones_bd, preferred_element_type=jnp.float32)   # (N, NH*N)
    p = p * pl.reciprocal(seg_sum, approx=True)
    # ALL head contexts in one matmul; vmask routes each head back to its dims.
    ctx = jnp.dot(p, vp, preferred_element_type=jnp.float32)            # (N, H)

    attn = jnp.dot(ctx, wo, preferred_element_type=jnp.float32) + bo
    h1 = _layer_norm(x + attn, g1, be1)

    f = jnp.maximum(jnp.dot(h1, w1, preferred_element_type=jnp.float32) + b1, 0.0)
    f = jnp.dot(f, w2, preferred_element_type=jnp.float32) + b2
    return _layer_norm(h1 + f, g2, be2)


# ---------------------------------------------------------------------------
# The single fused kernel
# ---------------------------------------------------------------------------
def guardian_kernel(x_ref, const_ref, head_ref, wqkv_ref, w1_ref, wow2_ref,
                    vec_ref, scores_ref, eth_ref, priv_ref):
    x = x_ref[...]                                   # (N, H)
    n, hid = x.shape
    num_layers = wqkv_ref.shape[0]
    ffn = w1_ref.shape[2]

    # Host-precomputed constants (one DMA): no in-kernel iota / where.
    ones_bd = const_ref[0]                           # (NH*N, NH*N) block-diag ones
    vmask = const_ref[1, :, 0:hid]                   # (NH*N, H)   head-packing 0/1 mask
    att_mask = const_ref[2, 0:n, :]                  # (N, NH*N)   same-batch additive mask

    # Security head reads the raw input (PyTorch: security_monitor(x)); logits in col 0.
    sec_logits = _mlp_head(x,
                           head_ref[0, 0:hid, 0:2 * hid],
                           head_ref[0, HEAD_B1_R:HEAD_B1_R + 1, 0:2 * hid],
                           head_ref[0, hid:3 * hid, :],
                           head_ref[0, HEAD_B2_R:HEAD_B2_R + 1, :])

    # 1 ethics (BERT stand-in) + 4 privacy encoder layers, statically unrolled.
    h = x
    for li in range(num_layers):
        vec = vec_ref[li]                            # (8, 128): all layer-li row vectors
        h = _encoder_layer(
            h, att_mask, vmask, ones_bd,
            wqkv_ref[li],                   vec[0:1, 0:3 * hid],     # fused QKV
            wow2_ref[li, 0:hid, :],         vec[1:2, 0:hid],         # out proj
            vec[2:3, 0:hid],                vec[3:4, 0:hid],         # LN1
            w1_ref[li],                     vec[4:5, 0:ffn],         # FFN up
            wow2_ref[li, hid:hid + ffn, :], vec[5:6, 0:hid],         # FFN down
            vec[6:7, 0:hid],                vec[7:8, 0:hid])         # LN2
        if li == 0:
            eth_ref[...] = h                         # ethics (BERT stand-in) features
    priv_ref[...] = h                                # privacy features (after 4 more layers)

    # Compliance head on privacy features; logits in col 1.
    comp_logits = _mlp_head(h,
                            head_ref[1, 0:hid, 0:2 * hid],
                            head_ref[1, HEAD_B1_R:HEAD_B1_R + 1, 0:2 * hid],
                            head_ref[1, hid:3 * hid, :],
                            head_ref[1, HEAD_B2_R:HEAD_B2_R + 1, :])

    # Fused lane-dense score slab: col 0 = security, col 1 = compliance (sigmoid on EUP).
    logits = sec_logits + comp_logits
    scores_ref[...] = pl.reciprocal(1.0 + jnp.exp(-logits), approx=True)


# ---------------------------------------------------------------------------
# Host-side constants (built once per shape, outside the kernel)
# ---------------------------------------------------------------------------
@functools.lru_cache(maxsize=None)
def _attention_constants(n, batch, hid, nhead):
    hd = hid // nhead
    cols = nhead * n                                  # 128 for n=16, nhead=8
    c = np.zeros((3, cols, cols), np.float32)
    seg = np.arange(cols) // n                        # head index of each packed column
    # [0] block-diagonal ones: segment-sum matmul for the per-head softmax denominator
    c[0] = (seg[:, None] == seg[None, :]).astype(np.float32)
    # [1] head-packing mask: row h*n+j keeps only head h's feature dims
    head_of_dim = np.arange(hid) // hd
    c[1, :, 0:hid] = (seg[:, None] == head_of_dim[None, :]).astype(np.float32)
    # [2] same-batch additive mask (rows flattened seq-major: row i -> batch i%batch)
    key_row = np.arange(cols) % n
    qrow = np.arange(n)
    c[2, 0:n, :] = np.where((qrow[:, None] % batch) == (key_row[None, :] % batch),
                            0.0, -1e30)
    return jnp.asarray(c)


# ---------------------------------------------------------------------------
# Wrapper (single pallas_call, everything resident in VMEM)
# ---------------------------------------------------------------------------
def _full_spec(shape):
    nd = len(shape)
    return pl.BlockSpec(shape, lambda *_: (0,) * nd)


def guardian_forward(packed, x):
    s, b, h = x.shape
    n = s * b
    x2d = x.reshape(n, h)                            # seq-major flatten; no transpose needed
    consts = _attention_constants(n, b, h, NHEAD)

    args = (x2d, consts, packed['head_slab'], packed['wqkv'],
            packed['w1'], packed['wo_w2'], packed['vec'])

    out_shapes = (jax.ShapeDtypeStruct((n, SCORE_LANES), jnp.float32),
                  jax.ShapeDtypeStruct((n, h), jnp.float32),
                  jax.ShapeDtypeStruct((n, h), jnp.float32))

    # grid=(1,): single TensorCore is right at N=16.  For much larger N, tile the
    # flattened row dim over a ("parallel",) grid to use both v7x TensorCores.
    slab, eth2d, priv2d = pl.pallas_call(
        guardian_kernel,
        grid=(1,),
        out_shape=out_shapes,
        in_specs=[_full_spec(a.shape) for a in args],
        out_specs=tuple(_full_spec(o.shape) for o in out_shapes),
        compiler_params=pltpu.CompilerParams(dimension_semantics=("arbitrary",)),
    )(*args)

    return dict(
        security_scores=slab[:, 0:1].reshape(s, b, 1),
        ethics_features=eth2d.reshape(s, b, h),
        privacy_features=priv2d.reshape(s, b, h),
        compliance_scores=slab[:, 1:2].reshape(s, b, 1),
    )


# ---------------------------------------------------------------------------
# Deterministic synthetic parameters + one-time packing into DMA-friendly slabs
# ---------------------------------------------------------------------------
def _w(key, shape, scale=0.02):
    return scale * jax.random.normal(key, shape, jnp.float32)


def _init_head(key, h):
    k1, k2 = jax.random.split(key)
    return dict(w1=_w(k1, (h, 2 * h)), b1=jnp.zeros((2 * h,), jnp.float32),
                w2=_w(k2, (2 * h, 1)), b2=jnp.zeros((1,), jnp.float32))


def _init_encoder_layer(key, h, ffn):
    ks = jax.random.split(key, 6)
    return dict(
        wq=_w(ks[0], (h, h)), wk=_w(ks[1], (h, h)), wv=_w(ks[2], (h, h)),
        bq=jnp.zeros((h,)), bk=jnp.zeros((h,)), bv=jnp.zeros((h,)),
        wo=_w(ks[3], (h, h)), bo=jnp.zeros((h,)),
        g1=jnp.ones((h,)), be1=jnp.zeros((h,)),
        w1=_w(ks[4], (h, ffn)), b1=jnp.zeros((ffn,)),
        w2=_w(ks[5], (ffn, h)), b2=jnp.zeros((h,)),
        g2=jnp.ones((h,)), be2=jnp.zeros((h,)),
    )


def init_guardian_params(key, h=HIDDEN, ffn=FFN):
    """Logical (unpacked) synthetic parameters mirroring the PyTorch module."""
    k_sec, k_eth, k_priv, k_comp = jax.random.split(key, 4)
    # TODO(synk): ethics_validator is pretrained 'bert-base-uncased'; a HF checkpoint
    # load has no Pallas equivalent — stand-in is one synthetic BERT-style encoder
    # layer at d_model=h so downstream shapes match.
    layer_keys = [k_eth] + list(jax.random.split(k_priv, NUM_LAYERS - 1))
    return dict(security=_init_head(k_sec, h),
                compliance=_init_head(k_comp, h),
                layers=[_init_encoder_layer(k, h, ffn) for k in layer_keys])


def pack_guardian_params(params, h=HIDDEN, ffn=FFN):
    """Pack logical params into 6 VMEM slabs (done once at init, not per forward)."""
    scale = 1.0 / (HEAD_DIM ** 0.5)

    def pack_head(p, col):
        slab = jnp.zeros((HEAD_ROWS, SCORE_LANES), jnp.float32)
        slab = slab.at[0:h, 0:2 * h].set(p['w1'])
        slab = slab.at[h:3 * h, col].set(p['w2'][:, 0])     # lane-dense padded w2
        slab = slab.at[HEAD_B1_R, 0:2 * h].set(p['b1'])
        slab = slab.at[HEAD_B2_R, col].set(p['b2'][0])      # lane-dense padded b2
        return slab

    head_slab = jnp.stack([pack_head(params['security'], 0),
                           pack_head(params['compliance'], 1)])

    wqkv_l, w1_l, wow2_l, vec_l = [], [], [], []
    for lp in params['layers']:
        # Attention scale folded into the Q weights/bias (free at pack time).
        wqkv_l.append(jnp.concatenate([lp['wq'] * scale, lp['wk'], lp['wv']], axis=1))
        w1_l.append(lp['w1'])
        wow2_l.append(jnp.concatenate([lp['wo'], lp['w2']], axis=0))   # (h+ffn, h)
        vec = jnp.zeros((8, 128), jnp.float32)
        vec = vec.at[0, 0:3 * h].set(
            jnp.concatenate([lp['bq'] * scale, lp['bk'], lp['bv']]))
        vec = vec.at[1, 0:h].set(lp['bo'])
        vec = vec.at[2, 0:h].set(lp['g1'])
        vec = vec.at[3, 0:h].set(lp['be1'])
        vec = vec.at[4, 0:ffn].set(lp['b1'])
        vec = vec.at[5, 0:h].set(lp['b2'])
        vec = vec.at[6, 0:h].set(lp['g2'])
        vec = vec.at[7, 0:h].set(lp['be2'])
        vec_l.append(vec)

    return dict(head_slab=head_slab,                    # (2, 112, 128)
                wqkv=jnp.stack(wqkv_l),                 # (L, 32, 96)
                w1=jnp.stack(w1_l),                     # (L, 32, 128)
                wo_w2=jnp.stack(wow2_l),                # (L, 160, 32)
                vec=jnp.stack(vec_l))                   # (L, 8, 128)


# ---------------------------------------------------------------------------
# Pure-JAX reference (straightforward per-head formulation) for a sanity check
# ---------------------------------------------------------------------------
def _ref_ln(h, g, b):
    mu = jnp.mean(h, -1, keepdims=True)
    var = jnp.mean((h - mu) ** 2, -1, keepdims=True)
    return (h - mu) / jnp.sqrt(var + LN_EPS) * g + b


def reference_forward(params, x):
    s, b, hid = x.shape
    n = s * b
    h = x.reshape(n, hid)
    same = (jnp.arange(n)[:, None] % b) == (jnp.arange(n)[None, :] % b)

    def head(p, z):
        t = jnp.maximum(z @ p['w1'] + p['b1'], 0.0)
        return jax.nn.sigmoid(t @ p['w2'] + p['b2'])

    sec = head(params['security'], h)
    eth = None
    for li, lp in enumerate(params['layers']):
        q = h @ lp['wq'] + lp['bq']
        k = h @ lp['wk'] + lp['bk']
        v = h @ lp['wv'] + lp['bv']
        outs = []
        for hi in range(NHEAD):
            sl = slice(hi * HEAD_DIM, (hi + 1) * HEAD_DIM)
            sc = (q[:, sl] @ k[:, sl].T) / (HEAD_DIM ** 0.5)
            sc = jnp.where(same, sc, -jnp.inf)
            outs.append(jax.nn.softmax(sc, axis=-1) @ v[:, sl])
        ctx = jnp.concatenate(outs, axis=1)
        h1 = _ref_ln(h + ctx @ lp['wo'] + lp['bo'], lp['g1'], lp['be1'])
        f = jnp.maximum(h1 @ lp['w1'] + lp['b1'], 0.0) @ lp['w2'] + lp['b2']
        h = _ref_ln(h1 + f, lp['g2'], lp['be2'])
        if li == 0:
            eth = h
    comp = head(params['compliance'], h)
    return dict(security_scores=sec.reshape(s, b, 1),
                ethics_features=eth.reshape(s, b, hid),
                privacy_features=h.reshape(s, b, hid),
                compliance_scores=comp.reshape(s, b, 1))


if __name__ == "__main__":
    S, B = 8, 2                                       # hidden_size=32, nhead=8, ffn=128
    key = jax.random.PRNGKey(0)
    kx, kparam = jax.random.split(key)
    x = jax.random.normal(kx, (S, B, HIDDEN), jnp.float32)   # layout: (S, B, H)

    logical = init_guardian_params(kparam)
    packed = pack_guardian_params(logical)

    out = guardian_forward(packed, x)
    jax.block_until_ready(out)

    assert out['security_scores'].shape == (S, B, 1)
    assert out['ethics_features'].shape == (S, B, HIDDEN)
    assert out['privacy_features'].shape == (S, B, HIDDEN)
    assert out['compliance_scores'].shape == (S, B, 1)

    ref = reference_forward(logical, x)
    for name in ('security_scores', 'ethics_features',
                 'privacy_features', 'compliance_scores'):
        err = float(jnp.max(jnp.abs(out[name] - ref[name])))
        assert err < 5e-2, f"{name}: max abs err {err}"

    print("KERNEL_OK")
</pallas_src>

<mosaic_0001>
module attributes {stable_mosaic.version = 11 : i64} {
  func.func @guardian_kernel(%arg0: i32, %arg1: memref<16x32xf32, #tpu.memory_space<vmem>>, %arg2: memref<3x128x128xf32, #tpu.memory_space<vmem>>, %arg3: memref<2x112x128xf32, #tpu.memory_space<vmem>>, %arg4: memref<5x32x96xf32, #tpu.memory_space<vmem>>, %arg5: memref<5x32x128xf32, #tpu.memory_space<vmem>>, %arg6: memref<5x160x32xf32, #tpu.memory_space<vmem>>, %arg7: memref<5x8x128xf32, #tpu.memory_space<vmem>>, %arg8: memref<16x128xf32, #tpu.memory_space<vmem>>, %arg9: memref<16x32xf32, #tpu.memory_space<vmem>>, %arg10: memref<16x32xf32, #tpu.memory_space<vmem>>) attributes {dimension_semantics = [#tpu.dimension_semantics<arbitrary>], iteration_bounds = array<i64: 1>, scalar_prefetch = 0 : i64, scratch_operands = 0 : i64, tpu.core_type = #tpu.core_type<tc>, window_params = [{pipeline_mode = #tpu.pipeline_mode<synchronous>, transform_indices = @transform_0, window_bounds = array<i64: 16, 32>}, {pipeline_mode = #tpu.pipeline_mode<synchronous>, transform_indices = @transform_1, window_bounds = array<i64: 3, 128, 128>}, {pipeline_mode = #tpu.pipeline_mode<synchronous>, transform_indices = @transform_2, window_bounds = array<i64: 2, 112, 128>}, {pipeline_mode = #tpu.pipeline_mode<synchronous>, transform_indices = @transform_3, window_bounds = array<i64: 5, 32, 96>}, {pipeline_mode = #tpu.pipeline_mode<synchronous>, transform_indices = @transform_4, window_bounds = array<i64: 5, 32, 128>}, {pipeline_mode = #tpu.pipeline_mode<synchronous>, transform_indices = @transform_5, window_bounds = array<i64: 5, 160, 32>}, {pipeline_mode = #tpu.pipeline_mode<synchronous>, transform_indices = @transform_6, window_bounds = array<i64: 5, 8, 128>}, {pipeline_mode = #tpu.pipeline_mode<synchronous>, transform_indices = @transform_7, window_bounds = array<i64: 16, 128>}, {pipeline_mode = #tpu.pipeline_mode<synchronous>, transform_indices = @transform_8, window_bounds = array<i64: 16, 32>}, {pipeline_mode = #tpu.pipeline_mode<synchronous>, transform_indices = @transform_9, window_bounds = array<i64: 16, 32>}]} {
    %c0 = arith.constant 0 : index
    %c0_0 = arith.constant 0 : index
    %0 = vector.load %arg1[%c0, %c0_0] : memref<16x32xf32, #tpu.memory_space<vmem>>, vector<16x32xf32>
    %c0_1 = arith.constant 0 : index
    %c0_2 = arith.constant 0 : index
    %c0_3 = arith.constant 0 : index
    %1 = vector.load %arg2[%c0_1, %c0_2, %c0_3] : memref<3x128x128xf32, #tpu.memory_space<vmem>>, vector<1x128x128xf32>
    %2 = vector.shape_cast %1 : vector<1x128x128xf32> to vector<128x128xf32>
    %c1 = arith.constant 1 : index
    %c0_4 = arith.constant 0 : index
    %c0_5 = arith.constant 0 : index
    %3 = vector.load %arg2[%c1, %c0_4, %c0_5] : memref<3x128x128xf32, #tpu.memory_space<vmem>>, vector<1x128x32xf32>
    %4 = vector.shape_cast %3 : vector<1x128x32xf32> to vector<128x32xf32>
    %c2 = arith.constant 2 : index
    %c0_6 = arith.constant 0 : index
    %c0_7 = arith.constant 0 : index
    %5 = vector.load %arg2[%c2, %c0_6, %c0_7] : memref<3x128x128xf32, #tpu.memory_space<vmem>>, vector<1x16x128xf32>
    %6 = vector.shape_cast %5 : vector<1x16x128xf32> to vector<16x128xf32>
    %c0_8 = arith.constant 0 : index
    %c0_9 = arith.constant 0 : index
    %c0_10 = arith.constant 0 : index
    %7 = vector.load %arg3[%c0_8, %c0_9, %c0_10] : memref<2x112x128xf32, #tpu.memory_space<vmem>>, vector<1x32x64xf32>
    %8 = vector.shape_cast %7 : vector<1x32x64xf32> to vector<32x64xf32>
    %c0_11 = arith.constant 0 : index
    %c96 = arith.constant 96 : index
    %c0_12 = arith.constant 0 : index
    %9 = vector.load %arg3[%c0_11, %c96, %c0_12] : memref<2x112x128xf32, #tpu.memory_space<vmem>>, vector<1x1x64xf32>
    %10 = vector.shape_cast %9 : vector<1x1x64xf32> to vector<1x64xf32>
    %c0_13 = arith.constant 0 : index
    %c32 = arith.constant 32 : index
    %c0_14 = arith.constant 0 : index
    %11 = vector.load %arg3[%c0_13, %c32, %c0_14] : memref<2x112x128xf32, #tpu.memory_space<vmem>>, vector<1x64x128xf32>
    %12 = vector.shape_cast %11 : vector<1x64x128xf32> to vector<64x128xf32>
    %c0_15 = arith.constant 0 : index
    %c104 = arith.constant 104 : index
    %c0_16 = arith.constant 0 : index
    %13 = vector.load %arg3[%c0_15, %c104, %c0_16] : memref<2x112x128xf32, #tpu.memory_space<vmem>>, vector<1x1x128xf32>
    %14 = vector.shape_cast %13 : vector<1x1x128xf32> to vector<1x128xf32>
    %cst = arith.constant dense<0.000000e+00> : vector<16x64xf32>
    %15 = tpu.matmul %0, %8, %cst {dimension_numbers = #tpu.dot_dimension_numbers<[1], [0], [0], [1], [0, 0, 1, 1], [], []>} : vector<16x32xf32>, vector<32x64xf32>, vector<16x64xf32> -> vector<16x64xf32>
    %16 = vector.broadcast %10 : vector<1x64xf32> to vector<16x64xf32>
    %17 = arith.addf %15, %16 : vector<16x64xf32>
    %cst_17 = arith.constant 0.000000e+00 : f32
    %18 = vector.broadcast %cst_17 : f32 to vector<16x64xf32>
    %19 = arith.maximumf %17, %18 : vector<16x64xf32>
    %cst_18 = arith.constant dense<0.000000e+00> : vector<16x128xf32>
    %20 = tpu.matmul %19, %12, %cst_18 {dimension_numbers = #tpu.dot_dimension_numbers<[1], [0], [0], [1], [0, 0, 1, 1], [], []>} : vector<16x64xf32>, vector<64x128xf32>, vector<16x128xf32> -> vector<16x128xf32>
    %21 = vector.broadcast %14 : vector<1x128xf32> to vector<16x128xf32>
    %22 = arith.addf %20, %21 : vector<16x128xf32>
    %c0_19 = arith.constant 0 : index
    %c0_20 = arith.constant 0 : index
    %c0_21 = arith.constant 0 : index
    %23 = vector.load %arg7[%c0_19, %c0_20, %c0_21] : memref<5x8x128xf32, #tpu.memory_space<vmem>>, vector<1x8x128xf32>
    %24 = vector.shape_cast %23 : vector<1x8x128xf32> to vector<8x128xf32>
    %c0_22 = arith.constant 0 : index
    %c0_23 = arith.constant 0 : index
    %c0_24 = arith.constant 0 : index
    %25 = vector.load %arg4[%c0_22, %c0_23, %c0_24] : memref<5x32x96xf32, #tpu.memory_space<vmem>>, vector<1x32x96xf32>
    %26 = vector.shape_cast %25 : vector<1x32x96xf32> to vector<32x96xf32>
    %27 = vector.extract_strided_slice %24 {offsets = [0, 0], sizes = [1, 96], strides = [1, 1]} : vector<8x128xf32> to vector<1x96xf32>
    %c0_25 = arith.constant 0 : index
    %c0_26 = arith.constant 0 : index
    %c0_27 = arith.constant 0 : index
    %28 = vector.load %arg6[%c0_25, %c0_26, %c0_27] : memref<5x160x32xf32, #tpu.memory_space<vmem>>, vector<1x32x32xf32>
    %29 = vector.shape_cast %28 : vector<1x32x32xf32> to vector<32x32xf32>
    %30 = vector.extract_strided_slice %24 {offsets = [1, 0], sizes = [1, 32], strides = [1, 1]} : vector<8x128xf32> to vector<1x32xf32>
    %31 = vector.extract_strided_slice %24 {offsets = [2, 0], sizes = [1, 32], strides = [1, 1]} : vector<8x128xf32> to vector<1x32xf32>
    %32 = vector.extract_strided_slice %24 {offsets = [3, 0], sizes = [1, 32], strides = [1, 1]} : vector<8x128xf32> to vector<1x32xf32>
    %c0_28 = arith.constant 0 : index
    %c0_29 = arith.constant 0 : index
    %c0_30 = arith.constant 0 : index
    %33 = vector.load %arg5[%c0_28, %c0_29, %c0_30] : memref<5x32x128xf32, #tpu.memory_space<vmem>>, vector<1x32x128xf32>
    %34 = vector.shape_cast %33 : vector<1x32x128xf32> to vector<32x128xf32>
    %35 = vector.extract_strided_slice %24 {offsets = [4, 0], sizes = [1, 128], strides = [1, 1]} : vector<8x128xf32> to vector<1x128xf32>
    %c0_31 = arith.constant 0 : index
    %c32_32 = arith.constant 32 : index
    %c0_33 = arith.constant 0 : index
    %36 = vector.load %arg6[%c0_31, %c32_32, %c0_33] : memref<5x160x32xf32, #tpu.memory_space<vmem>>, vector<1x128x32xf32>
    %37 = vector.shape_cast %36 : vector<1x128x32xf32> to vector<128x32xf32>
    %38 = vector.extract_strided_slice %24 {offsets = [5, 0], sizes = [1, 32], strides = [1, 1]} : vector<8x128xf32> to vector<1x32xf32>
    %39 = vector.extract_strided_slice %24 {offsets = [6, 0], sizes = [1, 32], strides = [1, 1]} : vector<8x128xf32> to vector<1x32xf32>
    %40 = vector.extract_strided_slice %24 {offsets = [7, 0], sizes = [1, 32], strides = [1, 1]} : vector<8x128xf32> to vector<1x32xf32>
    %cst_34 = arith.constant dense<0.000000e+00> : vector<16x96xf32>
    %41 = tpu.matmul %0, %26, %cst_34 {dimension_numbers = #tpu.dot_dimension_numbers<[1], [0], [0], [1], [0, 0, 1, 1], [], []>} : vector<16x32xf32>, vector<32x96xf32>, vector<16x96xf32> -> vector<16x96xf32>
    %42 = vector.broadcast %27 : vector<1x96xf32> to vector<16x96xf32>
    %43 = arith.addf %41, %42 : vector<16x96xf32>
    %44 = vector.extract_strided_slice %43 {offsets = [0, 0], sizes = [16, 32], strides = [1, 1]} : vector<16x96xf32> to vector<16x32xf32>
    %45 = vector.extract_strided_slice %43 {offsets = [0, 32], sizes = [16, 32], strides = [1, 1]} : vector<16x96xf32> to vector<16x32xf32>
    %46 = vector.extract_strided_slice %43 {offsets = [0, 64], sizes = [16, 32], strides = [1, 1]} : vector<16x96xf32> to vector<16x32xf32>
    %47 = tpu.concatenate %45, %45, %45, %45, %45, %45, %45, %45 in 0 : vector<16x32xf32>, vector<16x32xf32>, vector<16x32xf32>, vector<16x32xf32>, vector<16x32xf32>, vector<16x32xf32>, vector<16x32xf32>, vector<16x32xf32> -> vector<128x32xf32>
    %48 = arith.mulf %47, %4 : vector<128x32xf32>
    %49 = tpu.concatenate %46, %46, %46, %46, %46, %46, %46, %46 in 0 : vector<16x32xf32>, vector<16x32xf32>, vector<16x32xf32>, vector<16x32xf32>, vector<16x32xf32>, vector<16x32xf32>, vector<16x32xf32>, vector<16x32xf32> -> vector<128x32xf32>
    %50 = arith.mulf %49, %4 : vector<128x32xf32>
    %cst_35 = arith.constant dense<0.000000e+00> : vector<16x128xf32>
    %51 = tpu.matmul %44, %48, %cst_35 {dimension_numbers = #tpu.dot_dimension_numbers<[1], [1], [0], [0], [0, 0, 1, 0], [], []>} : vector<16x32xf32>, vector<128x32xf32>, vector<16x128xf32> -> vector<16x128xf32>
    %52 = arith.addf %51, %6 : vector<16x128xf32>
    %cst_36 = arith.constant dense<0xFF800000> : vector<16xf32>
    %53 = vector.multi_reduction <maximumf>, %52, %cst_36 [1] : vector<16x128xf32> to vector<16xf32>
    %54 = vector.shape_cast %53 : vector<16xf32> to vector<16x1xf32>
    %55 = vector.broadcast %54 : vector<16x1xf32> to vector<16x128xf32>
    %56 = arith.subf %52, %55 : vector<16x128xf32>
    %57 = math.exp %56 : vector<16x128xf32>
    %cst_37 = arith.constant dense<0.000000e+00> : vector<16x128xf32>
    %58 = tpu.matmul %57, %2, %cst_37 {dimension_numbers = #tpu.dot_dimension_numbers<[1], [0], [0], [1], [0, 0, 1, 1], [], []>} : vector<16x128xf32>, vector<128x128xf32>, vector<16x128xf32> -> vector<16x128xf32>
    %59 = tpu.reciprocal %58 {approx = true} : vector<16x128xf32> -> vector<16x128xf32>
    %60 = arith.mulf %57, %59 : vector<16x128xf32>
    %cst_38 = arith.constant dense<0.000000e+00> : vector<16x32xf32>
    %61 = tpu.matmul %60, %50, %cst_38 {dimension_numbers = #tpu.dot_dimension_numbers<[1], [0], [0], [1], [0, 0, 1, 1], [], []>} : vector<16x128xf32>, vector<128x32xf32>, vector<16x32xf32> -> vector<16x32xf32>
    %cst_39 = arith.constant dense<0.000000e+00> : vector<16x32xf32>
    %62 = tpu.matmul %61, %29, %cst_39 {dimension_numbers = #tpu.dot_dimension_numbers<[1], [0], [0], [1], [0, 0, 1, 1], [], []>} : vector<16x32xf32>, vector<32x32xf32>, vector<16x32xf32> -> vector<16x32xf32>
    %63 = vector.broadcast %30 : vector<1x32xf32> to vector<16x32xf32>
    %64 = arith.addf %62, %63 : vector<16x32xf32>
    %65 = arith.addf %0, %64 : vector<16x32xf32>
    %cst_40 = arith.constant dense<0.000000e+00> : vector<16xf32>
    %66 = vector.multi_reduction <add>, %65, %cst_40 [1] : vector<16x32xf32> to vector<16xf32>
    %67 = vector.shape_cast %66 : vector<16xf32> to vector<16x1xf32>
    %cst_41 = arith.constant 3.200000e+01 : f32
    %68 = vector.broadcast %cst_41 : f32 to vector<16x1xf32>
    %69 = arith.divf %67, %68 : vector<16x1xf32>
    %70 = arith.mulf %65, %65 : vector<16x32xf32>
    %cst_42 = arith.constant dense<0.000000e+00> : vector<16xf32>
    %71 = vector.multi_reduction <add>, %70, %cst_42 [1] : vector<16x32xf32> to vector<16xf32>
    %72 = vector.shape_cast %71 : vector<16xf32> to vector<16x1xf32>
    %cst_43 = arith.constant 3.200000e+01 : f32
    %73 = vector.broadcast %cst_43 : f32 to vector<16x1xf32>
    %74 = arith.divf %72, %73 : vector<16x1xf32>
    %75 = arith.mulf %69, %69 : vector<16x1xf32>
    %76 = arith.subf %74, %75 : vector<16x1xf32>
    %77 = vector.broadcast %69 : vector<16x1xf32> to vector<16x32xf32>
    %78 = arith.subf %65, %77 : vector<16x32xf32>
    %cst_44 = arith.constant 9.99999974E-6 : f32
    %79 = vector.broadcast %cst_44 : f32 to vector<16x1xf32>
    %80 = arith.addf %76, %79 : vector<16x1xf32>
    %81 = math.rsqrt %80 : vector<16x1xf32>
    %82 = vector.broadcast %81 : vector<16x1xf32> to vector<16x32xf32>
    %83 = arith.mulf %78, %82 : vector<16x32xf32>
    %84 = vector.broadcast %31 : vector<1x32xf32> to vector<16x32xf32>
    %85 = arith.mulf %83, %84 : vector<16x32xf32>
    %86 = vector.broadcast %32 : vector<1x32xf32> to vector<16x32xf32>
    %87 = arith.addf %85, %86 : vector<16x32xf32>
    %cst_45 = arith.constant dense<0.000000e+00> : vector<16x128xf32>
    %88 = tpu.matmul %87, %34, %cst_45 {dimension_numbers = #tpu.dot_dimension_numbers<[1], [0], [0], [1], [0, 0, 1, 1], [], []>} : vector<16x32xf32>, vector<32x128xf32>, vector<16x128xf32> -> vector<16x128xf32>
    %89 = vector.broadcast %35 : vector<1x128xf32> to vector<16x128xf32>
    %90 = arith.addf %88, %89 : vector<16x128xf32>
    %cst_46 = arith.constant 0.000000e+00 : f32
    %91 = vector.broadcast %cst_46 : f32 to vector<16x128xf32>
    %92 = arith.maximumf %90, %91 : vector<16x128xf32>
    %cst_47 = arith.constant dense<0.000000e+00> : vector<16x32xf32>
    %93 = tpu.matmul %92, %37, %cst_47 {dimension_numbers = #tpu.dot_dimension_numbers<[1], [0], [0], [1], [0, 0, 1, 1], [], []>} : vector<16x128xf32>, vector<128x32xf32>, vector<16x32xf32> -> vector<16x32xf32>
    %94 = vector.broadcast %38 : vector<1x32xf32> to vector<16x32xf32>
    %95 = arith.addf %93, %94 : vector<16x32xf32>
    %96 = arith.addf %87, %95 : vector<16x32xf32>
    %cst_48 = arith.constant dense<0.000000e+00> : vector<16xf32>
    %97 = vector.multi_reduction <add>, %96, %cst_48 [1] : vector<16x32xf32> to vector<16xf32>
    %98 = vector.shape_cast %97 : vector<16xf32> to vector<16x1xf32>
    %cst_49 = arith.constant 3.200000e+01 : f32
    %99 = vector.broadcast %cst_49 : f32 to vector<16x1xf32>
    %100 = arith.divf %98, %99 : vector<16x1xf32>
    %101 = arith.mulf %96, %96 : vector<16x32xf32>
    %cst_50 = arith.constant dense<0.000000e+00> : vector<16xf32>
    %102 = vector.multi_reduction <add>, %101, %cst_50 [1] : vector<16x32xf32> to vector<16xf32>
    %103 = vector.shape_cast %102 : vector<16xf32> to vector<16x1xf32>
    %cst_51 = arith.constant 3.200000e+01 : f32
    %104 = vector.broadcast %cst_51 : f32 to vector<16x1xf32>
    %105 = arith.divf %103, %104 : vector<16x1xf32>
    %106 = arith.mulf %100, %100 : vector<16x1xf32>
    %107 = arith.subf %105, %106 : vector<16x1xf32>
    %108 = vector.broadcast %100 : vector<16x1xf32> to vector<16x32xf32>
    %109 = arith.subf %96, %108 : vector<16x32xf32>
    %cst_52 = arith.constant 9.99999974E-6 : f32
    %110 = vector.broadcast %cst_52 : f32 to vector<16x1xf32>
    %111 = arith.addf %107, %110 : vector<16x1xf32>
    %112 = math.rsqrt %111 : vector<16x1xf32>
    %113 = vector.broadcast %112 : vector<16x1xf32> to vector<16x32xf32>
    %114 = arith.mulf %109, %113 : vector<16x32xf32>
    %115 = vector.broadcast %39 : vector<1x32xf32> to vector<16x32xf32>
    %116 = arith.mulf %114, %115 : vector<16x32xf32>
    %117 = vector.broadcast %40 : vector<1x32xf32> to vector<16x32xf32>
    %118 = arith.addf %116, %117 : vector<16x32xf32>
    %c0_53 = arith.constant 0 : index
    %c0_54 = arith.constant 0 : index
    %119 = vector.load %arg9[%c0_53, %c0_54] : memref<16x32xf32, #tpu.memory_space<vmem>>, vector<16x32xf32>
    tpu.vector_store %arg9[%c0_53, %c0_54], %118 {strides = array<i32>} : memref<16x32xf32, #tpu.memory_space<vmem>>, vector<16x32xf32>,
    %c1_55 = arith.constant 1 : index
    %c0_56 = arith.constant 0 : index
    %c0_57 = arith.constant 0 : index
    %120 = vector.load %arg7[%c1_55, %c0_56, %c0_57] : memref<5x8x128xf32, #tpu.memory_space<vmem>>, vector<1x8x128xf32>
    %121 = vector.shape_cast %120 : vector<1x8x128xf32> to vector<8x128xf32>
    %c1_58 = arith.constant 1 : index
    %c0_59 = arith.constant 0 : index
    %c0_60 = arith.constant 0 : index
    %122 = vector.load %arg4[%c1_58, %c0_59, %c0_60] : memref<5x32x96xf32, #tpu.memory_space<vmem>>, vector<1x32x96xf32>
    %123 = vector.shape_cast %122 : vector<1x32x96xf32> to vector<32x96xf32>
    %124 = vector.extract_strided_slice %121 {offsets = [0, 0], sizes = [1, 96], strides = [1, 1]} : vector<8x128xf32> to vector<1x96xf32>
    %c1_61 = arith.constant 1 : index
    %c0_62 = arith.constant 0 : index
    %c0_63 = arith.constant 0 : index
    %125 = vector.load %arg6[%c1_61, %c0_62, %c0_63] : memref<5x160x32xf32, #tpu.memory_space<vmem>>, vector<1x32x32xf32>
    %126 = vector.shape_cast %125 : vector<1x32x32xf32> to vector<32x32xf32>
    %127 = vector.extract_strided_slice %121 {offsets = [1, 0], sizes = [1, 32], strides = [1, 1]} : vector<8x128xf32> to vector<1x32xf32>
    %128 = vector.extract_strided_slice %121 {offsets = [2, 0], sizes = [1, 32], strides = [1, 1]} : vector<8x128xf32> to vector<1x32xf32>
    %129 = vector.extract_strided_slice %121 {offsets = [3, 0], sizes = [1, 32], strides = [1, 1]} : vector<8x128xf32> to vector<1x32xf32>
    %c1_64 = arith.constant 1 : index
    %c0_65 = arith.constant 0 : index
    %c0_66 = arith.constant 0 : index
    %130 = vector.load %arg5[%c1_64, %c0_65, %c0_66] : memref<5x32x128xf32, #tpu.memory_space<vmem>>, vector<1x32x128xf32>
    %131 = vector.shape_cast %130 : vector<1x32x128xf32> to vector<32x128xf32>
    %132 = vector.extract_strided_slice %121 {offsets = [4, 0], sizes = [1, 128], strides = [1, 1]} : vector<8x128xf32> to vector<1x128xf32>
    %c1_67 = arith.constant 1 : index
    %c32_68 = arith.constant 32 : index
    %c0_69 = arith.constant 0 : index
    %133 = vector.load %arg6[%c1_67, %c32_68, %c0_69] : memref<5x160x32xf32, #tpu.memory_space<vmem>>, vector<1x128x32xf32>
    %134 = vector.shape_cast %133 : vector<1x128x32xf32> to vector<128x32xf32>
    %135 = vector.extract_strided_slice %121 {offsets = [5, 0], sizes = [1, 32], strides = [1, 1]} : vector<8x128xf32> to vector<1x32xf32>
    %136 = vector.extract_strided_slice %121 {offsets = [6, 0], sizes = [1, 32], strides = [1, 1]} : vector<8x128xf32> to vector<1x32xf32>
    %137 = vector.extract_strided_slice %121 {offsets = [7, 0], sizes = [1, 32], strides = [1, 1]} : vector<8x128xf32> to vector<1x32xf32>
    %cst_70 = arith.constant dense<0.000000e+00> : vector<16x96xf32>
    %138 = tpu.matmul %118, %123, %cst_70 {dimension_numbers = #tpu.dot_dimension_numbers<[1], [0], [0], [1], [0, 0, 1, 1], [], []>} : vector<16x32xf32>, vector<32x96xf32>, vector<16x96xf32> -> vector<16x96xf32>
    %139 = vector.broadcast %124 : vector<1x96xf32> to vector<16x96xf32>
    %140 = arith.addf %138, %139 : vector<16x96xf32>
    %141 = vector.extract_strided_slice %140 {offsets = [0, 0], sizes = [16, 32], strides = [1, 1]} : vector<16x96xf32> to vector<16x32xf32>
    %142 = vector.extract_strided_slice %140 {offsets = [0, 32], sizes = [16, 32], strides = [1, 1]} : vector<16x96xf32> to vector<16x32xf32>
    %143 = vector.extract_strided_slice %140 {offsets = [0, 64], sizes = [16, 32], strides = [1, 1]} : vector<16x96xf32> to vector<16x32xf32>
    %144 = tpu.concatenate %142, %142, %142, %142, %142, %142, %142, %142 in 0 : vector<16x32xf32>, vector<16x32xf32>, vector<16x32xf32>, vector<16x32xf32>, vector<16x32xf32>, vector<16x32xf32>, vector<16x32xf32>, vector<16x32xf32> -> vector<128x32xf32>
    %145 = arith.mulf %144, %4 : vector<128x32xf32>
    %146 = tpu.concatenate %143, %143, %143, %143, %143, %143, %143, %143 in 0 : vector<16x32xf32>, vector<16x32xf32>, vector<16x32xf32>, vector<16x32xf32>, vector<16x32xf32>, vector<16x32xf32>, vector<16x32xf32>, vector<16x32xf32> -> vector<128x32xf32>
    %147 = arith.mulf %146, %4 : vector<128x32xf32>
    %cst_71 = arith.constant dense<0.000000e+00> : vector<16x128xf32>
    %148 = tpu.matmul %141, %145, %cst_71 {dimension_numbers = #tpu.dot_dimension_numbers<[1], [1], [0], [0], [0, 0, 1, 0], [], []>} : vector<16x32xf32>, vector<128x32xf32>, vector<16x128xf32> -> vector<16x128xf32>
    %149 = arith.addf %148, %6 : vector<16x128xf32>
    %cst_72 = arith.constant dense<0xFF800000> : vector<16xf32>
    %150 = vector.multi_reduction <maximumf>, %149, %cst_72 [1] : vector<16x128xf32> to vector<16xf32>
    %151 = vector.shape_cast %150 : vector<16xf32> to vector<16x1xf32>
    %152 = vector.broadcast %151 : vector<16x1xf32> to vector<16x128xf32>
    %153 = arith.subf %149, %152 : vector<16x128xf32>
    %154 = math.exp %153 : vector<16x128xf32>
    %cst_73 = arith.constant dense<0.000000e+00> : vector<16x128xf32>
    %155 = tpu.matmul %154, %2, %cst_73 {dimension_numbers = #tpu.dot_dimension_numbers<[1], [0], [0], [1], [0, 0, 1, 1], [], []>} : vector<16x128xf32>, vector<128x128xf32>, vector<16x128xf32> -> vector<16x128xf32>
    %156 = tpu.reciprocal %155 {approx = true} : vector<16x128xf32> -> vector<16x128xf32>
    %157 = arith.mulf %154, %156 : vector<16x128xf32>
    %cst_74 = arith.constant dense<0.000000e+00> : vector<16x32xf32>
    %158 = tpu.matmul %157, %147, %cst_74 {dimension_numbers = #tpu.dot_dimension_numbers<[1], [0], [0], [1], [0, 0, 1, 1], [], []>} : vector<16x128xf32>, vector<128x32xf32>, vector<16x32xf32> -> vector<16x32xf32>
    %cst_75 = arith.constant dense<0.000000e+00> : vector<16x32xf32>
    %159 = tpu.matmul %158, %126, %cst_75 {dimension_numbers = #tpu.dot_dimension_numbers<[1], [0], [0], [1], [0, 0, 1, 1], [], []>} : vector<16x32xf32>, vector<32x32xf32>, vector<16x32xf32> -> vector<16x32xf32>
    %160 = vector.broadcast %127 : vector<1x32xf32> to vector<16x32xf32>
    %161 = arith.addf %159, %160 : vector<16x32xf32>
    %162 = arith.addf %118, %161 : vector<16x32xf32>
    %cst_76 = arith.constant dense<0.000000e+00> : vector<16xf32>
    %163 = vector.multi_reduction <add>, %162, %cst_76 [1] : vector<16x32xf32> to vector<16xf32>
    %164 = vector.shape_cast %163 : vector<16xf32> to vector<16x1xf32>
    %cst_77 = arith.constant 3.200000e+01 : f32
    %165 = vector.broadcast %cst_77 : f32 to vector<16x1xf32>
    %166 = arith.divf %164, %165 : vector<16x1xf32>
    %167 = arith.mulf %162, %162 : vector<16x32xf32>
    %cst_78 = arith.constant dense<0.000000e+00> : vector<16xf32>
    %168 = vector.multi_reduction <add>, %167, %cst_78 [1] : vector<16x32xf32> to vector<16xf32>
    %169 = vector.shape_cast %168 : vector<16xf32> to vector<16x1xf32>
    %cst_79 = arith.constant 3.200000e+01 : f32
    %170 = vector.broadcast %cst_79 : f32 to vector<16x1xf32>
    %171 = arith.divf %169, %170 : vector<16x1xf32>
    %172 = arith.mulf %166, %166 : vector<16x1xf32>
    %173 = arith.subf %171, %172 : vector<16x1xf32>
    %174 = vector.broadcast %166 : vector<16x1xf32> to vector<16x32xf32>
    %175 = arith.subf %162, %174 : vector<16x32xf32>
    %cst_80 = arith.constant 9.99999974E-6 : f32
    %176 = vector.broadcast %cst_80 : f32 to vector<16x1xf32>
    %177 = arith.addf %173, %176 : vector<16x1xf32>
    %178 = math.rsqrt %177 : vector<16x1xf32>
    %179 = vector.broadcast %178 : vector<16x1xf32> to vector<16x32xf32>
    %180 = arith.mulf %175, %179 : vector<16x32xf32>
    %181 = vector.broadcast %128 : vector<1x32xf32> to vector<16x32xf32>
    %182 = arith.mulf %180, %181 : vector<16x32xf32>
    %183 = vector.broadcast %129 : vector<1x32xf32> to vector<16x32xf32>
    %184 = arith.addf %182, %183 : vector<16x32xf32>
    %cst_81 = arith.constant dense<0.000000e+00> : vector<16x128xf32>
    %185 = tpu.matmul %184, %131, %cst_81 {dimension_numbers = #tpu.dot_dimension_numbers<[1], [0], [0], [1], [0, 0, 1, 1], [], []>} : vector<16x32xf32>, vector<32x128xf32>, vector<16x128xf32> -> vector<16x128xf32>
    %186 = vector.broadcast %132 : vector<1x128xf32> to vector<16x128xf32>
    %187 = arith.addf %185, %186 : vector<16x128xf32>
    %cst_82 = arith.constant 0.000000e+00 : f32
    %188 = vector.broadcast %cst_82 : f32 to vector<16x128xf32>
    %189 = arith.maximumf %187, %188 : vector<16x128xf32>
    %cst_83 = arith.constant dense<0.000000e+00> : vector<16x32xf32>
    %190 = tpu.matmul %189, %134, %cst_83 {dimension_numbers = #tpu.dot_dimension_numbers<[1], [0], [0], [1], [0, 0, 1, 1], [], []>} : vector<16x128xf32>, vector<128x32xf32>, vector<16x32xf32> -> vector<16x32xf32>
    %191 = vector.broadcast %135 : vector<1x32xf32> to vector<16x32xf32>
    %192 = arith.addf %190, %191 : vector<16x32xf32>
    %193 = arith.addf %184, %192 : vector<16x32xf32>
    %cst_84 = arith.constant dense<0.000000e+00> : vector<16xf32>
    %194 = vector.multi_reduction <add>, %193, %cst_84 [1] : vector<16x32xf32> to vector<16xf32>
    %195 = vector.shape_cast %194 : vector<16xf32> to vector<16x1xf32>
    %cst_85 = arith.constant 3.200000e+01 : f32
    %196 = vector.broadcast %cst_85 : f32 to vector<16x1xf32>
    %197 = arith.divf %195, %196 : vector<16x1xf32>
    %198 = arith.mulf %193, %193 : vector<16x32xf32>
    %cst_86 = arith.constant dense<0.000000e+00> : vector<16xf32>
    %199 = vector.multi_reduction <add>, %198, %cst_86 [1] : vector<16x32xf32> to vector<16xf32>
    %200 = vector.shape_cast %199 : vector<16xf32> to vector<16x1xf32>
    %cst_87 = arith.constant 3.200000e+01 : f32
    %201 = vector.broadcast %cst_87 : f32 to vector<16x1xf32>
    %202 = arith.divf %200, %201 : vector<16x1xf32>
    %203 = arith.mulf %197, %197 : vector<16x1xf32>
    %204 = arith.subf %202, %203 : vector<16x1xf32>
    %205 = vector.broadcast %197 : vector<16x1xf32> to vector<16x32xf32>
    %206 = arith.subf %193, %205 : vector<16x32xf32>
    %cst_88 = arith.constant 9.99999974E-6 : f32
    %207 = vector.broadcast %cst_88 : f32 to vector<16x1xf32>
    %208 = arith.addf %204, %207 : vector<16x1xf32>
    %209 = math.rsqrt %208 : vector<16x1xf32>
    %210 = vector.broadcast %209 : vector<16x1xf32> to vector<16x32xf32>
    %211 = arith.mulf %206, %210 : vector<16x32xf32>
    %212 = vector.broadcast %136 : vector<1x32xf32> to vector<16x32xf32>
    %213 = arith.mulf %211, %212 : vector<16x32xf32>
    %214 = vector.broadcast %137 : vector<1x32xf32> to vector<16x32xf32>
    %215 = arith.addf %213, %214 : vector<16x32xf32>
    %c2_89 = arith.constant 2 : index
    %c0_90 = arith.constant 0 : index
    %c0_91 = arith.constant 0 : index
    %216 = vector.load %arg7[%c2_89, %c0_90, %c0_91] : memref<5x8x128xf32, #tpu.memory_space<vmem>>, vector<1x8x128xf32>
    %217 = vector.shape_cast %216 : vector<1x8x128xf32> to vector<8x128xf32>
    %c2_92 = arith.constant 2 : index
    %c0_93 = arith.constant 0 : index
    %c0_94 = arith.constant 0 : index
    %218 = vector.load %arg4[%c2_92, %c0_93, %c0_94] : memref<5x32x96xf32, #tpu.memory_space<vmem>>, vector<1x32x96xf32>
    %219 = vector.shape_cast %218 : vector<1x32x96xf32> to vector<32x96xf32>
    %220 = vector.extract_strided_slice %217 {offsets = [0, 0], sizes = [1, 96], strides = [1, 1]} : vector<8x128xf32> to vector<1x96xf32>
    %c2_95 = arith.constant 2 : index
    %c0_96 = arith.constant 0 : index
    %c0_97 = arith.constant 0 : index
    %221 = vector.load %arg6[%c2_95, %c0_96, %c0_97] : memref<5x160x32xf32, #tpu.memory_space<vmem>>, vector<1x32x32xf32>
    %222 = vector.shape_cast %221 : vector<1x32x32xf32> to vector<32x32xf32>
    %223 = vector.extract_strided_slice %217 {offsets = [1, 0], sizes = [1, 32], strides = [1, 1]} : vector<8x128xf32> to vector<1x32xf32>
    %224 = vector.extract_strided_slice %217 {offsets = [2, 0], sizes = [1, 32], strides = [1, 1]} : vector<8x128xf32> to vector<1x32xf32>
    %225 = vector.extract_strided_slice %217 {offsets = [3, 0], sizes = [1, 32], strides = [1, 1]} : vector<8x128xf32> to vector<1x32xf32>
    %c2_98 = arith.constant 2 : index
    %c0_99 = arith.constant 0 : index
    %c0_100 = arith.constant 0 : index
    %226 = vector.load %arg5[%c2_98, %c0_99, %c0_100] : memref<5x32x128xf32, #tpu.memory_space<vmem>>, vector<1x32x128xf32>
    %227 = vector.shape_cast %226 : vector<1x32x128xf32> to vector<32x128xf32>
    %228 = vector.extract_strided_slice %217 {offsets = [4, 0], sizes = [1, 128], strides = [1, 1]} : vector<8x128xf32> to vector<1x128xf32>
    %c2_101 = arith.constant 2 : index
    %c32_102 = arith.constant 32 : index
    %c0_103 = arith.constant 0 : index
    %229 = vector.load %arg6[%c2_101, %c32_102, %c0_103] : memref<5x160x32xf32, #tpu.memory_space<vmem>>, vector<1x128x32xf32>
    %230 = vector.shape_cast %229 : vector<1x128x32xf32> to vector<128x32xf32>
    %231 = vector.extract_strided_slice %217 {offsets = [5, 0], sizes = [1, 32], strides = [1, 1]} : vector<8x128xf32> to vector<1x32xf32>
    %232 = vector.extract_strided_slice %217 {offsets = [6, 0], sizes = [1, 32], strides = [1, 1]} : vector<8x128xf32> to vector<1x32xf32>
    %233 = vector.extract_strided_slice %217 {offsets = [7, 0], sizes = [1, 32], strides = [1, 1]} : vector<8x128xf32> to vector<1x32xf32>
    %cst_104 = arith.constant dense<0.000000e+00> : vector<16x96xf32>
    %234 = tpu.matmul %215, %219, %cst_104 {dimension_numbers = #tpu.dot_dimension_numbers<[1], [0], [0], [1], [0, 0, 1, 1], [], []>} : vector<16x32xf32>, vector<32x96xf32>, vector<16x96xf32> -> vector<16x96xf32>
    %235 = vector.broadcast %220 : vector<1x96xf32> to vector<16x96xf32>
    %236 = arith.addf %234, %235 : vector<16x96xf32>
    %237 = vector.extract_strided_slice %236 {offsets = [0, 0], sizes = [16, 32], strides = [1, 1]} : vector<16x96xf32> to vector<16x32xf32>
    %238 = vector.extract_strided_slice %236 {offsets = [0, 32], sizes = [16, 32], strides = [1, 1]} : vector<16x96xf32> to vector<16x32xf32>
    %239 = vector.extract_strided_slice %236 {offsets = [0, 64], sizes = [16, 32], strides = [1, 1]} : vector<16x96xf32> to vector<16x32xf32>
    %240 = tpu.concatenate %238, %238, %238, %238, %238, %238, %238, %238 in 0 : vector<16x32xf32>, vector<16x32xf32>, vector<16x32xf32>, vector<16x32xf32>, vector<16x32xf32>, vector<16x32xf32>, vector<16x32xf32>, vector<16x32xf32> -> vector<128x32xf32>
    %241 = arith.mulf %240, %4 : vector<128x32xf32>
    %242 = tpu.concatenate %239, %239, %239, %239, %239, %239, %239, %239 in 0 : vector<16x32xf32>, vector<16x32xf32>, vector<16x32xf32>, vector<16x32xf32>, vector<16x32xf32>, vector<16x32xf32>, vector<16x32xf32>, vector<16x32xf32> -> vector<128x32xf32>
    %243 = arith.mulf %242, %4 : vector<128x32xf32>
    %cst_105 = arith.constant dense<0.000000e+00> : vector<16x128xf32>
    %244 = tpu.matmul %237, %241, %cst_105 {dimension_numbers = #tpu.dot_dimension_numbers<[1], [1], [0], [0], [0, 0, 1, 0], [], []>} : vector<16x32xf32>, vector<128x32xf32>, vector<16x128xf32> -> vector<16x128xf32>
    %245 = arith.addf %244, %6 : vector<16x128xf32>
    %cst_106 = arith.constant dense<0xFF800000> : vector<16xf32>
    %246 = vector.multi_reduction <maximumf>, %245, %cst_106 [1] : vector<16x128xf32> to vector<16xf32>
    %247 = vector.shape_cast %246 : vector<16xf32> to vector<16x1xf32>
    %248 = vector.broadcast %247 : vector<16x1xf32> to vector<16x128xf32>
    %249 = arith.subf %245, %248 : vector<16x128xf32>
    %250 = math.exp %249 : vector<16x128xf32>
    %cst_107 = arith.constant dense<0.000000e+00> : vector<16x128xf32>
    %251 = tpu.matmul %250, %2, %cst_107 {dimension_numbers = #tpu.dot_dimension_numbers<[1], [0], [0], [1], [0, 0, 1, 1], [], []>} : vector<16x128xf32>, vector<128x128xf32>, vector<16x128xf32> -> vector<16x128xf32>
    %252 = tpu.reciprocal %251 {approx = true} : vector<16x128xf32> -> vector<16x128xf32>
    %253 = arith.mulf %250, %252 : vector<16x128xf32>
    %cst_108 = arith.constant dense<0.000000e+00> : vector<16x32xf32>
    %254 = tpu.matmul %253, %243, %cst_108 {dimension_numbers = #tpu.dot_dimension_numbers<[1], [0], [0], [1], [0, 0, 1, 1], [], []>} : vector<16x128xf32>, vector<128x32xf32>, vector<16x32xf32> -> vector<16x32xf32>
    %cst_109 = arith.constant dense<0.000000e+00> : vector<16x32xf32>
    %255 = tpu.matmul %254, %222, %cst_109 {dimension_numbers = #tpu.dot_dimension_numbers<[1], [0], [0], [1], [0, 0, 1, 1], [], []>} : vector<16x32xf32>, vector<32x32xf32>, vector<16x32xf32> -> vector<16x32xf32>
    %256 = vector.broadcast %223 : vector<1x32xf32> to vector<16x32xf32>
    %257 = arith.addf %255, %256 : vector<16x32xf32>
    %258 = arith.addf %215, %257 : vector<16x32xf32>
    %cst_110 = arith.constant dense<0.000000e+00> : vector<16xf32>
    %259 = vector.multi_reduction <add>, %258, %cst_110 [1] : vector<16x32xf32> to vector<16xf32>
    %260 = vector.shape_cast %259 : vector<16xf32> to vector<16x1xf32>
    %cst_111 = arith.constant 3.200000e+01 : f32
    %261 = vector.broadcast %cst_111 : f32 to vector<16x1xf32>
    %262 = arith.divf %260, %261 : vector<16x1xf32>
    %263 = arith.mulf %258, %258 : vector<16x32xf32>
    %cst_112 = arith.constant dense<0.000000e+00> : vector<16xf32>
    %264 = vector.multi_reduction <add>, %263, %cst_112 [1] : vector<16x32xf32> to vector<16xf32>
    %265 = vector.shape_cast %264 : vector<16xf32> to vector<16x1xf32>
    %cst_113 = arith.constant 3.200000e+01 : f32
    %266 = vector.broadcast %cst_113 : f32 to vector<16x1xf32>
    %267 = arith.divf %265, %266 : vector<16x1xf32>
    %268 = arith.mulf %262, %262 : vector<16x1xf32>
    %269 = arith.subf %267, %268 : vector<16x1xf32>
    %270 = vector.broadcast %262 : vector<16x1xf32> to vector<16x32xf32>
    %271 = arith.subf %258, %270 : vector<16x32xf32>
    %cst_114 = arith.constant 9.99999974E-6 : f32
    %272 = vector.broadcast %cst_114 : f32 to vector<16x1xf32>
    %273 = arith.addf %269, %272 : vector<16x1xf32>
    %274 = math.rsqrt %273 : vector<16x1xf32>
    %275 = vector.broadcast %274 : vector<16x1xf32> to vector<16x32xf32>
    %276 = arith.mulf %271, %275 : vector<16x32xf32>
    %277 = vector.broadcast %224 : vector<1x32xf32> to vector<16x32xf32>
    %278 = arith.mulf %276, %277 : vector<16x32xf32>
    %279 = vector.broadcast %225 : vector<1x32xf32> to vector<16x32xf32>
    %280 = arith.addf %278, %279 : vector<16x32xf32>
    %cst_115 = arith.constant dense<0.000000e+00> : vector<16x128xf32>
    %281 = tpu.matmul %280, %227, %cst_115 {dimension_numbers = #tpu.dot_dimension_numbers<[1], [0], [0], [1], [0, 0, 1, 1], [], []>} : vector<16x32xf32>, vector<32x128xf32>, vector<16x128xf32> -> vector<16x128xf32>
    %282 = vector.broadcast %228 : vector<1x128xf32> to vector<16x128xf32>
    %283 = arith.addf %281, %282 : vector<16x128xf32>
    %cst_116 = arith.constant 0.000000e+00 : f32
    %284 = vector.broadcast %cst_116 : f32 to vector<16x128xf32>
    %285 = arith.maximumf %283, %284 : vector<16x128xf32>
    %cst_117 = arith.constant dense<0.000000e+00> : vector<16x32xf32>
    %286 = tpu.matmul %285, %230, %cst_117 {dimension_numbers = #tpu.dot_dimension_numbers<[1], [0], [0], [1], [0, 0, 1, 1], [], []>} : vector<16x128xf32>, vector<128x32xf32>, vector<16x32xf32> -> vector<16x32xf32>
    %287 = vector.broadcast %231 : vector<1x32xf32> to vector<16x32xf32>
    %288 = arith.addf %286, %287 : vector<16x32xf32>
    %289 = arith.addf %280, %288 : vector<16x32xf32>
    %cst_118 = arith.constant dense<0.000000e+00> : vector<16xf32>
    %290 = vector.multi_reduction <add>, %289, %cst_118 [1] : vector<16x32xf32> to vector<16xf32>
    %291 = vector.shape_cast %290 : vector<16xf32> to vector<16x1xf32>
    %cst_119 = arith.constant 3.200000e+01 : f32
    %292 = vector.broadcast %cst_119 : f32 to vector<16x1xf32>
    %293 = arith.divf %291, %292 : vector<16x1xf32>
    %294 = arith.mulf %289, %289 : vector<16x32xf32>
    %cst_120 = arith.constant dense<0.000000e+00> : vector<16xf32>
    %295 = vector.multi_reduction <add>, %294, %cst_120 [1] : vector<16x32xf32> to vector<16xf32>
    %296 = vector.shape_cast %295 : vector<16xf32> to vector<16x1xf32>
    %cst_121 = arith.constant 3.200000e+01 : f32
    %297 = vector.broadcast %cst_121 : f32 to vector<16x1xf32>
    %298 = arith.divf %296, %297 : vector<16x1xf32>
    %299 = arith.mulf %293, %293 : vector<16x1xf32>
    %300 = arith.subf %298, %299 : vector<16x1xf32>
    %301 = vector.broadcast %293 : vector<16x1xf32> to vector<16x32xf32>
    %302 = arith.subf %289, %301 : vector<16x32xf32>
    %cst_122 = arith.constant 9.99999974E-6 : f32
    %303 = vector.broadcast %cst_122 : f32 to vector<16x1xf32>
    %304 = arith.addf %300, %303 : vector<16x1xf32>
    %305 = math.rsqrt %304 : vector<16x1xf32>
    %306 = vector.broadcast %305 : vector<16x1xf32> to vector<16x32xf32>
    %307 = arith.mulf %302, %306 : vector<16x32xf32>
    %308 = vector.broadcast %232 : vector<1x32xf32> to vector<16x32xf32>
    %309 = arith.mulf %307, %308 : vector<16x32xf32>
    %310 = vector.broadcast %233 : vector<1x32xf32> to vector<16x32xf32>
    %311 = arith.addf %309, %310 : vector<16x32xf32>
    %c3 = arith.constant 3 : index
    %c0_123 = arith.constant 0 : index
    %c0_124 = arith.constant 0 : index
    %312 = vector.load %arg7[%c3, %c0_123, %c0_124] : memref<5x8x128xf32, #tpu.memory_space<vmem>>, vector<1x8x128xf32>
    %313 = vector.shape_cast %312 : vector<1x8x128xf32> to vector<8x128xf32>
    %c3_125 = arith.constant 3 : index
    %c0_126 = arith.constant 0 : index
    %c0_127 = arith.constant 0 : index
    %314 = vector.load %arg4[%c3_125, %c0_126, %c0_127] : memref<5x32x96xf32, #tpu.memory_space<vmem>>, vector<1x32x96xf32>
    %315 = vector.shape_cast %314 : vector<1x32x96xf32> to vector<32x96xf32>
    %316 = vector.extract_strided_slice %313 {offsets = [0, 0], sizes = [1, 96], strides = [1, 1]} : vector<8x128xf32> to vector<1x96xf32>
    %c3_128 = arith.constant 3 : index
    %c0_129 = arith.constant 0 : index
    %c0_130 = arith.constant 0 : index
    %317 = vector.load %arg6[%c3_128, %c0_129, %c0_130] : memref<5x160x32xf32, #tpu.memory_space<vmem>>, vector<1x32x32xf32>
    %318 = vector.shape_cast %317 : vector<1x32x32xf32> to vector<32x32xf32>
    %319 = vector.extract_strided_slice %313 {offsets = [1, 0], sizes = [1, 32], strides = [1, 1]} : vector<8x128xf32> to vector<1x32xf32>
    %320 = vector.extract_strided_slice %313 {offsets = [2, 0], sizes = [1, 32], strides = [1, 1]} : vector<8x128xf32> to vector<1x32xf32>
    %321 = vector.extract_strided_slice %313 {offsets = [3, 0], sizes = [1, 32], strides = [1, 1]} : vector<8x128xf32> to vector<1x32xf32>
    %c3_131 = arith.constant 3 : index
    %c0_132 = arith.constant 0 : index
    %c0_133 = arith.constant 0 : index
    %322 = vector.load %arg5[%c3_131, %c0_132, %c0_133] : memref<5x32x128xf32, #tpu.memory_space<vmem>>, vector<1x32x128xf32>
    %323 = vector.shape_cast %322 : vector<1x32x128xf32> to vector<32x128xf32>
    %324 = vector.extract_strided_slice %313 {offsets = [4, 0], sizes = [1, 128], strides = [1, 1]} : vector<8x128xf32> to vector<1x128xf32>
    %c3_134 = arith.constant 3 : index
    %c32_135 = arith.constant 32 : index
    %c0_136 = arith.constant 0 : index
    %325 = vector.load %arg6[%c3_134, %c32_135, %c0_136] : memref<5x160x32xf32, #tpu.memory_space<vmem>>, vector<1x128x32xf32>
    %326 = vector.shape_cast %325 : vector<1x128x32xf32> to vector<128x32xf32>
    %327 = vector.extract_strided_slice %313 {offsets = [5, 0], sizes = [1, 32], strides = [1, 1]} : vector<8x128xf32> to vector<1x32xf32>
    %328 = vector.extract_strided_slice %313 {offsets = [6, 0], sizes = [1, 32], strides = [1, 1]} : vector<8x128xf32> to vector<1x32xf32>
    %329 = vector.extract_strided_slice %313 {offsets = [7, 0], sizes = [1, 32], strides = [1, 1]} : vector<8x128xf32> to vector<1x32xf32>
    %cst_137 = arith.constant dense<0.000000e+00> : vector<16x96xf32>
    %330 = tpu.matmul %311, %315, %cst_137 {dimension_numbers = #tpu.dot_dimension_numbers<[1], [0], [0], [1], [0, 0, 1, 1], [], []>} : vector<16x32xf32>, vector<32x96xf32>, vector<16x96xf32> -> vector<16x96xf32>
    %331 = vector.broadcast %316 : vector<1x96xf32> to vector<16x96xf32>
    %332 = arith.addf %330, %331 : vector<16x96xf32>
    %333 = vector.extract_strided_slice %332 {offsets = [0, 0], sizes = [16, 32], strides = [1, 1]} : vector<16x96xf32> to vector<16x32xf32>
    %334 = vector.extract_strided_slice %332 {offsets = [0, 32], sizes = [16, 32], strides = [1, 1]} : vector<16x96xf32> to vector<16x32xf32>
    %335 = vector.extract_strided_slice %332 {offsets = [0, 64], sizes = [16, 32], strides = [1, 1]} : vector<16x96xf32> to vector<16x32xf32>
    %336 = tpu.concatenate %334, %334, %334, %334, %334, %334, %334, %334 in 0 : vector<16x32xf32>, vector<16x32xf32>, vector<16x32xf32>, vector<16x32xf32>, vector<16x32xf32>, vector<16x32xf32>, vector<16x32xf32>, vector<16x32xf32> -> vector<128x32xf32>
    %337 = arith.mulf %336, %4 : vector<128x32xf32>
    %338 = tpu.concatenate %335, %335, %335, %335, %335, %335, %335, %335 in 0 : vector<16x32xf32>, vector<16x32xf32>, vector<16x32xf32>, vector<16x32xf32>, vector<16x32xf32>, vector<16x32xf32>, vector<16x32xf32>, vector<16x32xf32> -> vector<128x32xf32>
    %339 = arith.mulf %338, %4 : vector<128x32xf32>
    %cst_138 = arith.constant dense<0.000000e+00> : vector<16x128xf32>
    %340 = tpu.matmul %333, %337, %cst_138 {dimension_numbers = #tpu.dot_dimension_numbers<[1], [1], [0], [0], [0, 0, 1, 0], [], []>} : vector<16x32xf32>, vector<128x32xf32>, vector<16x128xf32> -> vector<16x128xf32>
    %341 = arith.addf %340, %6 : vector<16x128xf32>
    %cst_139 = arith.constant dense<0xFF800000> : vector<16xf32>
    %342 = vector.multi_reduction <maximumf>, %341, %cst_139 [1] : vector<16x128xf32> to vector<16xf32>
    %343 = vector.shape_cast %342 : vector<16xf32> to vector<16x1xf32>
    %344 = vector.broadcast %343 : vector<16x1xf32> to vector<16x128xf32>
    %345 = arith.subf %341, %344 : vector<16x128xf32>
    %346 = math.exp %345 : vector<16x128xf32>
    %cst_140 = arith.constant dense<0.000000e+00> : vector<16x128xf32>
    %347 = tpu.matmul %346, %2, %cst_140 {dimension_numbers = #tpu.dot_dimension_numbers<[1], [0], [0], [1], [0, 0, 1, 1], [], []>} : vector<16x128xf32>, vector<128x128xf32>, vector<16x128xf32> -> vector<16x128xf32>
    %348 = tpu.reciprocal %347 {approx = true} : vector<16x128xf32> -> vector<16x128xf32>
    %349 = arith.mulf %346, %348 : vector<16x128xf32>
    %cst_141 = arith.constant dense<0.000000e+00> : vector<16x32xf32>
    %350 = tpu.matmul %349, %339, %cst_141 {dimension_numbers = #tpu.dot_dimension_numbers<[1], [0], [0], [1], [0, 0, 1, 1], [], []>} : vector<16x128xf32>, vector<128x32xf32>, vector<16x32xf32> -> vector<16x32xf32>
    %cst_142 = arith.constant dense<0.000000e+00> : vector<16x32xf32>
    %351 = tpu.matmul %350, %318, %cst_142 {dimension_numbers = #tpu.dot_dimension_numbers<[1], [0], [0], [1], [0, 0, 1, 1], [], []>} : vector<16x32xf32>, vector<32x32xf32>, vector<16x32xf32> -> vector<16x32xf32>
    %352 = vector.broadcast %319 : vector<1x32xf32> to vector<16x32xf32>
    %353 = arith.addf %351, %352 : vector<16x32xf32>
    %354 = arith.addf %311, %353 : vector<16x32xf32>
    %cst_143 = arith.constant dense<0.000000e+00> : vector<16xf32>
    %355 = vector.multi_reduction <add>, %354, %cst_143 [1] : vector<16x32xf32> to vector<16xf32>
    %356 = vector.shape_cast %355 : vector<16xf32> to vector<16x1xf32>
    %cst_144 = arith.constant 3.200000e+01 : f32
    %357 = vector.broadcast %cst_144 : f32 to vector<16x1xf32>
    %358 = arith.divf %356, %357 : vector<16x1xf32>
    %359 = arith.mulf %354, %354 : vector<16x32xf32>
    %cst_145 = arith.constant dense<0.000000e+00> : vector<16xf32>
    %360 = vector.multi_reduction <add>, %359, %cst_145 [1] : vector<16x32xf32> to vector<16xf32>
    %361 = vector.shape_cast %360 : vector<16xf32> to vector<16x1xf32>
    %cst_146 = arith.constant 3.200000e+01 : f32
    %362 = vector.broadcast %cst_146 : f32 to vector<16x1xf32>
    %363 = arith.divf %361, %362 : vector<16x1xf32>
    %364 = arith.mulf %358, %358 : vector<16x1xf32>
    %365 = arith.subf %363, %364 : vector<16x1xf32>
    %366 = vector.broadcast %358 : vector<16x1xf32> to vector<16x32xf32>
    %367 = arith.subf %354, %366 : vector<16x32xf32>
    %cst_147 = arith.constant 9.99999974E-6 : f32
    %368 = vector.broadcast %cst_147 : f32 to vector<16x1xf32>
    %369 = arith.addf %365, %368 : vector<16x1xf32>
    %370 = math.rsqrt %369 : vector<16x1xf32>
    %371 = vector.broadcast %370 : vector<16x1xf32> to vector<16x32xf32>
    %372 = arith.mulf %367, %371 : vector<16x32xf32>
    %373 = vector.broadcast %320 : vector<1x32xf32> to vector<16x32xf32>
    %374 = arith.mulf %372, %373 : vector<16x32xf32>
    %375 = vector.broadcast %321 : vector<1x32xf32> to vector<16x32xf32>
    %376 = arith.addf %374, %375 : vector<16x32xf32>
    %cst_148 = arith.constant dense<0.000000e+00> : vector<16x128xf32>
    %377 = tpu.matmul %376, %323, %cst_148 {dimension_numbers = #tpu.dot_dimension_numbers<[1], [0], [0], [1], [0, 0, 1, 1], [], []>} : vector<16x32xf32>, vector<32x128xf32>, vector<16x128xf32> -> vector<16x128xf32>
    %378 = vector.broadcast %324 : vector<1x128xf32> to vector<16x128xf32>
    %379 = arith.addf %377, %378 : vector<16x128xf32>
    %cst_149 = arith.constant 0.000000e+00 : f32
    %380 = vector.broadcast %cst_149 : f32 to vector<16x128xf32>
    %381 = arith.maximumf %379, %380 : vector<16x128xf32>
    %cst_150 = arith.constant dense<0.000000e+00> : vector<16x32xf32>
    %382 = tpu.matmul %381, %326, %cst_150 {dimension_numbers = #tpu.dot_dimension_numbers<[1], [0], [0], [1], [0, 0, 1, 1], [], []>} : vector<16x128xf32>, vector<128x32xf32>, vector<16x32xf32> -> vector<16x32xf32>
    %383 = vector.broadcast %327 : vector<1x32xf32> to vector<16x32xf32>
    %384 = arith.addf %382, %383 : vector<16x32xf32>
    %385 = arith.addf %376, %384 : vector<16x32xf32>
    %cst_151 = arith.constant dense<0.000000e+00> : vector<16xf32>
    %386 = vector.multi_reduction <add>, %385, %cst_151 [1] : vector<16x32xf32> to vector<16xf32>
    %387 = vector.shape_cast %386 : vector<16xf32> to vector<16x1xf32>
    %cst_152 = arith.constant 3.200000e+01 : f32
    %388 = vector.broadcast %cst_152 : f32 to vector<16x1xf32>
    %389 = arith.divf %387, %388 : vector<16x1xf32>
    %390 = arith.mulf %385, %385 : vector<16x32xf32>
    %cst_153 = arith.constant dense<0.000000e+00> : vector<16xf32>
    %391 = vector.multi_reduction <add>, %390, %cst_153 [1] : vector<16x32xf32> to vector<16xf32>
    %392 = vector.shape_cast %391 : vector<16xf32> to vector<16x1xf32>
    %cst_154 = arith.constant 3.200000e+01 : f32
    %393 = vector.broadcast %cst_154 : f32 to vector<16x1xf32>
    %394 = arith.divf %392, %393 : vector<16x1xf32>
    %395 = arith.mulf %389, %389 : vector<16x1xf32>
    %396 = arith.subf %394, %395 : vector<16x1xf32>
    %397 = vector.broadcast %389 : vector<16x1xf32> to vector<16x32xf32>
    %398 = arith.subf %385, %397 : vector<16x32xf32>
    %cst_155 = arith.constant 9.99999974E-6 : f32
    %399 = vector.broadcast %cst_155 : f32 to vector<16x1xf32>
    %400 = arith.addf %396, %399 : vector<16x1xf32>
    %401 = math.rsqrt %400 : vector<16x1xf32>
    %402 = vector.broadcast %401 : vector<16x1xf32> to vector<16x32xf32>
    %403 = arith.mulf %398, %402 : vector<16x32xf32>
    %404 = vector.broadcast %328 : vector<1x32xf32> to vector<16x32xf32>
    %405 = arith.mulf %403, %404 : vector<16x32xf32>
    %406 = vector.broadcast %329 : vector<1x32xf32> to vector<16x32xf32>
    %407 = arith.addf %405, %406 : vector<16x32xf32>
    %c4 = arith.constant 4 : index
    %c0_156 = arith.constant 0 : index
    %c0_157 = arith.constant 0 : index
    %408 = vector.load %arg7[%c4, %c0_156, %c0_157] : memref<5x8x128xf32, #tpu.memory_space<vmem>>, vector<1x8x128xf32>
    %409 = vector.shape_cast %408 : vector<1x8x128xf32> to vector<8x128xf32>
    %c4_158 = arith.constant 4 : index
    %c0_159 = arith.constant 0 : index
    %c0_160 = arith.constant 0 : index
    %410 = vector.load %arg4[%c4_158, %c0_159, %c0_160] : memref<5x32x96xf32, #tpu.memory_space<vmem>>, vector<1x32x96xf32>
    %411 = vector.shape_cast %410 : vector<1x32x96xf32> to vector<32x96xf32>
    %412 = vector.extract_strided_slice %409 {offsets = [0, 0], sizes = [1, 96], strides = [1, 1]} : vector<8x128xf32> to vector<1x96xf32>
    %c4_161 = arith.constant 4 : index
    %c0_162 = arith.constant 0 : index
    %c0_163 = arith.constant 0 : index
    %413 = vector.load %arg6[%c4_161, %c0_162, %c0_163] : memref<5x160x32xf32, #tpu.memory_space<vmem>>, vector<1x32x32xf32>
    %414 = vector.shape_cast %413 : vector<1x32x32xf32> to vector<32x32xf32>
    %415 = vector.extract_strided_slice %409 {offsets = [1, 0], sizes = [1, 32], strides = [1, 1]} : vector<8x128xf32> to vector<1x32xf32>
    %416 = vector.extract_strided_slice %409 {offsets = [2, 0], sizes = [1, 32], strides = [1, 1]} : vector<8x128xf32> to vector<1x32xf32>
    %417 = vector.extract_strided_slice %409 {offsets = [3, 0], sizes = [1, 32], strides = [1, 1]} : vector<8x128xf32> to vector<1x32xf32>
    %c4_164 = arith.constant 4 : index
    %c0_165 = arith.constant 0 : index
    %c0_166 = arith.constant 0 : index
    %418 = vector.load %arg5[%c4_164, %c0_165, %c0_166] : memref<5x32x128xf32, #tpu.memory_space<vmem>>, vector<1x32x128xf32>
    %419 = vector.shape_cast %418 : vector<1x32x128xf32> to vector<32x128xf32>
    %420 = vector.extract_strided_slice %409 {offsets = [4, 0], sizes = [1, 128], strides = [1, 1]} : vector<8x128xf32> to vector<1x128xf32>
    %c4_167 = arith.constant 4 : index
    %c32_168 = arith.constant 32 : index
    %c0_169 = arith.constant 0 : index
    %421 = vector.load %arg6[%c4_167, %c32_168, %c0_169] : memref<5x160x32xf32, #tpu.memory_space<vmem>>, vector<1x128x32xf32>
    %422 = vector.shape_cast %421 : vector<1x128x32xf32> to vector<128x32xf32>
    %423 = vector.extract_strided_slice %409 {offsets = [5, 0], sizes = [1, 32], strides = [1, 1]} : vector<8x128xf32> to vector<1x32xf32>
    %424 = vector.extract_strided_slice %409 {offsets = [6, 0], sizes = [1, 32], strides = [1, 1]} : vector<8x128xf32> to vector<1x32xf32>
    %425 = vector.extract_strided_slice %409 {offsets = [7, 0], sizes = [1, 32], strides = [1, 1]} : vector<8x128xf32> to vector<1x32xf32>
    %cst_170 = arith.constant dense<0.000000e+00> : vector<16x96xf32>
    %426 = tpu.matmul %407, %411, %cst_170 {dimension_numbers = #tpu.dot_dimension_numbers<[1], [0], [0], [1], [0, 0, 1, 1], [], []>} : vector<16x32xf32>, vector<32x96xf32>, vector<16x96xf32> -> vector<16x96xf32>
    %427 = vector.broadcast %412 : vector<1x96xf32> to vector<16x96xf32>
    %428 = arith.addf %426, %427 : vector<16x96xf32>
    %429 = vector.extract_strided_slice %428 {offsets = [0, 0], sizes = [16, 32], strides = [1, 1]} : vector<16x96xf32> to vector<16x32xf32>
    %430 = vector.extract_strided_slice %428 {offsets = [0, 32], sizes = [16, 32], strides = [1, 1]} : vector<16x96xf32> to vector<16x32xf32>
    %431 = vector.extract_strided_slice %428 {offsets = [0, 64], sizes = [16, 32], strides = [1, 1]} : vector<16x96xf32> to vector<16x32xf32>
    %432 = tpu.concatenate %430, %430, %430, %430, %430, %430, %430, %430 in 0 : vector<16x32xf32>, vector<16x32xf32>, vector<16x32xf32>, vector<16x32xf32>, vector<16x32xf32>, vector<16x32xf32>, vector<16x32xf32>, vector<16x32xf32> -> vector<128x32xf32>
    %433 = arith.mulf %432, %4 : vector<128x32xf32>
    %434 = tpu.concatenate %431, %431, %431, %431, %431, %431, %431, %431 in 0 : vector<16x32xf32>, vector<16x32xf32>, vector<16x32xf32>, vector<16x32xf32>, vector<16x32xf32>, vector<16x32xf32>, vector<16x32xf32>, vector<16x32xf32> -> vector<128x32xf32>
    %435 = arith.mulf %434, %4 : vector<128x32xf32>
    %cst_171 = arith.constant dense<0.000000e+00> : vector<16x128xf32>
    %436 = tpu.matmul %429, %433, %cst_171 {dimension_numbers = #tpu.dot_dimension_numbers<[1], [1], [0], [0], [0, 0, 1, 0], [], []>} : vector<16x32xf32>, vector<128x32xf32>, vector<16x128xf32> -> vector<16x128xf32>
    %437 = arith.addf %436, %6 : vector<16x128xf32>
    %cst_172 = arith.constant dense<0xFF800000> : vector<16xf32>
    %438 = vector.multi_reduction <maximumf>, %437, %cst_172 [1] : vector<16x128xf32> to vector<16xf32>
    %439 = vector.shape_cast %438 : vector<16xf32> to vector<16x1xf32>
    %440 = vector.broadcast %439 : vector<16x1xf32> to vector<16x128xf32>
    %441 = arith.subf %437, %440 : vector<16x128xf32>
    %442 = math.exp %441 : vector<16x128xf32>
    %cst_173 = arith.constant dense<0.000000e+00> : vector<16x128xf32>
    %443 = tpu.matmul %442, %2, %cst_173 {dimension_numbers = #tpu.dot_dimension_numbers<[1], [0], [0], [1], [0, 0, 1, 1], [], []>} : vector<16x128xf32>, vector<128x128xf32>, vector<16x128xf32> -> vector<16x128xf32>
    %444 = tpu.reciprocal %443 {approx = true} : vector<16x128xf32> -> vector<16x128xf32>
    %445 = arith.mulf %442, %444 : vector<16x128xf32>
    %cst_174 = arith.constant dense<0.000000e+00> : vector<16x32xf32>
    %446 = tpu.matmul %445, %435, %cst_174 {dimension_numbers = #tpu.dot_dimension_numbers<[1], [0], [0], [1], [0, 0, 1, 1], [], []>} : vector<16x128xf32>, vector<128x32xf32>, vector<16x32xf32> -> vector<16x32xf32>
    %cst_175 = arith.constant dense<0.000000e+00> : vector<16x32xf32>
    %447 = tpu.matmul %446, %414, %cst_175 {dimension_numbers = #tpu.dot_dimension_numbers<[1], [0], [0], [1], [0, 0, 1, 1], [], []>} : vector<16x32xf32>, vector<32x32xf32>, vector<16x32xf32> -> vector<16x32xf32>
    %448 = vector.broadcast %415 : vector<1x32xf32> to vector<16x32xf32>
    %449 = arith.addf %447, %448 : vector<16x32xf32>
    %450 = arith.addf %407, %449 : vector<16x32xf32>
    %cst_176 = arith.constant dense<0.000000e+00> : vector<16xf32>
    %451 = vector.multi_reduction <add>, %450, %cst_176 [1] : vector<16x32xf32> to vector<16xf32>
    %452 = vector.shape_cast %451 : vector<16xf32> to vector<16x1xf32>
    %cst_177 = arith.constant 3.200000e+01 : f32
    %453 = vector.broadcast %cst_177 : f32 to vector<16x1xf32>
    %454 = arith.divf %452, %453 : vector<16x1xf32>
    %455 = arith.mulf %450, %450 : vector<16x32xf32>
    %cst_178 = arith.constant dense<0.000000e+00> : vector<16xf32>
    %456 = vector.multi_reduction <add>, %455, %cst_178 [1] : vector<16x32xf32> to vector<16xf32>
    %457 = vector.shape_cast %456 : vector<16xf32> to vector<16x1xf32>
    %cst_179 = arith.constant 3.200000e+01 : f32
    %458 = vector.broadcast %cst_179 : f32 to vector<16x1xf32>
    %459 = arith.divf %457, %458 : vector<16x1xf32>
    %460 = arith.mulf %454, %454 : vector<16x1xf32>
    %461 = arith.subf %459, %460 : vector<16x1xf32>
    %462 = vector.broadcast %454 : vector<16x1xf32> to vector<16x32xf32>
    %463 = arith.subf %450, %462 : vector<16x32xf32>
    %cst_180 = arith.constant 9.99999974E-6 : f32
    %464 = vector.broadcast %cst_180 : f32 to vector<16x1xf32>
    %465 = arith.addf %461, %464 : vector<16x1xf32>
    %466 = math.rsqrt %465 : vector<16x1xf32>
    %467 = vector.broadcast %466 : vector<16x1xf32> to vector<16x32xf32>
    %468 = arith.mulf %463, %467 : vector<16x32xf32>
    %469 = vector.broadcast %416 : vector<1x32xf32> to vector<16x32xf32>
    %470 = arith.mulf %468, %469 : vector<16x32xf32>
    %471 = vector.broadcast %417 : vector<1x32xf32> to vector<16x32xf32>
    %472 = arith.addf %470, %471 : vector<16x32xf32>
    %cst_181 = arith.constant dense<0.000000e+00> : vector<16x128xf32>
    %473 = tpu.matmul %472, %419, %cst_181 {dimension_numbers = #tpu.dot_dimension_numbers<[1], [0], [0], [1], [0, 0, 1, 1], [], []>} : vector<16x32xf32>, vector<32x128xf32>, vector<16x128xf32> -> vector<16x128xf32>
    %474 = vector.broadcast %420 : vector<1x128xf32> to vector<16x128xf32>
    %475 = arith.addf %473, %474 : vector<16x128xf32>
    %cst_182 = arith.constant 0.000000e+00 : f32
    %476 = vector.broadcast %cst_182 : f32 to vector<16x128xf32>
    %477 = arith.maximumf %475, %476 : vector<16x128xf32>
    %cst_183 = arith.constant dense<0.000000e+00> : vector<16x32xf32>
    %478 = tpu.matmul %477, %422, %cst_183 {dimension_numbers = #tpu.dot_dimension_numbers<[1], [0], [0], [1], [0, 0, 1, 1], [], []>} : vector<16x128xf32>, vector<128x32xf32>, vector<16x32xf32> -> vector<16x32xf32>
    %479 = vector.broadcast %423 : vector<1x32xf32> to vector<16x32xf32>
    %480 = arith.addf %478, %479 : vector<16x32xf32>
    %481 = arith.addf %472, %480 : vector<16x32xf32>
    %cst_184 = arith.constant dense<0.000000e+00> : vector<16xf32>
    %482 = vector.multi_reduction <add>, %481, %cst_184 [1] : vector<16x32xf32> to vector<16xf32>
    %483 = vector.shape_cast %482 : vector<16xf32> to vector<16x1xf32>
    %cst_185 = arith.constant 3.200000e+01 : f32
    %484 = vector.broadcast %cst_185 : f32 to vector<16x1xf32>
    %485 = arith.divf %483, %484 : vector<16x1xf32>
    %486 = arith.mulf %481, %481 : vector<16x32xf32>
    %cst_186 = arith.constant dense<0.000000e+00> : vector<16xf32>
    %487 = vector.multi_reduction <add>, %486, %cst_186 [1] : vector<16x32xf32> to vector<16xf32>
    %488 = vector.shape_cast %487 : vector<16xf32> to vector<16x1xf32>
    %cst_187 = arith.constant 3.200000e+01 : f32
    %489 = vector.broadcast %cst_187 : f32 to vector<16x1xf32>
    %490 = arith.divf %488, %489 : vector<16x1xf32>
    %491 = arith.mulf %485, %485 : vector<16x1xf32>
    %492 = arith.subf %490, %491 : vector<16x1xf32>
    %493 = vector.broadcast %485 : vector<16x1xf32> to vector<16x32xf32>
    %494 = arith.subf %481, %493 : vector<16x32xf32>
    %cst_188 = arith.constant 9.99999974E-6 : f32
    %495 = vector.broadcast %cst_188 : f32 to vector<16x1xf32>
    %496 = arith.addf %492, %495 : vector<16x1xf32>
    %497 = math.rsqrt %496 : vector<16x1xf32>
    %498 = vector.broadcast %497 : vector<16x1xf32> to vector<16x32xf32>
    %499 = arith.mulf %494, %498 : vector<16x32xf32>
    %500 = vector.broadcast %424 : vector<1x32xf32> to vector<16x32xf32>
    %501 = arith.mulf %499, %500 : vector<16x32xf32>
    %502 = vector.broadcast %425 : vector<1x32xf32> to vector<16x32xf32>
    %503 = arith.addf %501, %502 : vector<16x32xf32>
    %c0_189 = arith.constant 0 : index
    %c0_190 = arith.constant 0 : index
    %504 = vector.load %arg10[%c0_189, %c0_190] : memref<16x32xf32, #tpu.memory_space<vmem>>, vector<16x32xf32>
    tpu.vector_store %arg10[%c0_189, %c0_190], %503 {strides = array<i32>} : memref<16x32xf32, #tpu.memory_space<vmem>>, vector<16x32xf32>,
    %c1_191 = arith.constant 1 : index
    %c0_192 = arith.constant 0 : index
    %c0_193 = arith.constant 0 : index
    %505 = vector.load %arg3[%c1_191, %c0_192, %c0_193] : memref<2x112x128xf32, #tpu.memory_space<vmem>>, vector<1x32x64xf32>
    %506 = vector.shape_cast %505 : vector<1x32x64xf32> to vector<32x64xf32>
    %c1_194 = arith.constant 1 : index
    %c96_195 = arith.constant 96 : index
    %c0_196 = arith.constant 0 : index
    %507 = vector.load %arg3[%c1_194, %c96_195, %c0_196] : memref<2x112x128xf32, #tpu.memory_space<vmem>>, vector<1x1x64xf32>
    %508 = vector.shape_cast %507 : vector<1x1x64xf32> to vector<1x64xf32>
    %c1_197 = arith.constant 1 : index
    %c32_198 = arith.constant 32 : index
    %c0_199 = arith.constant 0 : index
    %509 = vector.load %arg3[%c1_197, %c32_198, %c0_199] : memref<2x112x128xf32, #tpu.memory_space<vmem>>, vector<1x64x128xf32>
    %510 = vector.shape_cast %509 : vector<1x64x128xf32> to vector<64x128xf32>
    %c1_200 = arith.constant 1 : index
    %c104_201 = arith.constant 104 : index
    %c0_202 = arith.constant 0 : index
    %511 = vector.load %arg3[%c1_200, %c104_201, %c0_202] : memref<2x112x128xf32, #tpu.memory_space<vmem>>, vector<1x1x128xf32>
    %512 = vector.shape_cast %511 : vector<1x1x128xf32> to vector<1x128xf32>
    %cst_203 = arith.constant dense<0.000000e+00> : vector<16x64xf32>
    %513 = tpu.matmul %503, %506, %cst_203 {dimension_numbers = #tpu.dot_dimension_numbers<[1], [0], [0], [1], [0, 0, 1, 1], [], []>} : vector<16x32xf32>, vector<32x64xf32>, vector<16x64xf32> -> vector<16x64xf32>
    %514 = vector.broadcast %508 : vector<1x64xf32> to vector<16x64xf32>
    %515 = arith.addf %513, %514 : vector<16x64xf32>
    %cst_204 = arith.constant 0.000000e+00 : f32
    %516 = vector.broadcast %cst_204 : f32 to vector<16x64xf32>
    %517 = arith.maximumf %515, %516 : vector<16x64xf32>
    %cst_205 = arith.constant dense<0.000000e+00> : vector<16x128xf32>
    %518 = tpu.matmul %517, %510, %cst_205 {dimension_numbers = #tpu.dot_dimension_numbers<[1], [0], [0], [1], [0, 0, 1, 1], [], []>} : vector<16x64xf32>, vector<64x128xf32>, vector<16x128xf32> -> vector<16x128xf32>
    %519 = vector.broadcast %512 : vector<1x128xf32> to vector<16x128xf32>
    %520 = arith.addf %518, %519 : vector<16x128xf32>
    %521 = arith.addf %22, %520 : vector<16x128xf32>
    %cst_206 = arith.constant 0.000000e+00 : f32
    %522 = vector.broadcast %cst_206 : f32 to vector<16x128xf32>
    %523 = arith.subf %522, %521 : vector<16x128xf32>
    %524 = math.exp %523 : vector<16x128xf32>
    %cst_207 = arith.constant 1.000000e+00 : f32
    %525 = vector.broadcast %cst_207 : f32 to vector<16x128xf32>
    %526 = arith.addf %525, %524 : vector<16x128xf32>
    %527 = tpu.reciprocal %526 {approx = true} : vector<16x128xf32> -> vector<16x128xf32>
    %c0_208 = arith.constant 0 : index
    %c0_209 = arith.constant 0 : index
    %528 = vector.load %arg8[%c0_208, %c0_209] : memref<16x128xf32, #tpu.memory_space<vmem>>, vector<16x128xf32>
    tpu.vector_store %arg8[%c0_208, %c0_209], %527 {strides = array<i32>} : memref<16x128xf32, #tpu.memory_space<vmem>>, vector<16x128xf32>,
    return
  }
  func.func @transform_0(%arg0: i32) -> (i32, i32) {
    %c0_i32 = arith.constant 0 : i32
    %c0_i32_0 = arith.constant 0 : i32
    %c0_i32_1 = arith.constant 0 : i32
    return %c0_i32, %c0_i32_0 : i32, i32
  }
  func.func @transform_1(%arg0: i32) -> (i32, i32, i32) {
    %c0_i32 = arith.constant 0 : i32
    %c0_i32_0 = arith.constant 0 : i32
    %c0_i32_1 = arith.constant 0 : i32
    %c0_i32_2 = arith.constant 0 : i32
    return %c0_i32, %c0_i32_0, %c0_i32_1 : i32, i32, i32
  }
  func.func @transform_2(%arg0: i32) -> (i32, i32, i32) {
    %c0_i32 = arith.constant 0 : i32
    %c0_i32_0 = arith.constant 0 : i32
    %c0_i32_1 = arith.constant 0 : i32
    %c0_i32_2 = arith.constant 0 : i32
    return %c0_i32, %c0_i32_0, %c0_i32_1 : i32, i32, i32
  }
  func.func @transform_3(%arg0: i32) -> (i32, i32, i32) {
    %c0_i32 = arith.constant 0 : i32
    %c0_i32_0 = arith.constant 0 : i32
    %c0_i32_1 = arith.constant 0 : i32
    %c0_i32_2 = arith.constant 0 : i32
    return %c0_i32, %c0_i32_0, %c0_i32_1 : i32, i32, i32
  }
  func.func @transform_4(%arg0: i32) -> (i32, i32, i32) {
    %c0_i32 = arith.constant 0 : i32
    %c0_i32_0 = arith.constant 0 : i32
    %c0_i32_1 = arith.constant 0 : i32
    %c0_i32_2 = arith.constant 0 : i32
    return %c0_i32, %c0_i32_0, %c0_i32_1 : i32, i32, i32
  }
  func.func @transform_5(%arg0: i32) -> (i32, i32, i32) {
    %c0_i32 = arith.constant 0 : i32
    %c0_i32_0 = arith.constant 0 : i32
    %c0_i32_1 = arith.constant 0 : i32
    %c0_i32_2 = arith.constant 0 : i32
    return %c0_i32, %c0_i32_0, %c0_i32_1 : i32, i32, i32
  }
  func.func @transform_6(%arg0: i32) -> (i32, i32, i32) {
    %c0_i32 = arith.constant 0 : i32
    %c0_i32_0 = arith.constant 0 : i32
    %c0_i32_1 = arith.constant 0 : i32
    %c0_i32_2 = arith.constant 0 : i32
    return %c0_i32, %c0_i32_0, %c0_i32_1 : i32, i32, i32
  }
  func.func @transform_7(%arg0: i32) -> (i32, i32) {
    %c0_i32 = arith.constant 0 : i32
    %c0_i32_0 = arith.constant 0 : i32
    %c0_i32_1 = arith.constant 0 : i32
    return %c0_i32, %c0_i32_0 : i32, i32
  }
  func.func @transform_8(%arg0: i32) -> (i32, i32) {
    %c0_i32 = arith.constant 0 : i32
    %c0_i32_0 = arith.constant 0 : i32
    %c0_i32_1 = arith.constant 0 : i32
    return %c0_i32, %c0_i32_0 : i32, i32
  }
  func.func @transform_9(%arg0: i32) -> (i32, i32) {
    %c0_i32 = arith.constant 0 : i32
    %c0_i32_0 = arith.constant 0 : i32
    %c0_i32_1 = arith.constant 0 : i32
    return %c0_i32, %c0_i32_0 : i32, i32
  }
}

</mosaic_0001>

<llo_original>
// kernel: tpu_custom_call.1
$region0: #{tpu_custom_call.1}
  #allocation0 [shape = 'u32[]', space=smem, size = 0x4, offset = 0x4, fixed_abs, tag = 'smem constant byte address 0x4 - core index']
  #allocation1 [shape = 'u32[144,128]{1,0:T(1,128)}', space=vmem, size = 0x12000, scoped, tag = 'internal scratch']
  %s0 = inlined_call_operand.vmem [shape: f32[16,32], index: 0, kind: input, shape index: {}]
  %s1 = inlined_call_operand.vmem [shape: f32[3,128,128], index: 1, kind: input, shape index: {}]
  %s2 = inlined_call_operand.vmem [shape: f32[2,112,128], index: 2, kind: input, shape index: {}]
  %s3 = inlined_call_operand.vmem [shape: f32[5,32,96], index: 3, kind: input, shape index: {}]
  %s4 = inlined_call_operand.vmem [shape: f32[5,32,128], index: 4, kind: input, shape index: {}]
  %s5 = inlined_call_operand.vmem [shape: f32[5,160,32], index: 5, kind: input, shape index: {}]
  %s6 = inlined_call_operand.vmem [shape: f32[5,8,128], index: 6, kind: input, shape index: {}]
  %s7 = inlined_call_operand.hbm [shape: f32[16,128], index: 7, kind: output, shape index: {0}]
  %s8 = inlined_call_operand.hbm [shape: f32[16,32], index: 8, kind: output, shape index: {1}]
  %s9 = inlined_call_operand.hbm [shape: f32[16,32], index: 9, kind: output, shape index: {2}]
  %10 = xla_tuple %s7, %s8, %s9
  %s11 = sld [smem:[#allocation0]]
  $region54: #{tpu_custom_call.1} parent=0
    _
  %s13 = ssub.s32 1, %s11
  %s14 = scalar_select 0, %s13, %s11
  $region1: #{tpu_custom_call.1} parent=0
    #allocation2 [shape = 'u8[8192]{0}', space=vmem, size = 0x2000, scoped, tag = 'output window, operand 0, single buffered']
    #allocation3 [shape = 's32[1]{0}', space=sflag, size = 0x4, scoped, tag = 'scoped memory for tpu_custom_call.1']
    #allocation4 [shape = 'u8[8192]{0}', space=vmem, size = 0x2000, scoped, tag = 'output window, operand 1, single buffered']
    #allocation5 [shape = 's32[1]{0}', space=sflag, size = 0x4, scoped, tag = 'scoped memory for tpu_custom_call.1']
    #allocation6 [shape = 'u8[8192]{0}', space=vmem, size = 0x2000, scoped, tag = 'output window, operand 2, single buffered']
    %15 = vsyncpa [#allocation3], 0
    %16 = vsyncpa [#allocation5], 0
    // Predicated region
    $region2: #{tpu_custom_call.1} parent=1 // pred_check
      _
    $region3: #{tpu_custom_call.1} parent=1 // pred_check_branch
      %18 = sbr.rel (0) target = $region5
    $region4: #{tpu_custom_call.1} parent=1 // pred_region
      _
    $region5: #{tpu_custom_call.1} parent=1 // pred_fallthru
      _
    // Predicated region
    $region6: #{tpu_custom_call.1} parent=1 // pred_check
      _
    $region7: #{tpu_custom_call.1} parent=1 // pred_check_branch
      %20 = sbr.rel (0) target = $region9
    $region8: #{tpu_custom_call.1} parent=1 // pred_region
      _
    $region9: #{tpu_custom_call.1} parent=1 // pred_fallthru
      _
    // Predicated region
    $region10: #{tpu_custom_call.1} parent=1 // pred_check
      _
    $region11: #{tpu_custom_call.1} parent=1 // pred_check_branch
      %22 = sbr.rel (0) target = $region13
    $region12: #{tpu_custom_call.1} parent=1 // pred_region
      _
    $region13: #{tpu_custom_call.1} parent=1 // pred_fallthru
      _
    // Predicated region
    $region14: #{tpu_custom_call.1} parent=1 // pred_check
      _
    $region15: #{tpu_custom_call.1} parent=1 // pred_check_branch
      %24 = sbr.rel (0) target = $region17
    $region16: #{tpu_custom_call.1} parent=1 // pred_region
      _
    $region17: #{tpu_custom_call.1} parent=1 // pred_fallthru
      _
    // Predicated region
    $region18: #{tpu_custom_call.1} parent=1 // pred_check
      _
    $region19: #{tpu_custom_call.1} parent=1 // pred_check_branch
      %26 = sbr.rel (0) target = $region21
    $region20: #{tpu_custom_call.1} parent=1 // pred_region
      _
    $region21: #{tpu_custom_call.1} parent=1 // pred_fallthru
      _
    // Predicated region
    $region22: #{tpu_custom_call.1} parent=1 // pred_check
      _
    $region23: #{tpu_custom_call.1} parent=1 // pred_check_branch
      %28 = sbr.rel (0) target = $region25
    $region24: #{tpu_custom_call.1} parent=1 // pred_region
      _
    $region25: #{tpu_custom_call.1} parent=1 // pred_fallthru
      _
    // Predicated region
    $region26: #{tpu_custom_call.1} parent=1 // pred_check
      _
    $region27: #{tpu_custom_call.1} parent=1 // pred_check_branch
      %30 = sbr.rel (0) target = $region29
    $region28: #{tpu_custom_call.1} parent=1 // pred_region
      _
    $region29: #{tpu_custom_call.1} parent=1 // pred_fallthru
      _
    %v31 = vld [vmem:[%s0] sm:$0xff]
    %v32 = vld [vmem:[%s0 + $0x8] sm:$0xff]
    %v33 = vld [vmem:[%s1] sm:$0xff]
    %v34 = vld [vmem:[%s1 + $0x8] sm:$0xff]
    %v35 = vld [vmem:[%s1 + $0x10] sm:$0xff]
    %v36 = vld [vmem:[%s1 + $0x18] sm:$0xff]
    %v37 = vld [vmem:[%s1 + $0x20] sm:$0xff]
    %v38 = vld [vmem:[%s1 + $0x28] sm:$0xff]
    %v39 = vld [vmem:[%s1 + $0x30] sm:$0xff]
    %v40 = vld [vmem:[%s1 + $0x38] sm:$0xff]
    %v41 = vld [vmem:[%s1 + $0x40] sm:$0xff]
    %v42 = vld [vmem:[%s1 + $0x48] sm:$0xff]
    %v43 = vld [vmem:[%s1 + $0x50] sm:$0xff]
    %v44 = vld [vmem:[%s1 + $0x58] sm:$0xff]
    %v45 = vld [vmem:[%s1 + $0x60] sm:$0xff]
    %v46 = vld [vmem:[%s1 + $0x68] sm:$0xff]
    %v47 = vld [vmem:[%s1 + $0x70] sm:$0xff]
    %v48 = vld [vmem:[%s1 + $0x78] sm:$0xff]
    %s49 = scalar_lea.vmem %s1, 128
    %v50 = vld [vmem:[%s49] sm:$0xff]
    %v51 = vld [vmem:[%s49 + $0x8] sm:$0xff]
    %v52 = vld [vmem:[%s49 + $0x10] sm:$0xff]
    %v53 = vld [vmem:[%s49 + $0x18] sm:$0xff]
    %v54 = vld [vmem:[%s49 + $0x20] sm:$0xff]
    %v55 = vld [vmem:[%s49 + $0x28] sm:$0xff]
    %v56 = vld [vmem:[%s49 + $0x30] sm:$0xff]
    %v57 = vld [vmem:[%s49 + $0x38] sm:$0xff]
    %v58 = vld [vmem:[%s49 + $0x40] sm:$0xff]
    %v59 = vld [vmem:[%s49 + $0x48] sm:$0xff]
    %v60 = vld [vmem:[%s49 + $0x50] sm:$0xff]
    %v61 = vld [vmem:[%s49 + $0x58] sm:$0xff]
    %v62 = vld [vmem:[%s49 + $0x60] sm:$0xff]
    %v63 = vld [vmem:[%s49 + $0x68] sm:$0xff]
    %v64 = vld [vmem:[%s49 + $0x70] sm:$0xff]
    %v65 = vld [vmem:[%s49 + $0x78] sm:$0xff]
    %s66 = scalar_lea.vmem %s1, 256
    %v67 = vld [vmem:[%s66] sm:$0xff]
    %v68 = vld [vmem:[%s66 + $0x8] sm:$0xff]
    %v69 = vld [vmem:[%s2] sm:$0xff]
    %v70 = vld [vmem:[%s2 + $0x8] sm:$0xff]
    %v71 = vld [vmem:[%s2 + $0x10] sm:$0xff]
    %v72 = vld [vmem:[%s2 + $0x18] sm:$0xff]
    %v73 = vld [vmem:[%s2 + $0x60] sm:$0x1]
    %v74 = vld [vmem:[%s2 + $0x20] sm:$0xff]
    %v75 = vld [vmem:[%s2 + $0x28] sm:$0xff]
    %v76 = vld [vmem:[%s2 + $0x30] sm:$0xff]
    %v77 = vld [vmem:[%s2 + $0x38] sm:$0xff]
    %v78 = vld [vmem:[%s2 + $0x40] sm:$0xff]
    %v79 = vld [vmem:[%s2 + $0x48] sm:$0xff]
    %v80 = vld [vmem:[%s2 + $0x50] sm:$0xff]
    %v81 = vld [vmem:[%s2 + $0x58] sm:$0xff]
    %v82 = vld [vmem:[%s2 + $0x68] sm:$0x1]
    %v83 = vlaneseq
    %v84 = vshrl.u32 %v83, 7
    %v85 = vsub.s32 0, %v84
    %v86 = vrot.slane %v73, %v85
    %vm87 = vcmask 261120
    %v89 = vsel %vm87, %v31, 0
    %v92 = vsel %vm87, %v32, 0
    %94 = vmatprep.subr.mxu0 0.0
    %95 = vmatpush1.msra.mxu0 0.0
    %96 = vmatprep.subr.mxu0 0.0
    %97 = vmatpush1.msra.mxu0 0.0
    %98 = vmatprep.subr.mxu0 0.0
    %99 = vmatpush1.msra.mxu0 0.0
    %100 = vmatprep.subr.mxu0 0.0
    %101 = vmatpush1.msra.mxu0 0.0
    %102 = vmatprep.subr.mxu0 0.0
    %103 = vmatpush1.msra.mxu0 0.0
    %104 = vmatprep.subr.mxu0 0.0
    %105 = vmatpush1.msra.mxu0 0.0
    %106 = vmatprep.subr.mxu0 0.0
    %107 = vmatpush1.msra.mxu0 0.0
    %108 = vmatprep.subr.mxu0 0.0
    %109 = vmatpush1.msra.mxu0 0.0
    %110 = vmatprep.subr.mxu0 0.0
    %111 = vmatpush1.msra.mxu0 0.0
    %112 = vmatprep.subr.mxu0 0.0
    %113 = vmatpush1.msra.mxu0 0.0
    %114 = vmatprep.subr.mxu0 0.0
    %115 = vmatpush1.msra.mxu0 0.0
    %116 = vmatprep.subr.mxu0 0.0
    %117 = vmatpush1.msra.mxu0 0.0
    %118 = vmatprep.subr.mxu0 0.0
    %119 = vmatpush1.msra.mxu0 %v72
    %120 = vmatprep.subr.mxu0 0.0
    %121 = vmatpush1.msra.mxu0 %v71
    %122 = vmatprep.subr.mxu0 0.0
    %123 = vmatpush1.msra.mxu0 %v70
    %124 = vmatprep.subr.mxu0 0.0
    %125 = vmatpush1.msra.mxu0 %v69
    %126 = vmatprep.subr.mxu0 0.0
    %127 = vmatpush2.msra.mxu0 0.0
    %128 = vmatprep.subr.mxu0 0.0
    %129 = vmatpush2.msra.mxu0 0.0
    %130 = vmatprep.subr.mxu0 0.0
    %131 = vmatpush2.msra.mxu0 0.0
    %132 = vmatprep.subr.mxu0 0.0
    %133 = vmatpush2.msra.mxu0 0.0
    %134 = vmatprep.subr.mxu0 0.0
    %135 = vmatpush2.msra.mxu0 0.0
    %136 = vmatprep.subr.mxu0 0.0
    %137 = vmatpush2.msra.mxu0 0.0
    %138 = vmatprep.subr.mxu0 0.0
    %139 = vmatpush2.msra.mxu0 0.0
    %140 = vmatprep.subr.mxu0 0.0
    %141 = vmatpush2.msra.mxu0 0.0
    %142 = vmatprep.subr.mxu0 0.0
    %143 = vmatpush2.msra.mxu0 0.0
    %144 = vmatprep.subr.mxu0 0.0
    %145 = vmatpush2.msra.mxu0 0.0
    %146 = vmatprep.subr.mxu0 0.0
    %147 = vmatpush2.msra.mxu0 0.0
    %148 = vmatprep.subr.mxu0 0.0
    %149 = vmatpush2.msra.mxu0 0.0
    %150 = vmatprep.subr.mxu0 0.0
    %151 = vmatpush2.msra.mxu0 0.0
    %152 = vmatprep.subr.mxu0 0.0
    %153 = vmatpush2.msra.mxu0 0.0
    %154 = vmatprep.subr.mxu0 0.0
    %155 = vmatpush2.msra.mxu0 0.0
    %156 = vmatprep.subr.mxu0 0.0
    %157 = vmatpush2.msra.mxu0 0.0
    %158 = vmatprep.mubr.f32.mxu0 0.0
    %159 = vmatmul.mubr.f32.gmra.mxu0 %v89
    %v160 = vpop.f32.mrf.mxu0
    %v161 = vadd.f32 %v86, %v160
    %v162 = vpop.f32.mrf.mxu0
    %163 = vmatprep.mubr.f32.mxu0 0.0
    %164 = vmatmul.mubr.f32.gmra.mxu0 %v92
    %v165 = vpop.f32.mrf.mxu0
    %v166 = vadd.f32 %v86, %v165
    %v167 = vpop.f32.mrf.mxu0
    %168 = vdwg.mxu0
    %v169 = vmax.f32 %v161, 0.0
    %v170 = vmax.f32 %v166, 0.0
    %v171 = vlaneseq
    %v172 = vshrl.u32 %v171, 7
    %v173 = vsub.s32 0, %v172
    %v174 = vrot.slane %v82, %v173
    %vm175 = vcmask 523264
    %v177 = vsel %vm175, %v169, 0
    %v180 = vsel %vm175, %v170, 0
    %182 = vmatprep.subr.mxu0 0.0
    %183 = vmatpush1.msra.mxu0 0.0
    %184 = vmatprep.subr.mxu0 0.0
    %185 = vmatpush1.msra.mxu0 0.0
    %186 = vmatprep.subr.mxu0 0.0
    %187 = vmatpush1.msra.mxu0 0.0
    %188 = vmatprep.subr.mxu0 0.0
    %189 = vmatpush1.msra.mxu0 0.0
    %190 = vmatprep.subr.mxu0 0.0
    %191 = vmatpush1.msra.mxu0 0.0
    %192 = vmatprep.subr.mxu0 0.0
    %193 = vmatpush1.msra.mxu0 0.0
    %194 = vmatprep.subr.mxu0 0.0
    %195 = vmatpush1.msra.mxu0 0.0
    %196 = vmatprep.subr.mxu0 0.0
    %197 = vmatpush1.msra.mxu0 0.0
    %198 = vmatprep.subr.mxu0 0.0
    %199 = vmatpush1.msra.mxu0 %v81
    %200 = vmatprep.subr.mxu0 0.0
    %201 = vmatpush1.msra.mxu0 %v80
    %202 = vmatprep.subr.mxu0 0.0
    %203 = vmatpush1.msra.mxu0 %v79
    %204 = vmatprep.subr.mxu0 0.0
    %205 = vmatpush1.msra.mxu0 %v78
    %206 = vmatprep.subr.mxu0 0.0
    %207 = vmatpush1.msra.mxu0 %v77
    %208 = vmatprep.subr.mxu0 0.0
    %209 = vmatpush1.msra.mxu0 %v76
    %210 = vmatprep.subr.mxu0 0.0
    %211 = vmatpush1.msra.mxu0 %v75
    %212 = vmatprep.subr.mxu0 0.0
    %213 = vmatpush1.msra.mxu0 %v74
    %214 = vmatprep.subr.mxu0 0.0
    %215 = vmatpush2.msra.mxu0 0.0
    %216 = vmatprep.subr.mxu0 0.0
    %217 = vmatpush2.msra.mxu0 0.0
    %218 = vmatprep.subr.mxu0 0.0
    %219 = vmatpush2.msra.mxu0 0.0
    %220 = vmatprep.subr.mxu0 0.0
    %221 = vmatpush2.msra.mxu0 0.0
    %222 = vmatprep.subr.mxu0 0.0
    %223 = vmatpush2.msra.mxu0 0.0
    %224 = vmatprep.subr.mxu0 0.0
    %225 = vmatpush2.msra.mxu0 0.0
    %226 = vmatprep.subr.mxu0 0.0
    %227 = vmatpush2.msra.mxu0 0.0
    %228 = vmatprep.subr.mxu0 0.0
    %229 = vmatpush2.msra.mxu0 0.0
    %230 = vmatprep.subr.mxu0 0.0
    %231 = vmatpush2.msra.mxu0 0.0
    %232 = vmatprep.subr.mxu0 0.0
    %233 = vmatpush2.msra.mxu0 0.0
    %234 = vmatprep.subr.mxu0 0.0
    %235 = vmatpush2.msra.mxu0 0.0
    %236 = vmatprep.subr.mxu0 0.0
    %237 = vmatpush2.msra.mxu0 0.0
    %238 = vmatprep.subr.mxu0 0.0
    %239 = vmatpush2.msra.mxu0 0.0
    %240 = vmatprep.subr.mxu0 0.0
    %241 = vmatpush2.msra.mxu0 0.0
    %242 = vmatprep.subr.mxu0 0.0
    %243 = vmatpush2.msra.mxu0 0.0
    %244 = vmatprep.subr.mxu0 0.0
    %245 = vmatpush2.msra.mxu0 0.0
    %246 = vmatprep.mubr.f32.mxu0 0.0
    %247 = vmatmul.mubr.f32.gmra.mxu0 %v177
    %v248 = vpop.f32.mrf.mxu0
    %v249 = vadd.f32 %v174, %v248
    %v250 = vpop.f32.mrf.mxu0
    %251 = vmatprep.mubr.f32.mxu0 0.0
    %252 = vmatmul.mubr.f32.gmra.mxu0 %v180
    %v253 = vpop.f32.mrf.mxu0
    %v254 = vadd.f32 %v174, %v253
    %v255 = vpop.f32.mrf.mxu0
    %256 = vdwg.mxu0
    %v257 = vld [vmem:[%s6] sm:$0xff]
    %v258 = vld [vmem:[%s3] sm:$0xff]
    %v259 = vld [vmem:[%s3 + $0x8] sm:$0xff]
    %v260 = vld [vmem:[%s3 + $0x10] sm:$0xff]
    %v261 = vld [vmem:[%s3 + $0x18] sm:$0xff]
    %v262 = vld [vmem:[%s5] sm:$0xff]
    %v263 = vld [vmem:[%s5 + $0x8] sm:$0xff]
    %v264 = vld [vmem:[%s5 + $0x10] sm:$0xff]
    %v265 = vld [vmem:[%s5 + $0x18] sm:$0xff]
    %v266 = vld [vmem:[%s4] sm:$0xff]
    %v267 = vld [vmem:[%s4 + $0x8] sm:$0xff]
    %v268 = vld [vmem:[%s4 + $0x10] sm:$0xff]
    %v269 = vld [vmem:[%s4 + $0x18] sm:$0xff]
    %v270 = vld [vmem:[%s5 + $0x20] sm:$0xff]
    %v271 = vld [vmem:[%s5 + $0x28] sm:$0xff]
    %v272 = vld [vmem:[%s5 + $0x30] sm:$0xff]
    %v273 = vld [vmem:[%s5 + $0x38] sm:$0xff]
    %v274 = vld [vmem:[%s5 + $0x40] sm:$0xff]
    %v275 = vld [vmem:[%s5 + $0x48] sm:$0xff]
    %v276 = vld [vmem:[%s5 + $0x50] sm:$0xff]
    %v277 = vld [vmem:[%s5 + $0x58] sm:$0xff]
    %v278 = vld [vmem:[%s5 + $0x60] sm:$0xff]
    %v279 = vld [vmem:[%s5 + $0x68] sm:$0xff]
    %v280 = vld [vmem:[%s5 + $0x70] sm:$0xff]
    %v281 = vld [vmem:[%s5 + $0x78] sm:$0xff]
    %v282 = vld [vmem:[%s5 + $0x80] sm:$0xff]
    %v283 = vld [vmem:[%s5 + $0x88] sm:$0xff]
    %v284 = vld [vmem:[%s5 + $0x90] sm:$0xff]
    %v285 = vld [vmem:[%s5 + $0x98] sm:$0xff]
    %v286 = vlaneseq
    %v287 = vshrl.u32 %v286, 7
    %v288 = vsub.s32 0, %v287
    %v289 = vrot.slane %v257, %v288
    %290 = vmatprep.subr.mxu0 0.0
    %291 = vmatpush1.msra.mxu0 0.0
    %292 = vmatprep.subr.mxu0 0.0
    %293 = vmatpush1.msra.mxu0 0.0
    %294 = vmatprep.subr.mxu0 0.0
    %295 = vmatpush1.msra.mxu0 0.0
    %296 = vmatprep.subr.mxu0 0.0
    %297 = vmatpush1.msra.mxu0 0.0
    %298 = vmatprep.subr.mxu0 0.0
    %299 = vmatpush1.msra.mxu0 0.0
    %300 = vmatprep.subr.mxu0 0.0
    %301 = vmatpush1.msra.mxu0 0.0
    %302 = vmatprep.subr.mxu0 0.0
    %303 = vmatpush1.msra.mxu0 0.0
    %304 = vmatprep.subr.mxu0 0.0
    %305 = vmatpush1.msra.mxu0 0.0
    %306 = vmatprep.subr.mxu0 0.0
    %307 = vmatpush1.msra.mxu0 0.0
    %308 = vmatprep.subr.mxu0 0.0
    %309 = vmatpush1.msra.mxu0 0.0
    %310 = vmatprep.subr.mxu0 0.0
    %311 = vmatpush1.msra.mxu0 0.0
    %312 = vmatprep.subr.mxu0 0.0
    %313 = vmatpush1.msra.mxu0 0.0
    %314 = vmatprep.subr.mxu0 0.0
    %315 = vmatpush1.msra.mxu0 %v261
    %316 = vmatprep.subr.mxu0 0.0
    %317 = vmatpush1.msra.mxu0 %v260
    %318 = vmatprep.subr.mxu0 0.0
    %319 = vmatpush1.msra.mxu0 %v259
    %320 = vmatprep.subr.mxu0 0.0
    %321 = vmatpush1.msra.mxu0 %v258
    %322 = vmatprep.subr.mxu0 0.0
    %323 = vmatpush2.msra.mxu0 0.0
    %324 = vmatprep.subr.mxu0 0.0
    %325 = vmatpush2.msra.mxu0 0.0
    %326 = vmatprep.subr.mxu0 0.0
    %327 = vmatpush2.msra.mxu0 0.0
    %328 = vmatprep.subr.mxu0 0.0
    %329 = vmatpush2.msra.mxu0 0.0
    %330 = vmatprep.subr.mxu0 0.0
    %331 = vmatpush2.msra.mxu0 0.0
    %332 = vmatprep.subr.mxu0 0.0
    %333 = vmatpush2.msra.mxu0 0.0
    %334 = vmatprep.subr.mxu0 0.0
    %335 = vmatpush2.msra.mxu0 0.0
    %336 = vmatprep.subr.mxu0 0.0
    %337 = vmatpush2.msra.mxu0 0.0
    %338 = vmatprep.subr.mxu0 0.0
    %339 = vmatpush2.msra.mxu0 0.0
    %340 = vmatprep.subr.mxu0 0.0
    %341 = vmatpush2.msra.mxu0 0.0
    %342 = vmatprep.subr.mxu0 0.0
    %343 = vmatpush2.msra.mxu0 0.0
    %344 = vmatprep.subr.mxu0 0.0
    %345 = vmatpush2.msra.mxu0 0.0
    %346 = vmatprep.subr.mxu0 0.0
    %347 = vmatpush2.msra.mxu0 0.0
    %348 = vmatprep.subr.mxu0 0.0
    %349 = vmatpush2.msra.mxu0 0.0
    %350 = vmatprep.subr.mxu0 0.0
    %351 = vmatpush2.msra.mxu0 0.0
    %352 = vmatprep.subr.mxu0 0.0
    %353 = vmatpush2.msra.mxu0 0.0
    %354 = vmatprep.mubr.f32.mxu0 0.0
    %355 = vmatmul.mubr.f32.gmra.mxu0 %v89
    %v356 = vpop.f32.mrf.mxu0
    %v357 = vadd.f32 %v289, %v356
    %v358 = vpop.f32.mrf.mxu0
    %359 = vmatprep.mubr.f32.mxu0 0.0
    %360 = vmatmul.mubr.f32.gmra.mxu0 %v92
    %v361 = vpop.f32.mrf.mxu0
    %v362 = vadd.f32 %v289, %v361
    %v363 = vpop.f32.mrf.mxu0
    %364 = vdwg.mxu0
    %381 = vrot.lane.b32.xlu0 %v50, 32
    %v382 = vpop.permute.xlu0 %381
    %383 = vrot.lane.b32.xlu0 %v51, 32
    %v384 = vpop.permute.xlu0 %383
    %385 = vrot.lane.b32.xlu0 %v52, 32
    %v386 = vpop.permute.xlu0 %385
    %387 = vrot.lane.b32.xlu0 %v53, 32
    %v388 = vpop.permute.xlu0 %387
    %389 = vrot.lane.b32.xlu0 %v54, 32
    %v390 = vpop.permute.xlu0 %389
    %391 = vrot.lane.b32.xlu0 %v55, 32
    %v392 = vpop.permute.xlu0 %391
    %393 = vrot.lane.b32.xlu0 %v56, 32
    %v394 = vpop.permute.xlu0 %393
    %395 = vrot.lane.b32.xlu0 %v57, 32
    %v396 = vpop.permute.xlu0 %395
    %397 = vrot.lane.b32.xlu0 %v58, 32
    %v398 = vpop.permute.xlu0 %397
    %399 = vrot.lane.b32.xlu0 %v59, 32
    %v400 = vpop.permute.xlu0 %399
    %401 = vrot.lane.b32.xlu0 %v60, 32
    %v402 = vpop.permute.xlu0 %401
    %403 = vrot.lane.b32.xlu0 %v61, 32
    %v404 = vpop.permute.xlu0 %403
    %405 = vrot.lane.b32.xlu0 %v62, 32
    %v406 = vpop.permute.xlu0 %405
    %407 = vrot.lane.b32.xlu0 %v63, 32
    %v408 = vpop.permute.xlu0 %407
    %409 = vrot.lane.b32.xlu0 %v64, 32
    %v410 = vpop.permute.xlu0 %409
    %411 = vrot.lane.b32.xlu0 %v65, 32
    %v412 = vpop.permute.xlu0 %411
    %v429 = vmul.f32 %v357, %v382
    %v430 = vmul.f32 %v362, %v384
    %v431 = vmul.f32 %v357, %v386
    %v432 = vmul.f32 %v362, %v388
    %v433 = vmul.f32 %v357, %v390
    %v434 = vmul.f32 %v362, %v392
    %v435 = vmul.f32 %v357, %v394
    %v436 = vmul.f32 %v362, %v396
    %v437 = vmul.f32 %v357, %v398
    %v438 = vmul.f32 %v362, %v400
    %v439 = vmul.f32 %v357, %v402
    %v440 = vmul.f32 %v362, %v404
    %v441 = vmul.f32 %v357, %v406
    %v442 = vmul.f32 %v362, %v408
    %v443 = vmul.f32 %v357, %v410
    %v444 = vmul.f32 %v362, %v412
    %445 = vrot.lane.b32.xlu0 %v50, 64
    %v446 = vpop.permute.xlu0 %445
    %447 = vrot.lane.b32.xlu0 %v51, 64
    %v448 = vpop.permute.xlu0 %447
    %449 = vrot.lane.b32.xlu0 %v52, 64
    %v450 = vpop.permute.xlu0 %449
    %451 = vrot.lane.b32.xlu0 %v53, 64
    %v452 = vpop.permute.xlu0 %451
    %453 = vrot.lane.b32.xlu0 %v54, 64
    %v454 = vpop.permute.xlu0 %453
    %455 = vrot.lane.b32.xlu0 %v55, 64
    %v456 = vpop.permute.xlu0 %455
    %457 = vrot.lane.b32.xlu0 %v56, 64
    %v458 = vpop.permute.xlu0 %457
    %459 = vrot.lane.b32.xlu0 %v57, 64
    %v460 = vpop.permute.xlu0 %459
    %461 = vrot.lane.b32.xlu0 %v58, 64
    %v462 = vpop.permute.xlu0 %461
    %463 = vrot.lane.b32.xlu0 %v59, 64
    %v464 = vpop.permute.xlu0 %463
    %465 = vrot.lane.b32.xlu0 %v60, 64
    %v466 = vpop.permute.xlu0 %465
    %467 = vrot.lane.b32.xlu0 %v61, 64
    %v468 = vpop.permute.xlu0 %467
    %469 = vrot.lane.b32.xlu0 %v62, 64
    %v470 = vpop.permute.xlu0 %469
    %471 = vrot.lane.b32.xlu0 %v63, 64
    %v472 = vpop.permute.xlu0 %471
    %473 = vrot.lane.b32.xlu0 %v64, 64
    %v474 = vpop.permute.xlu0 %473
    %475 = vrot.lane.b32.xlu0 %v65, 64
    %v476 = vpop.permute.xlu0 %475
    %v493 = vmul.f32 %v357, %v446
    %v494 = vmul.f32 %v362, %v448
    %v495 = vmul.f32 %v357, %v450
    %v496 = vmul.f32 %v362, %v452
    %v497 = vmul.f32 %v357, %v454
    %v498 = vmul.f32 %v362, %v456
    %v499 = vmul.f32 %v357, %v458
    %v500 = vmul.f32 %v362, %v460
    %v501 = vmul.f32 %v357, %v462
    %v502 = vmul.f32 %v362, %v464
    %v503 = vmul.f32 %v357, %v466
    %v504 = vmul.f32 %v362, %v468
    %v505 = vmul.f32 %v357, %v470
    %v506 = vmul.f32 %v362, %v472
    %v507 = vmul.f32 %v357, %v474
    %v508 = vmul.f32 %v362, %v476
    %525 = vrot.lane.b32.xlu0 %v429, 96
    %v526 = vpop.permute.xlu0 %525
    %527 = vrot.lane.b32.xlu0 %v430, 96
    %v528 = vpop.permute.xlu0 %527
    %529 = vrot.lane.b32.xlu0 %v431, 96
    %v530 = vpop.permute.xlu0 %529
    %531 = vrot.lane.b32.xlu0 %v432, 96
    %v532 = vpop.permute.xlu0 %531
    %533 = vrot.lane.b32.xlu0 %v433, 96
    %v534 = vpop.permute.xlu0 %533
    %535 = vrot.lane.b32.xlu0 %v434, 96
    %v536 = vpop.permute.xlu0 %535
    %537 = vrot.lane.b32.xlu0 %v435, 96
    %v538 = vpop.permute.xlu0 %537
    %539 = vrot.lane.b32.xlu0 %v436, 96
    %v540 = vpop.permute.xlu0 %539
    %541 = vrot.lane.b32.xlu0 %v437, 96
    %v542 = vpop.permute.xlu0 %541
    %543 = vrot.lane.b32.xlu0 %v438, 96
    %v544 = vpop.permute.xlu0 %543
    %545 = vrot.lane.b32.xlu0 %v439, 96
    %v546 = vpop.permute.xlu0 %545
    %547 = vrot.lane.b32.xlu0 %v440, 96
    %v548 = vpop.permute.xlu0 %547
    %549 = vrot.lane.b32.xlu0 %v441, 96
    %v550 = vpop.permute.xlu0 %549
    %551 = vrot.lane.b32.xlu0 %v442, 96
    %v552 = vpop.permute.xlu0 %551
    %553 = vrot.lane.b32.xlu0 %v443, 96
    %v554 = vpop.permute.xlu0 %553
    %555 = vrot.lane.b32.xlu0 %v444, 96
    %v556 = vpop.permute.xlu0 %555
    %v558 = vsel %vm87, %v357, 0
    %v561 = vsel %vm87, %v362, 0
    %v563 = vsel %vm87, %v526, 0
    %v565 = vsel %vm87, %v528, 0
    %v567 = vsel %vm87, %v530, 0
    %v569 = vsel %vm87, %v532, 0
    %v571 = vsel %vm87, %v534, 0
    %v573 = vsel %vm87, %v536, 0
    %v575 = vsel %vm87, %v538, 0
    %v577 = vsel %vm87, %v540, 0
    %v579 = vsel %vm87, %v542, 0
    %v581 = vsel %vm87, %v544, 0
    %v583 = vsel %vm87, %v546, 0
    %v585 = vsel %vm87, %v548, 0
    %v587 = vsel %vm87, %v550, 0
    %v589 = vsel %vm87, %v552, 0
    %v591 = vsel %vm87, %v554, 0
    %v593 = vsel %vm87, %v556, 0
    %595 = vmatprep.subr.mxu0 0.0
    %596 = vmatpush1.xpose.msra.mxu0 %v593
    %597 = vmatprep.subr.mxu0 0.0
    %598 = vmatpush1.xpose.msra.mxu0 %v591
    %599 = vmatprep.subr.mxu0 0.0
    %600 = vmatpush1.xpose.msra.mxu0 %v589
    %601 = vmatprep.subr.mxu0 0.0
    %602 = vmatpush1.xpose.msra.mxu0 %v587
    %603 = vmatprep.subr.mxu0 0.0
    %604 = vmatpush1.xpose.msra.mxu0 %v585
    %605 = vmatprep.subr.mxu0 0.0
    %606 = vmatpush1.xpose.msra.mxu0 %v583
    %607 = vmatprep.subr.mxu0 0.0
    %608 = vmatpush1.xpose.msra.mxu0 %v581
    %609 = vmatprep.subr.mxu0 0.0
    %610 = vmatpush1.xpose.msra.mxu0 %v579
    %611 = vmatprep.subr.mxu0 0.0
    %612 = vmatpush1.xpose.msra.mxu0 %v577
    %613 = vmatprep.subr.mxu0 0.0
    %614 = vmatpush1.xpose.msra.mxu0 %v575
    %615 = vmatprep.subr.mxu0 0.0
    %616 = vmatpush1.xpose.msra.mxu0 %v573
    %617 = vmatprep.subr.mxu0 0.0
    %618 = vmatpush1.xpose.msra.mxu0 %v571
    %619 = vmatprep.subr.mxu0 0.0
    %620 = vmatpush1.xpose.msra.mxu0 %v569
    %621 = vmatprep.subr.mxu0 0.0
    %622 = vmatpush1.xpose.msra.mxu0 %v567
    %623 = vmatprep.subr.mxu0 0.0
    %624 = vmatpush1.xpose.msra.mxu0 %v565
    %625 = vmatprep.subr.mxu0 0.0
    %626 = vmatpush1.xpose.msra.mxu0 %v563
    %627 = vmatprep.subr.mxu0 0.0
    %628 = vmatpush2.xpose.msra.mxu0 0.0
    %629 = vmatprep.subr.mxu0 0.0
    %630 = vmatpush2.xpose.msra.mxu0 0.0
    %631 = vmatprep.subr.mxu0 0.0
    %632 = vmatpush2.xpose.msra.mxu0 0.0
    %633 = vmatprep.subr.mxu0 0.0
    %634 = vmatpush2.xpose.msra.mxu0 0.0
    %635 = vmatprep.subr.mxu0 0.0
    %636 = vmatpush2.xpose.msra.mxu0 0.0
    %637 = vmatprep.subr.mxu0 0.0
    %638 = vmatpush2.xpose.msra.mxu0 0.0
    %639 = vmatprep.subr.mxu0 0.0
    %640 = vmatpush2.xpose.msra.mxu0 0.0
    %641 = vmatprep.subr.mxu0 0.0
    %642 = vmatpush2.xpose.msra.mxu0 0.0
    %643 = vmatprep.subr.mxu0 0.0
    %644 = vmatpush2.xpose.msra.mxu0 0.0
    %645 = vmatprep.subr.mxu0 0.0
    %646 = vmatpush2.xpose.msra.mxu0 0.0
    %647 = vmatprep.subr.mxu0 0.0
    %648 = vmatpush2.xpose.msra.mxu0 0.0
    %649 = vmatprep.subr.mxu0 0.0
    %650 = vmatpush2.xpose.msra.mxu0 0.0
    %651 = vmatprep.subr.mxu0 0.0
    %652 = vmatpush2.xpose.msra.mxu0 0.0
    %653 = vmatprep.subr.mxu0 0.0
    %654 = vmatpush2.xpose.msra.mxu0 0.0
    %655 = vmatprep.subr.mxu0 0.0
    %656 = vmatpush2.xpose.msra.mxu0 0.0
    %657 = vmatprep.subr.mxu0 0.0
    %658 = vmatpush2.xpose.msra.mxu0 0.0
    %659 = vmatprep.mubr.f32.mxu0 0.0
    %660 = vmatmul.mubr.f32.gmra.mxu0 %v558
    %v661 = vpop.f32.mrf.mxu0
    %v662 = vadd.f32 %v67, %v661
    %v663 = vpop.f32.mrf.mxu0
    %664 = vmatprep.mubr.f32.mxu0 0.0
    %665 = vmatmul.mubr.f32.gmra.mxu0 %v561
    %v666 = vpop.f32.mrf.mxu0
    %v667 = vadd.f32 %v68, %v666
    %v668 = vpop.f32.mrf.mxu0
    %669 = vdwg.mxu0
    %670 = vmax.xlane.f32.xlu0 %v662
    %v671 = vpop.xlane.xlu0 %670
    %672 = vmax.xlane.f32.xlu0 %v667
    %v673 = vpop.xlane.xlu0 %672
    %v674 = vsub.f32 %v662, %v671
    %v675 = vsub.f32 %v667, %v673
    %v676 = vmul.f32 %v674, 1.442695
    %v677 = vpow.pop %v676
    %v678 = vmul.f32 %v675, 1.442695
    %v679 = vpow.pop %v678
    %680 = vmatprep.subr.mxu0 0.0
    %681 = vmatpush1.msra.mxu0 %v48
    %682 = vmatprep.subr.mxu0 0.0
    %683 = vmatpush1.msra.mxu0 %v47
    %684 = vmatprep.subr.mxu0 0.0
    %685 = vmatpush1.msra.mxu0 %v46
    %686 = vmatprep.subr.mxu0 0.0
    %687 = vmatpush1.msra.mxu0 %v45
    %688 = vmatprep.subr.mxu0 0.0
    %689 = vmatpush1.msra.mxu0 %v44
    %690 = vmatprep.subr.mxu0 0.0
    %691 = vmatpush1.msra.mxu0 %v43
    %692 = vmatprep.subr.mxu0 0.0
    %693 = vmatpush1.msra.mxu0 %v42
    %694 = vmatprep.subr.mxu0 0.0
    %695 = vmatpush1.msra.mxu0 %v41
    %696 = vmatprep.subr.mxu0 0.0
    %697 = vmatpush1.msra.mxu0 %v40
    %698 = vmatprep.subr.mxu0 0.0
    %699 = vmatpush1.msra.mxu0 %v39
    %700 = vmatprep.subr.mxu0 0.0
    %701 = vmatpush1.msra.mxu0 %v38
    %702 = vmatprep.subr.mxu0 0.0
    %703 = vmatpush1.msra.mxu0 %v37
    %704 = vmatprep.subr.mxu0 0.0
    %705 = vmatpush1.msra.mxu0 %v36
    %706 = vmatprep.subr.mxu0 0.0
    %707 = vmatpush1.msra.mxu0 %v35
    %708 = vmatprep.subr.mxu0 0.0
    %709 = vmatpush1.msra.mxu0 %v34
    %710 = vmatprep.subr.mxu0 0.0
    %711 = vmatpush1.msra.mxu0 %v33
    %712 = vmatprep.subr.mxu0 0.0
    %713 = vmatpush2.msra.mxu0 0.0
    %714 = vmatprep.subr.mxu0 0.0
    %715 = vmatpush2.msra.mxu0 0.0
    %716 = vmatprep.subr.mxu0 0.0
    %717 = vmatpush2.msra.mxu0 0.0
    %718 = vmatprep.subr.mxu0 0.0
    %719 = vmatpush2.msra.mxu0 0.0
    %720 = vmatprep.subr.mxu0 0.0
    %721 = vmatpush2.msra.mxu0 0.0
    %722 = vmatprep.subr.mxu0 0.0
    %723 = vmatpush2.msra.mxu0 0.0
    %724 = vmatprep.subr.mxu0 0.0
    %725 = vmatpush2.msra.mxu0 0.0
    %726 = vmatprep.subr.mxu0 0.0
    %727 = vmatpush2.msra.mxu0 0.0
    %728 = vmatprep.subr.mxu0 0.0
    %729 = vmatpush2.msra.mxu0 0.0
    %730 = vmatprep.subr.mxu0 0.0
    %731 = vmatpush2.msra.mxu0 0.0
    %732 = vmatprep.subr.mxu0 0.0
    %733 = vmatpush2.msra.mxu0 0.0
    %734 = vmatprep.subr.mxu0 0.0
    %735 = vmatpush2.msra.mxu0 0.0
    %736 = vmatprep.subr.mxu0 0.0
    %737 = vmatpush2.msra.mxu0 0.0
    %738 = vmatprep.subr.mxu0 0.0
    %739 = vmatpush2.msra.mxu0 0.0
    %740 = vmatprep.subr.mxu0 0.0
    %741 = vmatpush2.msra.mxu0 0.0
    %742 = vmatprep.subr.mxu0 0.0
    %743 = vmatpush2.msra.mxu0 0.0
    %744 = vmatprep.mubr.f32.mxu0 0.0
    %745 = vmatmul.mubr.f32.gmra.mxu0 %v677
    %v746 = vpop.f32.mrf.mxu0
    %v747 = vadd.f32 0.0, %v746
    %v748 = vpop.f32.mrf.mxu0
    %749 = vmatprep.mubr.f32.mxu0 0.0
    %750 = vmatmul.mubr.f32.gmra.mxu0 %v679
    %v751 = vpop.f32.mrf.mxu0
    %v752 = vadd.f32 0.0, %v751
    %v753 = vpop.f32.mrf.mxu0
    %754 = vdwg.mxu0
    %v755 = vrcp.pop %v747
    %v756 = vrcp.pop %v752
    %v757 = vmul.f32 %v677, %v755
    %v758 = vmul.f32 %v679, %v756
    %775 = vrot.lane.b32.xlu0 %v493, 64
    %v776 = vpop.permute.xlu0 %775
    %777 = vrot.lane.b32.xlu0 %v494, 64
    %v778 = vpop.permute.xlu0 %777
    %779 = vrot.lane.b32.xlu0 %v495, 64
    %v780 = vpop.permute.xlu0 %779
    %781 = vrot.lane.b32.xlu0 %v496, 64
    %v782 = vpop.permute.xlu0 %781
    %783 = vrot.lane.b32.xlu0 %v497, 64
    %v784 = vpop.permute.xlu0 %783
    %785 = vrot.lane.b32.xlu0 %v498, 64
    %v786 = vpop.permute.xlu0 %785
    %787 = vrot.lane.b32.xlu0 %v499, 64
    %v788 = vpop.permute.xlu0 %787
    %789 = vrot.lane.b32.xlu0 %v500, 64
    %v790 = vpop.permute.xlu0 %789
    %791 = vrot.lane.b32.xlu0 %v501, 64
    %v792 = vpop.permute.xlu0 %791
    %793 = vrot.lane.b32.xlu0 %v502, 64
    %v794 = vpop.permute.xlu0 %793
    %795 = vrot.lane.b32.xlu0 %v503, 64
    %v796 = vpop.permute.xlu0 %795
    %797 = vrot.lane.b32.xlu0 %v504, 64
    %v798 = vpop.permute.xlu0 %797
    %799 = vrot.lane.b32.xlu0 %v505, 64
    %v800 = vpop.permute.xlu0 %799
    %801 = vrot.lane.b32.xlu0 %v506, 64
    %v802 = vpop.permute.xlu0 %801
    %803 = vrot.lane.b32.xlu0 %v507, 64
    %v804 = vpop.permute.xlu0 %803
    %805 = vrot.lane.b32.xlu0 %v508, 64
    %v806 = vpop.permute.xlu0 %805
    %823 = vmatprep.subr.mxu0 0.0
    %824 = vmatpush1.msra.mxu0 %v806
    %825 = vmatprep.subr.mxu0 0.0
    %826 = vmatpush1.msra.mxu0 %v804
    %827 = vmatprep.subr.mxu0 0.0
    %828 = vmatpush1.msra.mxu0 %v802
    %829 = vmatprep.subr.mxu0 0.0
    %830 = vmatpush1.msra.mxu0 %v800
    %831 = vmatprep.subr.mxu0 0.0
    %832 = vmatpush1.msra.mxu0 %v798
    %833 = vmatprep.subr.mxu0 0.0
    %834 = vmatpush1.msra.mxu0 %v796
    %835 = vmatprep.subr.mxu0 0.0
    %836 = vmatpush1.msra.mxu0 %v794
    %837 = vmatprep.subr.mxu0 0.0
    %838 = vmatpush1.msra.mxu0 %v792
    %839 = vmatprep.subr.mxu0 0.0
    %840 = vmatpush1.msra.mxu0 %v790
    %841 = vmatprep.subr.mxu0 0.0
    %842 = vmatpush1.msra.mxu0 %v788
    %843 = vmatprep.subr.mxu0 0.0
    %844 = vmatpush1.msra.mxu0 %v786
    %845 = vmatprep.subr.mxu0 0.0
    %846 = vmatpush1.msra.mxu0 %v784
    %847 = vmatprep.subr.mxu0 0.0
    %848 = vmatpush1.msra.mxu0 %v782
    %849 = vmatprep.subr.mxu0 0.0
    %850 = vmatpush1.msra.mxu0 %v780
    %851 = vmatprep.subr.mxu0 0.0
    %852 = vmatpush1.msra.mxu0 %v778
    %853 = vmatprep.subr.mxu0 0.0
    %854 = vmatpush1.msra.mxu0 %v776
    %855 = vmatprep.subr.mxu0 0.0
    %856 = vmatpush2.msra.mxu0 0.0
    %857 = vmatprep.subr.mxu0 0.0
    %858 = vmatpush2.msra.mxu0 0.0
    %859 = vmatprep.subr.mxu0 0.0
    %860 = vmatpush2.msra.mxu0 0.0
    %861 = vmatprep.subr.mxu0 0.0
    %862 = vmatpush2.msra.mxu0 0.0
    %863 = vmatprep.subr.mxu0 0.0
    %864 = vmatpush2.msra.mxu0 0.0
    %865 = vmatprep.subr.mxu0 0.0
    %866 = vmatpush2.msra.mxu0 0.0
    %867 = vmatprep.subr.mxu0 0.0
    %868 = vmatpush2.msra.mxu0 0.0
    %869 = vmatprep.subr.mxu0 0.0
    %870 = vmatpush2.msra.mxu0 0.0
    %871 = vmatprep.subr.mxu0 0.0
    %872 = vmatpush2.msra.mxu0 0.0
    %873 = vmatprep.subr.mxu0 0.0
    %874 = vmatpush2.msra.mxu0 0.0
    %875 = vmatprep.subr.mxu0 0.0
    %876 = vmatpush2.msra.mxu0 0.0
    %877 = vmatprep.subr.mxu0 0.0
    %878 = vmatpush2.msra.mxu0 0.0
    %879 = vmatprep.subr.mxu0 0.0
    %880 = vmatpush2.msra.mxu0 0.0
    %881 = vmatprep.subr.mxu0 0.0
    %882 = vmatpush2.msra.mxu0 0.0
    %883 = vmatprep.subr.mxu0 0.0
    %884 = vmatpush2.msra.mxu0 0.0
    %885 = vmatprep.subr.mxu0 0.0
    %886 = vmatpush2.msra.mxu0 0.0
    %887 = vmatprep.mubr.f32.mxu0 0.0
    %888 = vmatmul.mubr.f32.gmra.mxu0 %v757
    %v889 = vpop.f32.mrf.mxu0
    %v890 = vadd.f32 0.0, %v889
    %v891 = vpop.f32.mrf.mxu0
    %892 = vmatprep.mubr.f32.mxu0 0.0
    %893 = vmatmul.mubr.f32.gmra.mxu0 %v758
    %v894 = vpop.f32.mrf.mxu0
    %v895 = vadd.f32 0.0, %v894
    %v896 = vpop.f32.mrf.mxu0
    %897 = vdwg.mxu0
    %v898 = vlaneseq
    %v899 = vshrl.u32 %v898, 7
    %v900 = vsub.s32 1, %v899
    %v901 = vrot.slane %v257, %v900
    %v903 = vsel %vm87, %v890, 0
    %v906 = vsel %vm87, %v895, 0
    %908 = vmatprep.subr.mxu0 0.0
    %909 = vmatpush1.msra.mxu0 0.0
    %910 = vmatprep.subr.mxu0 0.0
    %911 = vmatpush1.msra.mxu0 0.0
    %912 = vmatprep.subr.mxu0 0.0
    %913 = vmatpush1.msra.mxu0 0.0
    %914 = vmatprep.subr.mxu0 0.0
    %915 = vmatpush1.msra.mxu0 0.0
    %916 = vmatprep.subr.mxu0 0.0
    %917 = vmatpush1.msra.mxu0 0.0
    %918 = vmatprep.subr.mxu0 0.0
    %919 = vmatpush1.msra.mxu0 0.0
    %920 = vmatprep.subr.mxu0 0.0
    %921 = vmatpush1.msra.mxu0 0.0
    %922 = vmatprep.subr.mxu0 0.0
    %923 = vmatpush1.msra.mxu0 0.0
    %924 = vmatprep.subr.mxu0 0.0
    %925 = vmatpush1.msra.mxu0 0.0
    %926 = vmatprep.subr.mxu0 0.0
    %927 = vmatpush1.msra.mxu0 0.0
    %928 = vmatprep.subr.mxu0 0.0
    %929 = vmatpush1.msra.mxu0 0.0
    %930 = vmatprep.subr.mxu0 0.0
    %931 = vmatpush1.msra.mxu0 0.0
    %932 = vmatprep.subr.mxu0 0.0
    %933 = vmatpush1.msra.mxu0 %v265
    %934 = vmatprep.subr.mxu0 0.0
    %935 = vmatpush1.msra.mxu0 %v264
    %936 = vmatprep.subr.mxu0 0.0
    %937 = vmatpush1.msra.mxu0 %v263
    %938 = vmatprep.subr.mxu0 0.0
    %939 = vmatpush1.msra.mxu0 %v262
    %940 = vmatprep.subr.mxu0 0.0
    %941 = vmatpush2.msra.mxu0 0.0
    %942 = vmatprep.subr.mxu0 0.0
    %943 = vmatpush2.msra.mxu0 0.0
    %944 = vmatprep.subr.mxu0 0.0
    %945 = vmatpush2.msra.mxu0 0.0
    %946 = vmatprep.subr.mxu0 0.0
    %947 = vmatpush2.msra.mxu0 0.0
    %948 = vmatprep.subr.mxu0 0.0
    %949 = vmatpush2.msra.mxu0 0.0
    %950 = vmatprep.subr.mxu0 0.0
    %951 = vmatpush2.msra.mxu0 0.0
    %952 = vmatprep.subr.mxu0 0.0
    %953 = vmatpush2.msra.mxu0 0.0
    %954 = vmatprep.subr.mxu0 0.0
    %955 = vmatpush2.msra.mxu0 0.0
    %956 = vmatprep.subr.mxu0 0.0
    %957 = vmatpush2.msra.mxu0 0.0
    %958 = vmatprep.subr.mxu0 0.0
    %959 = vmatpush2.msra.mxu0 0.0
    %960 = vmatprep.subr.mxu0 0.0
    %961 = vmatpush2.msra.mxu0 0.0
    %962 = vmatprep.subr.mxu0 0.0
    %963 = vmatpush2.msra.mxu0 0.0
    %964 = vmatprep.subr.mxu0 0.0
    %965 = vmatpush2.msra.mxu0 0.0
    %966 = vmatprep.subr.mxu0 0.0
    %967 = vmatpush2.msra.mxu0 0.0
    %968 = vmatprep.subr.mxu0 0.0
    %969 = vmatpush2.msra.mxu0 0.0
    %970 = vmatprep.subr.mxu0 0.0
    %971 = vmatpush2.msra.mxu0 0.0
    %972 = vmatprep.mubr.f32.mxu0 0.0
    %973 = vmatmul.mubr.f32.gmra.mxu0 %v903
    %v974 = vpop.f32.mrf.mxu0
    %v975 = vadd.f32 %v901, %v974
    %v976 = vpop.f32.mrf.mxu0
    %977 = vmatprep.mubr.f32.mxu0 0.0
    %978 = vmatmul.mubr.f32.gmra.mxu0 %v906
    %v979 = vpop.f32.mrf.mxu0
    %v980 = vadd.f32 %v901, %v979
    %v981 = vpop.f32.mrf.mxu0
    %982 = vdwg.mxu0
    %v983 = vadd.f32 %v31, %v975
    %v984 = vadd.f32 %v32, %v980
    %v985 = vsel %vm87, %v983, 0.0
    %986 = vadd.xlane.f32.xlu0 %v985
    %v987 = vpop.xlane.xlu0 %986
    %v988 = vsel %vm87, %v984, 0.0
    %989 = vadd.xlane.f32.xlu0 %v988
    %v990 = vpop.xlane.xlu0 %989
    %v991 = vrcp.pop 32.0
    %v992 = vmul.f32 %v987, %v991
    %v993 = vmul.f32 %v990, %v991
    %v994 = vmul.f32 %v983, %v983
    %v995 = vmul.f32 %v984, %v984
    %v996 = vsel %vm87, %v994, 0.0
    %997 = vadd.xlane.f32.xlu0 %v996
    %v998 = vpop.xlane.xlu0 %997
    %v999 = vsel %vm87, %v995, 0.0
    %1000 = vadd.xlane.f32.xlu0 %v999
    %v1001 = vpop.xlane.xlu0 %1000
    %v1002 = vmul.f32 %v998, %v991
    %v1003 = vmul.f32 %v1001, %v991
    %v1004 = vmul.f32 %v992, %v992
    %v1005 = vmul.f32 %v993, %v993
    %v1006 = vsub.f32 %v1002, %v1004
    %v1007 = vsub.f32 %v1003, %v1005
    %v1008 = vsub.f32 %v983, %v992
    %v1009 = vsub.f32 %v984, %v993
    %v1010 = vadd.f32 %v1006, 1e-05
    %v1011 = vadd.f32 %v1007, 1e-05
    %v1012 = vrsqrt.pop %v1010
    %v1013 = vrsqrt.pop %v1011
    %v1014 = vmul.f32 %v1008, %v1012
    %v1015 = vmul.f32 %v1009, %v1013
    %v1016 = vlaneseq
    %v1017 = vshrl.u32 %v1016, 7
    %v1018 = vsub.s32 2, %v1017
    %v1019 = vrot.slane %v257, %v1018
    %v1020 = vmul.f32 %v1014, %v1019
    %v1021 = vmul.f32 %v1015, %v1019
    %v1022 = vlaneseq
    %v1023 = vshrl.u32 %v1022, 7
    %v1024 = vsub.s32 3, %v1023
    %v1025 = vrot.slane %v257, %v1024
    %v1026 = vadd.f32 %v1020, %v1025
    %v1027 = vadd.f32 %v1021, %v1025
    %v1028 = vlaneseq
    %v1029 = vshrl.u32 %v1028, 7
    %v1030 = vsub.s32 4, %v1029
    %v1031 = vrot.slane %v257, %v1030
    %v1033 = vsel %vm87, %v1026, 0
    %v1036 = vsel %vm87, %v1027, 0
    %1038 = vmatprep.subr.mxu0 0.0
    %1039 = vmatpush1.msra.mxu0 0.0
    %1040 = vmatprep.subr.mxu0 0.0
    %1041 = vmatpush1.msra.mxu0 0.0
    %1042 = vmatprep.subr.mxu0 0.0
    %1043 = vmatpush1.msra.mxu0 0.0
    %1044 = vmatprep.subr.mxu0 0.0
    %1045 = vmatpush1.msra.mxu0 0.0
    %1046 = vmatprep.subr.mxu0 0.0
    %1047 = vmatpush1.msra.mxu0 0.0
    %1048 = vmatprep.subr.mxu0 0.0
    %1049 = vmatpush1.msra.mxu0 0.0
    %1050 = vmatprep.subr.mxu0 0.0
    %1051 = vmatpush1.msra.mxu0 0.0
    %1052 = vmatprep.subr.mxu0 0.0
    %1053 = vmatpush1.msra.mxu0 0.0
    %1054 = vmatprep.subr.mxu0 0.0
    %1055 = vmatpush1.msra.mxu0 0.0
    %1056 = vmatprep.subr.mxu0 0.0
    %1057 = vmatpush1.msra.mxu0 0.0
    %1058 = vmatprep.subr.mxu0 0.0
    %1059 = vmatpush1.msra.mxu0 0.0
    %1060 = vmatprep.subr.mxu0 0.0
    %1061 = vmatpush1.msra.mxu0 0.0
    %1062 = vmatprep.subr.mxu0 0.0
    %1063 = vmatpush1.msra.mxu0 %v269
    %1064 = vmatprep.subr.mxu0 0.0
    %1065 = vmatpush1.msra.mxu0 %v268
    %1066 = vmatprep.subr.mxu0 0.0
    %1067 = vmatpush1.msra.mxu0 %v267
    %1068 = vmatprep.subr.mxu0 0.0
    %1069 = vmatpush1.msra.mxu0 %v266
    %1070 = vmatprep.subr.mxu0 0.0
    %1071 = vmatpush2.msra.mxu0 0.0
    %1072 = vmatprep.subr.mxu0 0.0
    %1073 = vmatpush2.msra.mxu0 0.0
    %1074 = vmatprep.subr.mxu0 0.0
    %1075 = vmatpush2.msra.mxu0 0.0
    %1076 = vmatprep.subr.mxu0 0.0
    %1077 = vmatpush2.msra.mxu0 0.0
    %1078 = vmatprep.subr.mxu0 0.0
    %1079 = vmatpush2.msra.mxu0 0.0
    %1080 = vmatprep.subr.mxu0 0.0
    %1081 = vmatpush2.msra.mxu0 0.0
    %1082 = vmatprep.subr.mxu0 0.0
    %1083 = vmatpush2.msra.mxu0 0.0
    %1084 = vmatprep.subr.mxu0 0.0
    %1085 = vmatpush2.msra.mxu0 0.0
    %1086 = vmatprep.subr.mxu0 0.0
    %1087 = vmatpush2.msra.mxu0 0.0
    %1088 = vmatprep.subr.mxu0 0.0
    %1089 = vmatpush2.msra.mxu0 0.0
    %1090 = vmatprep.subr.mxu0 0.0
    %1091 = vmatpush2.msra.mxu0 0.0
    %1092 = vmatprep.subr.mxu0 0.0
    %1093 = vmatpush2.msra.mxu0 0.0
    %1094 = vmatprep.subr.mxu0 0.0
    %1095 = vmatpush2.msra.mxu0 0.0
    %1096 = vmatprep.subr.mxu0 0.0
    %1097 = vmatpush2.msra.mxu0 0.0
    %1098 = vmatprep.subr.mxu0 0.0
    %1099 = vmatpush2.msra.mxu0 0.0
    %1100 = vmatprep.subr.mxu0 0.0
    %1101 = vmatpush2.msra.mxu0 0.0
    %1102 = vmatprep.mubr.f32.mxu0 0.0
    %1103 = vmatmul.mubr.f32.gmra.mxu0 %v1033
    %v1104 = vpop.f32.mrf.mxu0
    %v1105 = vadd.f32 %v1031, %v1104
    %v1106 = vpop.f32.mrf.mxu0
    %1107 = vmatprep.mubr.f32.mxu0 0.0
    %1108 = vmatmul.mubr.f32.gmra.mxu0 %v1036
    %v1109 = vpop.f32.mrf.mxu0
    %v1110 = vadd.f32 %v1031, %v1109
    %v1111 = vpop.f32.mrf.mxu0
    %1112 = vdwg.mxu0
    %v1113 = vmax.f32 %v1105, 0.0
    %v1114 = vmax.f32 %v1110, 0.0
    %v1115 = vlaneseq
    %v1116 = vshrl.u32 %v1115, 7
    %v1117 = vsub.s32 5, %v1116
    %v1118 = vrot.slane %v257, %v1117
    %1119 = vmatprep.subr.mxu0 0.0
    %1120 = vmatpush1.msra.mxu0 %v285
    %1121 = vmatprep.subr.mxu0 0.0
    %1122 = vmatpush1.msra.mxu0 %v284
    %1123 = vmatprep.subr.mxu0 0.0
    %1124 = vmatpush1.msra.mxu0 %v283
    %1125 = vmatprep.subr.mxu0 0.0
    %1126 = vmatpush1.msra.mxu0 %v282
    %1127 = vmatprep.subr.mxu0 0.0
    %1128 = vmatpush1.msra.mxu0 %v281
    %1129 = vmatprep.subr.mxu0 0.0
    %1130 = vmatpush1.msra.mxu0 %v280
    %1131 = vmatprep.subr.mxu0 0.0
    %1132 = vmatpush1.msra.mxu0 %v279
    %1133 = vmatprep.subr.mxu0 0.0
    %1134 = vmatpush1.msra.mxu0 %v278
    %1135 = vmatprep.subr.mxu0 0.0
    %1136 = vmatpush1.msra.mxu0 %v277
    %1137 = vmatprep.subr.mxu0 0.0
    %1138 = vmatpush1.msra.mxu0 %v276
    %1139 = vmatprep.subr.mxu0 0.0
    %1140 = vmatpush1.msra.mxu0 %v275
    %1141 = vmatprep.subr.mxu0 0.0
    %1142 = vmatpush1.msra.mxu0 %v274
    %1143 = vmatprep.subr.mxu0 0.0
    %1144 = vmatpush1.msra.mxu0 %v273
    %1145 = vmatprep.subr.mxu0 0.0
    %1146 = vmatpush1.msra.mxu0 %v272
    %1147 = vmatprep.subr.mxu0 0.0
    %1148 = vmatpush1.msra.mxu0 %v271
    %1149 = vmatprep.subr.mxu0 0.0
    %1150 = vmatpush1.msra.mxu0 %v270
    %1151 = vmatprep.subr.mxu0 0.0
    %1152 = vmatpush2.msra.mxu0 0.0
    %1153 = vmatprep.subr.mxu0 0.0
    %1154 = vmatpush2.msra.mxu0 0.0
    %1155 = vmatprep.subr.mxu0 0.0
    %1156 = vmatpush2.msra.mxu0 0.0
    %1157 = vmatprep.subr.mxu0 0.0
    %1158 = vmatpush2.msra.mxu0 0.0
    %1159 = vmatprep.subr.mxu0 0.0
    %1160 = vmatpush2.msra.mxu0 0.0
    %1161 = vmatprep.subr.mxu0 0.0
    %1162 = vmatpush2.msra.mxu0 0.0
    %1163 = vmatprep.subr.mxu0 0.0
    %1164 = vmatpush2.msra.mxu0 0.0
    %1165 = vmatprep.subr.mxu0 0.0
    %1166 = vmatpush2.msra.mxu0 0.0
    %1167 = vmatprep.subr.mxu0 0.0
    %1168 = vmatpush2.msra.mxu0 0.0
    %1169 = vmatprep.subr.mxu0 0.0
    %1170 = vmatpush2.msra.mxu0 0.0
    %1171 = vmatprep.subr.mxu0 0.0
    %1172 = vmatpush2.msra.mxu0 0.0
    %1173 = vmatprep.subr.mxu0 0.0
    %1174 = vmatpush2.msra.mxu0 0.0
    %1175 = vmatprep.subr.mxu0 0.0
    %1176 = vmatpush2.msra.mxu0 0.0
    %1177 = vmatprep.subr.mxu0 0.0
    %1178 = vmatpush2.msra.mxu0 0.0
    %1179 = vmatprep.subr.mxu0 0.0
    %1180 = vmatpush2.msra.mxu0 0.0
    %1181 = vmatprep.subr.mxu0 0.0
    %1182 = vmatpush2.msra.mxu0 0.0
    %1183 = vmatprep.mubr.f32.mxu0 0.0
    %1184 = vmatmul.mubr.f32.gmra.mxu0 %v1113
    %v1185 = vpop.f32.mrf.mxu0
    %v1186 = vadd.f32 %v1118, %v1185
    %v1187 = vpop.f32.mrf.mxu0
    %1188 = vmatprep.mubr.f32.mxu0 0.0
    %1189 = vmatmul.mubr.f32.gmra.mxu0 %v1114
    %v1190 = vpop.f32.mrf.mxu0
    %v1191 = vadd.f32 %v1118, %v1190
    %v1192 = vpop.f32.mrf.mxu0
    %1193 = vdwg.mxu0
    %v1194 = vadd.f32 %v1026, %v1186
    %v1195 = vadd.f32 %v1027, %v1191
    %v1196 = vsel %vm87, %v1194, 0.0
    %1197 = vadd.xlane.f32.xlu0 %v1196
    %v1198 = vpop.xlane.xlu0 %1197
    %v1199 = vsel %vm87, %v1195, 0.0
    %1200 = vadd.xlane.f32.xlu0 %v1199
    %v1201 = vpop.xlane.xlu0 %1200
    %v1202 = vmul.f32 %v1198, %v991
    %v1203 = vmul.f32 %v1201, %v991
    %v1204 = vmul.f32 %v1194, %v1194
    %v1205 = vmul.f32 %v1195, %v1195
    %v1206 = vsel %vm87, %v1204, 0.0
    %1207 = vadd.xlane.f32.xlu0 %v1206
    %v1208 = vpop.xlane.xlu0 %1207
    %v1209 = vsel %vm87, %v1205, 0.0
    %1210 = vadd.xlane.f32.xlu0 %v1209
    %v1211 = vpop.xlane.xlu0 %1210
    %v1212 = vmul.f32 %v1208, %v991
    %v1213 = vmul.f32 %v1211, %v991
    %v1214 = vmul.f32 %v1202, %v1202
    %v1215 = vmul.f32 %v1203, %v1203
    %v1216 = vsub.f32 %v1212, %v1214
    %v1217 = vsub.f32 %v1213, %v1215
    %v1218 = vsub.f32 %v1194, %v1202
    %v1219 = vsub.f32 %v1195, %v1203
    %v1220 = vadd.f32 %v1216, 1e-05
    %v1221 = vadd.f32 %v1217, 1e-05
    %v1222 = vrsqrt.pop %v1220
    %v1223 = vrsqrt.pop %v1221
    %v1224 = vmul.f32 %v1218, %v1222
    %v1225 = vmul.f32 %v1219, %v1223
    %v1226 = vlaneseq
    %v1227 = vshrl.u32 %v1226, 7
    %v1228 = vsub.s32 6, %v1227
    %v1229 = vrot.slane %v257, %v1228
    %v1230 = vmul.f32 %v1224, %v1229
    %v1231 = vmul.f32 %v1225, %v1229
    %v1232 = vlaneseq
    %v1233 = vshrl.u32 %v1232, 7
    %v1234 = vsub.s32 7, %v1233
    %v1235 = vrot.slane %v257, %v1234
    %v1236 = vadd.f32 %v1230, %v1235
    %v1237 = vadd.f32 %v1231, %v1235
    %1238 = vst.msk [vmem:[#allocation4] sm:$0xff] %vm87, %v1236
    %1239 = vst.msk [vmem:[#allocation4 + $0x8] sm:$0xff] %vm87, %v1237
    %s1240 = scalar_lea.vmem %s6, 8
    %v1241 = vld [vmem:[%s1240] sm:$0xff]
    %s1242 = scalar_lea.vmem %s3, 32
    %v1243 = vld [vmem:[%s1242] sm:$0xff]
    %v1244 = vld [vmem:[%s1242 + $0x8] sm:$0xff]
    %v1245 = vld [vmem:[%s1242 + $0x10] sm:$0xff]
    %v1246 = vld [vmem:[%s1242 + $0x18] sm:$0xff]
    %s1247 = scalar_lea.vmem %s5, 160
    %v1248 = vld [vmem:[%s1247] sm:$0xff]
    %v1249 = vld [vmem:[%s1247 + $0x8] sm:$0xff]
    %v1250 = vld [vmem:[%s1247 + $0x10] sm:$0xff]
    %v1251 = vld [vmem:[%s1247 + $0x18] sm:$0xff]
    %s1252 = scalar_lea.vmem %s4, 32
    %v1253 = vld [vmem:[%s1252] sm:$0xff]
    %v1254 = vld [vmem:[%s1252 + $0x8] sm:$0xff]
    %v1255 = vld [vmem:[%s1252 + $0x10] sm:$0xff]
    %v1256 = vld [vmem:[%s1252 + $0x18] sm:$0xff]
    %v1257 = vld [vmem:[%s1247 + $0x20] sm:$0xff]
    %v1258 = vld [vmem:[%s1247 + $0x28] sm:$0xff]
    %v1259 = vld [vmem:[%s1247 + $0x30] sm:$0xff]
    %v1260 = vld [vmem:[%s1247 + $0x38] sm:$0xff]
    %v1261 = vld [vmem:[%s1247 + $0x40] sm:$0xff]
    %v1262 = vld [vmem:[%s1247 + $0x48] sm:$0xff]
    %v1263 = vld [vmem:[%s1247 + $0x50] sm:$0xff]
    %v1264 = vld [vmem:[%s1247 + $0x58] sm:$0xff]
    %v1265 = vld [vmem:[%s1247 + $0x60] sm:$0xff]
    %v1266 = vld [vmem:[%s1247 + $0x68] sm:$0xff]
    %v1267 = vld [vmem:[%s1247 + $0x70] sm:$0xff]
    %v1268 = vld [vmem:[%s1247 + $0x78] sm:$0xff]
    %v1269 = vld [vmem:[%s1247 + $0x80] sm:$0xff]
    %v1270 = vld [vmem:[%s1247 + $0x88] sm:$0xff]
    %v1271 = vld [vmem:[%s1247 + $0x90] sm:$0xff]
    %v1272 = vld [vmem:[%s1247 + $0x98] sm:$0xff]
    %v1273 = vlaneseq
    %v1274 = vshrl.u32 %v1273, 7
    %v1275 = vsub.s32 0, %v1274
    %v1276 = vrot.slane %v1241, %v1275
    %v1278 = vsel %vm87, %v1236, 0
    %v1281 = vsel %vm87, %v1237, 0
    %1283 = vmatprep.subr.mxu0 0.0
    %1284 = vmatpush1.msra.mxu0 0.0
    %1285 = vmatprep.subr.mxu0 0.0
    %1286 = vmatpush1.msra.mxu0 0.0
    %1287 = vmatprep.subr.mxu0 0.0
    %1288 = vmatpush1.msra.mxu0 0.0
    %1289 = vmatprep.subr.mxu0 0.0
    %1290 = vmatpush1.msra.mxu0 0.0
    %1291 = vmatprep.subr.mxu0 0.0
    %1292 = vmatpush1.msra.mxu0 0.0
    %1293 = vmatprep.subr.mxu0 0.0
    %1294 = vmatpush1.msra.mxu0 0.0
    %1295 = vmatprep.subr.mxu0 0.0
    %1296 = vmatpush1.msra.mxu0 0.0
    %1297 = vmatprep.subr.mxu0 0.0
    %1298 = vmatpush1.msra.mxu0 0.0
    %1299 = vmatprep.subr.mxu0 0.0
    %1300 = vmatpush1.msra.mxu0 0.0
    %1301 = vmatprep.subr.mxu0 0.0
    %1302 = vmatpush1.msra.mxu0 0.0
    %1303 = vmatprep.subr.mxu0 0.0
    %1304 = vmatpush1.msra.mxu0 0.0
    %1305 = vmatprep.subr.mxu0 0.0
    %1306 = vmatpush1.msra.mxu0 0.0
    %1307 = vmatprep.subr.mxu0 0.0
    %1308 = vmatpush1.msra.mxu0 %v1246
    %1309 = vmatprep.subr.mxu0 0.0
    %1310 = vmatpush1.msra.mxu0 %v1245
    %1311 = vmatprep.subr.mxu0 0.0
    %1312 = vmatpush1.msra.mxu0 %v1244
    %1313 = vmatprep.subr.mxu0 0.0
    %1314 = vmatpush1.msra.mxu0 %v1243
    %1315 = vmatprep.subr.mxu0 0.0
    %1316 = vmatpush2.msra.mxu0 0.0
    %1317 = vmatprep.subr.mxu0 0.0
    %1318 = vmatpush2.msra.mxu0 0.0
    %1319 = vmatprep.subr.mxu0 0.0
    %1320 = vmatpush2.msra.mxu0 0.0
    %1321 = vmatprep.subr.mxu0 0.0
    %1322 = vmatpush2.msra.mxu0 0.0
    %1323 = vmatprep.subr.mxu0 0.0
    %1324 = vmatpush2.msra.mxu0 0.0
    %1325 = vmatprep.subr.mxu0 0.0
    %1326 = vmatpush2.msra.mxu0 0.0
    %1327 = vmatprep.subr.mxu0 0.0
    %1328 = vmatpush2.msra.mxu0 0.0
    %1329 = vmatprep.subr.mxu0 0.0
    %1330 = vmatpush2.msra.mxu0 0.0
    %1331 = vmatprep.subr.mxu0 0.0
    %1332 = vmatpush2.msra.mxu0 0.0
    %1333 = vmatprep.subr.mxu0 0.0
    %1334 = vmatpush2.msra.mxu0 0.0
    %1335 = vmatprep.subr.mxu0 0.0
    %1336 = vmatpush2.msra.mxu0 0.0
    %1337 = vmatprep.subr.mxu0 0.0
    %1338 = vmatpush2.msra.mxu0 0.0
    %1339 = vmatprep.subr.mxu0 0.0
    %1340 = vmatpush2.msra.mxu0 0.0
    %1341 = vmatprep.subr.mxu0 0.0
    %1342 = vmatpush2.msra.mxu0 0.0
    %1343 = vmatprep.subr.mxu0 0.0
    %1344 = vmatpush2.msra.mxu0 0.0
    %1345 = vmatprep.subr.mxu0 0.0
    %1346 = vmatpush2.msra.mxu0 0.0
    %1347 = vmatprep.mubr.f32.mxu0 0.0
    %1348 = vmatmul.mubr.f32.gmra.mxu0 %v1278
    %v1349 = vpop.f32.mrf.mxu0
    %v1350 = vadd.f32 %v1276, %v1349
    %v1351 = vpop.f32.mrf.mxu0
    %1352 = vmatprep.mubr.f32.mxu0 0.0
    %1353 = vmatmul.mubr.f32.gmra.mxu0 %v1281
    %v1354 = vpop.f32.mrf.mxu0
    %v1355 = vadd.f32 %v1276, %v1354
    %v1356 = vpop.f32.mrf.mxu0
    %1357 = vdwg.mxu0
    %v1358 = vmul.f32 %v1350, %v382
    %v1359 = vmul.f32 %v1355, %v384
    %v1360 = vmul.f32 %v1350, %v386
    %v1361 = vmul.f32 %v1355, %v388
    %v1362 = vmul.f32 %v1350, %v390
    %v1363 = vmul.f32 %v1355, %v392
    %v1364 = vmul.f32 %v1350, %v394
    %v1365 = vmul.f32 %v1355, %v396
    %v1366 = vmul.f32 %v1350, %v398
    %v1367 = vmul.f32 %v1355, %v400
    %v1368 = vmul.f32 %v1350, %v402
    %v1369 = vmul.f32 %v1355, %v404
    %v1370 = vmul.f32 %v1350, %v406
    %v1371 = vmul.f32 %v1355, %v408
    %v1372 = vmul.f32 %v1350, %v410
    %v1373 = vmul.f32 %v1355, %v412
    %v1374 = vmul.f32 %v1350, %v446
    %v1375 = vmul.f32 %v1355, %v448
    %v1376 = vmul.f32 %v1350, %v450
    %v1377 = vmul.f32 %v1355, %v452
    %v1378 = vmul.f32 %v1350, %v454
    %v1379 = vmul.f32 %v1355, %v456
    %v1380 = vmul.f32 %v1350, %v458
    %v1381 = vmul.f32 %v1355, %v460
    %v1382 = vmul.f32 %v1350, %v462
    %v1383 = vmul.f32 %v1355, %v464
    %v1384 = vmul.f32 %v1350, %v466
    %v1385 = vmul.f32 %v1355, %v468
    %v1386 = vmul.f32 %v1350, %v470
    %v1387 = vmul.f32 %v1355, %v472
    %v1388 = vmul.f32 %v1350, %v474
    %v1389 = vmul.f32 %v1355, %v476
    %1406 = vrot.lane.b32.xlu0 %v1358, 96
    %v1407 = vpop.permute.xlu0 %1406
    %1408 = vrot.lane.b32.xlu0 %v1359, 96
    %v1409 = vpop.permute.xlu0 %1408
    %1410 = vrot.lane.b32.xlu0 %v1360, 96
    %v1411 = vpop.permute.xlu0 %1410
    %1412 = vrot.lane.b32.xlu0 %v1361, 96
    %v1413 = vpop.permute.xlu0 %1412
    %1414 = vrot.lane.b32.xlu0 %v1362, 96
    %v1415 = vpop.permute.xlu0 %1414
    %1416 = vrot.lane.b32.xlu0 %v1363, 96
    %v1417 = vpop.permute.xlu0 %1416
    %1418 = vrot.lane.b32.xlu0 %v1364, 96
    %v1419 = vpop.permute.xlu0 %1418
    %1420 = vrot.lane.b32.xlu0 %v1365, 96
    %v1421 = vpop.permute.xlu0 %1420
    %1422 = vrot.lane.b32.xlu0 %v1366, 96
    %v1423 = vpop.permute.xlu0 %1422
    %1424 = vrot.lane.b32.xlu0 %v1367, 96
    %v1425 = vpop.permute.xlu0 %1424
    %1426 = vrot.lane.b32.xlu0 %v1368, 96
    %v1427 = vpop.permute.xlu0 %1426
    %1428 = vrot.lane.b32.xlu0 %v1369, 96
    %v1429 = vpop.permute.xlu0 %1428
    %1430 = vrot.lane.b32.xlu0 %v1370, 96
    %v1431 = vpop.permute.xlu0 %1430
    %1432 = vrot.lane.b32.xlu0 %v1371, 96
    %v1433 = vpop.permute.xlu0 %1432
    %1434 = vrot.lane.b32.xlu0 %v1372, 96
    %v1435 = vpop.permute.xlu0 %1434
    %1436 = vrot.lane.b32.xlu0 %v1373, 96
    %v1437 = vpop.permute.xlu0 %1436
    %v1439 = vsel %vm87, %v1350, 0
    %v1442 = vsel %vm87, %v1355, 0
    %v1444 = vsel %vm87, %v1407, 0
    %v1446 = vsel %vm87, %v1409, 0
    %v1448 = vsel %vm87, %v1411, 0
    %v1450 = vsel %vm87, %v1413, 0
    %v1452 = vsel %vm87, %v1415, 0
    %v1454 = vsel %vm87, %v1417, 0
    %v1456 = vsel %vm87, %v1419, 0
    %v1458 = vsel %vm87, %v1421, 0
    %v1460 = vsel %vm87, %v1423, 0
    %v1462 = vsel %vm87, %v1425, 0
    %v1464 = vsel %vm87, %v1427, 0
    %v1466 = vsel %vm87, %v1429, 0
    %v1468 = vsel %vm87, %v1431, 0
    %v1470 = vsel %vm87, %v1433, 0
    %v1472 = vsel %vm87, %v1435, 0
    %v1474 = vsel %vm87, %v1437, 0
    %1476 = vmatprep.subr.mxu0 0.0
    %1477 = vmatpush1.xpose.msra.mxu0 %v1474
    %1478 = vmatprep.subr.mxu0 0.0
    %1479 = vmatpush1.xpose.msra.mxu0 %v1472
    %1480 = vmatprep.subr.mxu0 0.0
    %1481 = vmatpush1.xpose.msra.mxu0 %v1470
    %1482 = vmatprep.subr.mxu0 0.0
    %1483 = vmatpush1.xpose.msra.mxu0 %v1468
    %1484 = vmatprep.subr.mxu0 0.0
    %1485 = vmatpush1.xpose.msra.mxu0 %v1466
    %1486 = vmatprep.subr.mxu0 0.0
    %1487 = vmatpush1.xpose.msra.mxu0 %v1464
    %1488 = vmatprep.subr.mxu0 0.0
    %1489 = vmatpush1.xpose.msra.mxu0 %v1462
    %1490 = vmatprep.subr.mxu0 0.0
    %1491 = vmatpush1.xpose.msra.mxu0 %v1460
    %1492 = vmatprep.subr.mxu0 0.0
    %1493 = vmatpush1.xpose.msra.mxu0 %v1458
    %1494 = vmatprep.subr.mxu0 0.0
    %1495 = vmatpush1.xpose.msra.mxu0 %v1456
    %1496 = vmatprep.subr.mxu0 0.0
    %1497 = vmatpush1.xpose.msra.mxu0 %v1454
    %1498 = vmatprep.subr.mxu0 0.0
    %1499 = vmatpush1.xpose.msra.mxu0 %v1452
    %1500 = vmatprep.subr.mxu0 0.0
    %1501 = vmatpush1.xpose.msra.mxu0 %v1450
    %1502 = vmatprep.subr.mxu0 0.0
    %1503 = vmatpush1.xpose.msra.mxu0 %v1448
    %1504 = vmatprep.subr.mxu0 0.0
    %1505 = vmatpush1.xpose.msra.mxu0 %v1446
    %1506 = vmatprep.subr.mxu0 0.0
    %1507 = vmatpush1.xpose.msra.mxu0 %v1444
    %1508 = vmatprep.subr.mxu0 0.0
    %1509 = vmatpush2.xpose.msra.mxu0 0.0
    %1510 = vmatprep.subr.mxu0 0.0
    %1511 = vmatpush2.xpose.msra.mxu0 0.0
    %1512 = vmatprep.subr.mxu0 0.0
    %1513 = vmatpush2.xpose.msra.mxu0 0.0
    %1514 = vmatprep.subr.mxu0 0.0
    %1515 = vmatpush2.xpose.msra.mxu0 0.0
    %1516 = vmatprep.subr.mxu0 0.0
    %1517 = vmatpush2.xpose.msra.mxu0 0.0
    %1518 = vmatprep.subr.mxu0 0.0
    %1519 = vmatpush2.xpose.msra.mxu0 0.0
    %1520 = vmatprep.subr.mxu0 0.0
    %1521 = vmatpush2.xpose.msra.mxu0 0.0
    %1522 = vmatprep.subr.mxu0 0.0
    %1523 = vmatpush2.xpose.msra.mxu0 0.0
    %1524 = vmatprep.subr.mxu0 0.0
    %1525 = vmatpush2.xpose.msra.mxu0 0.0
    %1526 = vmatprep.subr.mxu0 0.0
    %1527 = vmatpush2.xpose.msra.mxu0 0.0
    %1528 = vmatprep.subr.mxu0 0.0
    %1529 = vmatpush2.xpose.msra.mxu0 0.0
    %1530 = vmatprep.subr.mxu0 0.0
    %1531 = vmatpush2.xpose.msra.mxu0 0.0
    %1532 = vmatprep.subr.mxu0 0.0
    %1533 = vmatpush2.xpose.msra.mxu0 0.0
    %1534 = vmatprep.subr.mxu0 0.0
    %1535 = vmatpush2.xpose.msra.mxu0 0.0
    %1536 = vmatprep.subr.mxu0 0.0
    %1537 = vmatpush2.xpose.msra.mxu0 0.0
    %1538 = vmatprep.subr.mxu0 0.0
    %1539 = vmatpush2.xpose.msra.mxu0 0.0
    %1540 = vmatprep.mubr.f32.mxu0 0.0
    %1541 = vmatmul.mubr.f32.gmra.mxu0 %v1439
    %v1542 = vpop.f32.mrf.mxu0
    %v1543 = vadd.f32 %v67, %v1542
    %v1544 = vpop.f32.mrf.mxu0
    %1545 = vmatprep.mubr.f32.mxu0 0.0
    %1546 = vmatmul.mubr.f32.gmra.mxu0 %v1442
    %v1547 = vpop.f32.mrf.mxu0
    %v1548 = vadd.f32 %v68, %v1547
    %v1549 = vpop.f32.mrf.mxu0
    %1550 = vdwg.mxu0
    %1551 = vmax.xlane.f32.xlu0 %v1543
    %v1552 = vpop.xlane.xlu0 %1551
    %1553 = vmax.xlane.f32.xlu0 %v1548
    %v1554 = vpop.xlane.xlu0 %1553
    %v1555 = vsub.f32 %v1543, %v1552
    %v1556 = vsub.f32 %v1548, %v1554
    %v1557 = vmul.f32 %v1555, 1.442695
    %v1558 = vpow.pop %v1557
    %v1559 = vmul.f32 %v1556, 1.442695
    %v1560 = vpow.pop %v1559
    %1561 = vmatprep.subr.mxu0 0.0
    %1562 = vmatpush1.msra.mxu0 %v48
    %1563 = vmatprep.subr.mxu0 0.0
    %1564 = vmatpush1.msra.mxu0 %v47
    %1565 = vmatprep.subr.mxu0 0.0
    %1566 = vmatpush1.msra.mxu0 %v46
    %1567 = vmatprep.subr.mxu0 0.0
    %1568 = vmatpush1.msra.mxu0 %v45
    %1569 = vmatprep.subr.mxu0 0.0
    %1570 = vmatpush1.msra.mxu0 %v44
    %1571 = vmatprep.subr.mxu0 0.0
    %1572 = vmatpush1.msra.mxu0 %v43
    %1573 = vmatprep.subr.mxu0 0.0
    %1574 = vmatpush1.msra.mxu0 %v42
    %1575 = vmatprep.subr.mxu0 0.0
    %1576 = vmatpush1.msra.mxu0 %v41
    %1577 = vmatprep.subr.mxu0 0.0
    %1578 = vmatpush1.msra.mxu0 %v40
    %1579 = vmatprep.subr.mxu0 0.0
    %1580 = vmatpush1.msra.mxu0 %v39
    %1581 = vmatprep.subr.mxu0 0.0
    %1582 = vmatpush1.msra.mxu0 %v38
    %1583 = vmatprep.subr.mxu0 0.0
    %1584 = vmatpush1.msra.mxu0 %v37
    %1585 = vmatprep.subr.mxu0 0.0
    %1586 = vmatpush1.msra.mxu0 %v36
    %1587 = vmatprep.subr.mxu0 0.0
    %1588 = vmatpush1.msra.mxu0 %v35
    %1589 = vmatprep.subr.mxu0 0.0
    %1590 = vmatpush1.msra.mxu0 %v34
    %1591 = vmatprep.subr.mxu0 0.0
    %1592 = vmatpush1.msra.mxu0 %v33
    %1593 = vmatprep.subr.mxu0 0.0
    %1594 = vmatpush2.msra.mxu0 0.0
    %1595 = vmatprep.subr.mxu0 0.0
    %1596 = vmatpush2.msra.mxu0 0.0
    %1597 = vmatprep.subr.mxu0 0.0
    %1598 = vmatpush2.msra.mxu0 0.0
    %1599 = vmatprep.subr.mxu0 0.0
    %1600 = vmatpush2.msra.mxu0 0.0
    %1601 = vmatprep.subr.mxu0 0.0
    %1602 = vmatpush2.msra.mxu0 0.0
    %1603 = vmatprep.subr.mxu0 0.0
    %1604 = vmatpush2.msra.mxu0 0.0
    %1605 = vmatprep.subr.mxu0 0.0
    %1606 = vmatpush2.msra.mxu0 0.0
    %1607 = vmatprep.subr.mxu0 0.0
    %1608 = vmatpush2.msra.mxu0 0.0
    %1609 = vmatprep.subr.mxu0 0.0
    %1610 = vmatpush2.msra.mxu0 0.0
    %1611 = vmatprep.subr.mxu0 0.0
    %1612 = vmatpush2.msra.mxu0 0.0
    %1613 = vmatprep.subr.mxu0 0.0
    %1614 = vmatpush2.msra.mxu0 0.0
    %1615 = vmatprep.subr.mxu0 0.0
    %1616 = vmatpush2.msra.mxu0 0.0
    %1617 = vmatprep.subr.mxu0 0.0
    %1618 = vmatpush2.msra.mxu0 0.0
    %1619 = vmatprep.subr.mxu0 0.0
    %1620 = vmatpush2.msra.mxu0 0.0
    %1621 = vmatprep.subr.mxu0 0.0
    %1622 = vmatpush2.msra.mxu0 0.0
    %1623 = vmatprep.subr.mxu0 0.0
    %1624 = vmatpush2.msra.mxu0 0.0
    %1625 = vmatprep.mubr.f32.mxu0 0.0
    %1626 = vmatmul.mubr.f32.gmra.mxu0 %v1558
    %v1627 = vpop.f32.mrf.mxu0
    %v1628 = vadd.f32 0.0, %v1627
    %v1629 = vpop.f32.mrf.mxu0
    %1630 = vmatprep.mubr.f32.mxu0 0.0
    %1631 = vmatmul.mubr.f32.gmra.mxu0 %v1560
    %v1632 = vpop.f32.mrf.mxu0
    %v1633 = vadd.f32 0.0, %v1632
    %v1634 = vpop.f32.mrf.mxu0
    %1635 = vdwg.mxu0
    %v1636 = vrcp.pop %v1628
    %v1637 = vrcp.pop %v1633
    %v1638 = vmul.f32 %v1558, %v1636
    %v1639 = vmul.f32 %v1560, %v1637
    %1656 = vrot.lane.b32.xlu0 %v1374, 64
    %v1657 = vpop.permute.xlu0 %1656
    %1658 = vrot.lane.b32.xlu0 %v1375, 64
    %v1659 = vpop.permute.xlu0 %1658
    %1660 = vrot.lane.b32.xlu0 %v1376, 64
    %v1661 = vpop.permute.xlu0 %1660
    %1662 = vrot.lane.b32.xlu0 %v1377, 64
    %v1663 = vpop.permute.xlu0 %1662
    %1664 = vrot.lane.b32.xlu0 %v1378, 64
    %v1665 = vpop.permute.xlu0 %1664
    %1666 = vrot.lane.b32.xlu0 %v1379, 64
    %v1667 = vpop.permute.xlu0 %1666
    %1668 = vrot.lane.b32.xlu0 %v1380, 64
    %v1669 = vpop.permute.xlu0 %1668
    %1670 = vrot.lane.b32.xlu0 %v1381, 64
    %v1671 = vpop.permute.xlu0 %1670
    %1672 = vrot.lane.b32.xlu0 %v1382, 64
    %v1673 = vpop.permute.xlu0 %1672
    %1674 = vrot.lane.b32.xlu0 %v1383, 64
    %v1675 = vpop.permute.xlu0 %1674
    %1676 = vrot.lane.b32.xlu0 %v1384, 64
    %v1677 = vpop.permute.xlu0 %1676
    %1678 = vrot.lane.b32.xlu0 %v1385, 64
    %v1679 = vpop.permute.xlu0 %1678
    %1680 = vrot.lane.b32.xlu0 %v1386, 64
    %v1681 = vpop.permute.xlu0 %1680
    %1682 = vrot.lane.b32.xlu0 %v1387, 64
    %v1683 = vpop.permute.xlu0 %1682
    %1684 = vrot.lane.b32.xlu0 %v1388, 64
    %v1685 = vpop.permute.xlu0 %1684
    %1686 = vrot.lane.b32.xlu0 %v1389, 64
    %v1687 = vpop.permute.xlu0 %1686
    %1704 = vmatprep.subr.mxu0 0.0
    %1705 = vmatpush1.msra.mxu0 %v1687
    %1706 = vmatprep.subr.mxu0 0.0
    %1707 = vmatpush1.msra.mxu0 %v1685
    %1708 = vmatprep.subr.mxu0 0.0
    %1709 = vmatpush1.msra.mxu0 %v1683
    %1710 = vmatprep.subr.mxu0 0.0
    %1711 = vmatpush1.msra.mxu0 %v1681
    %1712 = vmatprep.subr.mxu0 0.0
    %1713 = vmatpush1.msra.mxu0 %v1679
    %1714 = vmatprep.subr.mxu0 0.0
    %1715 = vmatpush1.msra.mxu0 %v1677
    %1716 = vmatprep.subr.mxu0 0.0
    %1717 = vmatpush1.msra.mxu0 %v1675
    %1718 = vmatprep.subr.mxu0 0.0
    %1719 = vmatpush1.msra.mxu0 %v1673
    %1720 = vmatprep.subr.mxu0 0.0
    %1721 = vmatpush1.msra.mxu0 %v1671
    %1722 = vmatprep.subr.mxu0 0.0
    %1723 = vmatpush1.msra.mxu0 %v1669
    %1724 = vmatprep.subr.mxu0 0.0
    %1725 = vmatpush1.msra.mxu0 %v1667
    %1726 = vmatprep.subr.mxu0 0.0
    %1727 = vmatpush1.msra.mxu0 %v1665
    %1728 = vmatprep.subr.mxu0 0.0
    %1729 = vmatpush1.msra.mxu0 %v1663
    %1730 = vmatprep.subr.mxu0 0.0
    %1731 = vmatpush1.msra.mxu0 %v1661
    %1732 = vmatprep.subr.mxu0 0.0
    %1733 = vmatpush1.msra.mxu0 %v1659
    %1734 = vmatprep.subr.mxu0 0.0
    %1735 = vmatpush1.msra.mxu0 %v1657
    %1736 = vmatprep.subr.mxu0 0.0
    %1737 = vmatpush2.msra.mxu0 0.0
    %1738 = vmatprep.subr.mxu0 0.0
    %1739 = vmatpush2.msra.mxu0 0.0
    %1740 = vmatprep.subr.mxu0 0.0
    %1741 = vmatpush2.msra.mxu0 0.0
    %1742 = vmatprep.subr.mxu0 0.0
    %1743 = vmatpush2.msra.mxu0 0.0
    %1744 = vmatprep.subr.mxu0 0.0
    %1745 = vmatpush2.msra.mxu0 0.0
    %1746 = vmatprep.subr.mxu0 0.0
    %1747 = vmatpush2.msra.mxu0 0.0
    %1748 = vmatprep.subr.mxu0 0.0
    %1749 = vmatpush2.msra.mxu0 0.0
    %1750 = vmatprep.subr.mxu0 0.0
    %1751 = vmatpush2.msra.mxu0 0.0
    %1752 = vmatprep.subr.mxu0 0.0
    %1753 = vmatpush2.msra.mxu0 0.0
    %1754 = vmatprep.subr.mxu0 0.0
    %1755 = vmatpush2.msra.mxu0 0.0
    %1756 = vmatprep.subr.mxu0 0.0
    %1757 = vmatpush2.msra.mxu0 0.0
    %1758 = vmatprep.subr.mxu0 0.0
    %1759 = vmatpush2.msra.mxu0 0.0
    %1760 = vmatprep.subr.mxu0 0.0
    %1761 = vmatpush2.msra.mxu0 0.0
    %1762 = vmatprep.subr.mxu0 0.0
    %1763 = vmatpush2.msra.mxu0 0.0
    %1764 = vmatprep.subr.mxu0 0.0
    %1765 = vmatpush2.msra.mxu0 0.0
    %1766 = vmatprep.subr.mxu0 0.0
    %1767 = vmatpush2.msra.mxu0 0.0
    %1768 = vmatprep.mubr.f32.mxu0 0.0
    %1769 = vmatmul.mubr.f32.gmra.mxu0 %v1638
    %v1770 = vpop.f32.mrf.mxu0
    %v1771 = vadd.f32 0.0, %v1770
    %v1772 = vpop.f32.mrf.mxu0
    %1773 = vmatprep.mubr.f32.mxu0 0.0
    %1774 = vmatmul.mubr.f32.gmra.mxu0 %v1639
    %v1775 = vpop.f32.mrf.mxu0
    %v1776 = vadd.f32 0.0, %v1775
    %v1777 = vpop.f32.mrf.mxu0
    %1778 = vdwg.mxu0
    %v1779 = vlaneseq
    %v1780 = vshrl.u32 %v1779, 7
    %v1781 = vsub.s32 1, %v1780
    %v1782 = vrot.slane %v1241, %v1781
    %v1784 = vsel %vm87, %v1771, 0
    %v1787 = vsel %vm87, %v1776, 0
    %1789 = vmatprep.subr.mxu0 0.0
    %1790 = vmatpush1.msra.mxu0 0.0
    %1791 = vmatprep.subr.mxu0 0.0
    %1792 = vmatpush1.msra.mxu0 0.0
    %1793 = vmatprep.subr.mxu0 0.0
    %1794 = vmatpush1.msra.mxu0 0.0
    %1795 = vmatprep.subr.mxu0 0.0
    %1796 = vmatpush1.msra.mxu0 0.0
    %1797 = vmatprep.subr.mxu0 0.0
    %1798 = vmatpush1.msra.mxu0 0.0
    %1799 = vmatprep.subr.mxu0 0.0
    %1800 = vmatpush1.msra.mxu0 0.0
    %1801 = vmatprep.subr.mxu0 0.0
    %1802 = vmatpush1.msra.mxu0 0.0
    %1803 = vmatprep.subr.mxu0 0.0
    %1804 = vmatpush1.msra.mxu0 0.0
    %1805 = vmatprep.subr.mxu0 0.0
    %1806 = vmatpush1.msra.mxu0 0.0
    %1807 = vmatprep.subr.mxu0 0.0
    %1808 = vmatpush1.msra.mxu0 0.0
    %1809 = vmatprep.subr.mxu0 0.0
    %1810 = vmatpush1.msra.mxu0 0.0
    %1811 = vmatprep.subr.mxu0 0.0
    %1812 = vmatpush1.msra.mxu0 0.0
    %1813 = vmatprep.subr.mxu0 0.0
    %1814 = vmatpush1.msra.mxu0 %v1251
    %1815 = vmatprep.subr.mxu0 0.0
    %1816 = vmatpush1.msra.mxu0 %v1250
    %1817 = vmatprep.subr.mxu0 0.0
    %1818 = vmatpush1.msra.mxu0 %v1249
    %1819 = vmatprep.subr.mxu0 0.0
    %1820 = vmatpush1.msra.mxu0 %v1248
    %1821 = vmatprep.subr.mxu0 0.0
    %1822 = vmatpush2.msra.mxu0 0.0
    %1823 = vmatprep.subr.mxu0 0.0
    %1824 = vmatpush2.msra.mxu0 0.0
    %1825 = vmatprep.subr.mxu0 0.0
    %1826 = vmatpush2.msra.mxu0 0.0
    %1827 = vmatprep.subr.mxu0 0.0
    %1828 = vmatpush2.msra.mxu0 0.0
    %1829 = vmatprep.subr.mxu0 0.0
    %1830 = vmatpush2.msra.mxu0 0.0
    %1831 = vmatprep.subr.mxu0 0.0
    %1832 = vmatpush2.msra.mxu0 0.0
    %1833 = vmatprep.subr.mxu0 0.0
    %1834 = vmatpush2.msra.mxu0 0.0
    %1835 = vmatprep.subr.mxu0 0.0
    %1836 = vmatpush2.msra.mxu0 0.0
    %1837 = vmatprep.subr.mxu0 0.0
    %1838 = vmatpush2.msra.mxu0 0.0
    %1839 = vmatprep.subr.mxu0 0.0
    %1840 = vmatpush2.msra.mxu0 0.0
    %1841 = vmatprep.subr.mxu0 0.0
    %1842 = vmatpush2.msra.mxu0 0.0
    %1843 = vmatprep.subr.mxu0 0.0
    %1844 = vmatpush2.msra.mxu0 0.0
    %1845 = vmatprep.subr.mxu0 0.0
    %1846 = vmatpush2.msra.mxu0 0.0
    %1847 = vmatprep.subr.mxu0 0.0
    %1848 = vmatpush2.msra.mxu0 0.0
    %1849 = vmatprep.subr.mxu0 0.0
    %1850 = vmatpush2.msra.mxu0 0.0
    %1851 = vmatprep.subr.mxu0 0.0
    %1852 = vmatpush2.msra.mxu0 0.0
    %1853 = vmatprep.mubr.f32.mxu0 0.0
    %1854 = vmatmul.mubr.f32.gmra.mxu0 %v1784
    %v1855 = vpop.f32.mrf.mxu0
    %v1856 = vadd.f32 %v1782, %v1855
    %v1857 = vpop.f32.mrf.mxu0
    %1858 = vmatprep.mubr.f32.mxu0 0.0
    %1859 = vmatmul.mubr.f32.gmra.mxu0 %v1787
    %v1860 = vpop.f32.mrf.mxu0
    %v1861 = vadd.f32 %v1782, %v1860
    %v1862 = vpop.f32.mrf.mxu0
    %1863 = vdwg.mxu0
    %v1864 = vadd.f32 %v1236, %v1856
    %v1865 = vadd.f32 %v1237, %v1861
    %v1866 = vsel %vm87, %v1864, 0.0
    %1867 = vadd.xlane.f32.xlu0 %v1866
    %v1868 = vpop.xlane.xlu0 %1867
    %v1869 = vsel %vm87, %v1865, 0.0
    %1870 = vadd.xlane.f32.xlu0 %v1869
    %v1871 = vpop.xlane.xlu0 %1870
    %v1872 = vmul.f32 %v1868, %v991
    %v1873 = vmul.f32 %v1871, %v991
    %v1874 = vmul.f32 %v1864, %v1864
    %v1875 = vmul.f32 %v1865, %v1865
    %v1876 = vsel %vm87, %v1874, 0.0
    %1877 = vadd.xlane.f32.xlu0 %v1876
    %v1878 = vpop.xlane.xlu0 %1877
    %v1879 = vsel %vm87, %v1875, 0.0
    %1880 = vadd.xlane.f32.xlu0 %v1879
    %v1881 = vpop.xlane.xlu0 %1880
    %v1882 = vmul.f32 %v1878, %v991
    %v1883 = vmul.f32 %v1881, %v991
    %v1884 = vmul.f32 %v1872, %v1872
    %v1885 = vmul.f32 %v1873, %v1873
    %v1886 = vsub.f32 %v1882, %v1884
    %v1887 = vsub.f32 %v1883, %v1885
    %v1888 = vsub.f32 %v1864, %v1872
    %v1889 = vsub.f32 %v1865, %v1873
    %v1890 = vadd.f32 %v1886, 1e-05
    %v1891 = vadd.f32 %v1887, 1e-05
    %v1892 = vrsqrt.pop %v1890
    %v1893 = vrsqrt.pop %v1891
    %v1894 = vmul.f32 %v1888, %v1892
    %v1895 = vmul.f32 %v1889, %v1893
    %v1896 = vlaneseq
    %v1897 = vshrl.u32 %v1896, 7
    %v1898 = vsub.s32 2, %v1897
    %v1899 = vrot.slane %v1241, %v1898
    %v1900 = vmul.f32 %v1894, %v1899
    %v1901 = vmul.f32 %v1895, %v1899
    %v1902 = vlaneseq
    %v1903 = vshrl.u32 %v1902, 7
    %v1904 = vsub.s32 3, %v1903
    %v1905 = vrot.slane %v1241, %v1904
    %v1906 = vadd.f32 %v1900, %v1905
    %v1907 = vadd.f32 %v1901, %v1905
    %v1908 = vlaneseq
    %v1909 = vshrl.u32 %v1908, 7
    %v1910 = vsub.s32 4, %v1909
    %v1911 = vrot.slane %v1241, %v1910
    %v1913 = vsel %vm87, %v1906, 0
    %v1916 = vsel %vm87, %v1907, 0
    %1918 = vmatprep.subr.mxu0 0.0
    %1919 = vmatpush1.msra.mxu0 0.0
    %1920 = vmatprep.subr.mxu0 0.0
    %1921 = vmatpush1.msra.mxu0 0.0
    %1922 = vmatprep.subr.mxu0 0.0
    %1923 = vmatpush1.msra.mxu0 0.0
    %1924 = vmatprep.subr.mxu0 0.0
    %1925 = vmatpush1.msra.mxu0 0.0
    %1926 = vmatprep.subr.mxu0 0.0
    %1927 = vmatpush1.msra.mxu0 0.0
    %1928 = vmatprep.subr.mxu0 0.0
    %1929 = vmatpush1.msra.mxu0 0.0
    %1930 = vmatprep.subr.mxu0 0.0
    %1931 = vmatpush1.msra.mxu0 0.0
    %1932 = vmatprep.subr.mxu0 0.0
    %1933 = vmatpush1.msra.mxu0 0.0
    %1934 = vmatprep.subr.mxu0 0.0
    %1935 = vmatpush1.msra.mxu0 0.0
    %1936 = vmatprep.subr.mxu0 0.0
    %1937 = vmatpush1.msra.mxu0 0.0
    %1938 = vmatprep.subr.mxu0 0.0
    %1939 = vmatpush1.msra.mxu0 0.0
    %1940 = vmatprep.subr.mxu0 0.0
    %1941 = vmatpush1.msra.mxu0 0.0
    %1942 = vmatprep.subr.mxu0 0.0
    %1943 = vmatpush1.msra.mxu0 %v1256
    %1944 = vmatprep.subr.mxu0 0.0
    %1945 = vmatpush1.msra.mxu0 %v1255
    %1946 = vmatprep.subr.mxu0 0.0
    %1947 = vmatpush1.msra.mxu0 %v1254
    %1948 = vmatprep.subr.mxu0 0.0
    %1949 = vmatpush1.msra.mxu0 %v1253
    %1950 = vmatprep.subr.mxu0 0.0
    %1951 = vmatpush2.msra.mxu0 0.0
    %1952 = vmatprep.subr.mxu0 0.0
    %1953 = vmatpush2.msra.mxu0 0.0
    %1954 = vmatprep.subr.mxu0 0.0
    %1955 = vmatpush2.msra.mxu0 0.0
    %1956 = vmatprep.subr.mxu0 0.0
    %1957 = vmatpush2.msra.mxu0 0.0
    %1958 = vmatprep.subr.mxu0 0.0
    %1959 = vmatpush2.msra.mxu0 0.0
    %1960 = vmatprep.subr.mxu0 0.0
    %1961 = vmatpush2.msra.mxu0 0.0
    %1962 = vmatprep.subr.mxu0 0.0
    %1963 = vmatpush2.msra.mxu0 0.0
    %1964 = vmatprep.subr.mxu0 0.0
    %1965 = vmatpush2.msra.mxu0 0.0
    %1966 = vmatprep.subr.mxu0 0.0
    %1967 = vmatpush2.msra.mxu0 0.0
    %1968 = vmatprep.subr.mxu0 0.0
    %1969 = vmatpush2.msra.mxu0 0.0
    %1970 = vmatprep.subr.mxu0 0.0
    %1971 = vmatpush2.msra.mxu0 0.0
    %1972 = vmatprep.subr.mxu0 0.0
    %1973 = vmatpush2.msra.mxu0 0.0
    %1974 = vmatprep.subr.mxu0 0.0
    %1975 = vmatpush2.msra.mxu0 0.0
    %1976 = vmatprep.subr.mxu0 0.0
    %1977 = vmatpush2.msra.mxu0 0.0
    %1978 = vmatprep.subr.mxu0 0.0
    %1979 = vmatpush2.msra.mxu0 0.0
    %1980 = vmatprep.subr.mxu0 0.0
    %1981 = vmatpush2.msra.mxu0 0.0
    %1982 = vmatprep.mubr.f32.mxu0 0.0
    %1983 = vmatmul.mubr.f32.gmra.mxu0 %v1913
    %v1984 = vpop.f32.mrf.mxu0
    %v1985 = vadd.f32 %v1911, %v1984
    %v1986 = vpop.f32.mrf.mxu0
    %1987 = vmatprep.mubr.f32.mxu0 0.0
    %1988 = vmatmul.mubr.f32.gmra.mxu0 %v1916
    %v1989 = vpop.f32.mrf.mxu0
    %v1990 = vadd.f32 %v1911, %v1989
    %v1991 = vpop.f32.mrf.mxu0
    %1992 = vdwg.mxu0
    %v1993 = vmax.f32 %v1985, 0.0
    %v1994 = vmax.f32 %v1990, 0.0
    %v1995 = vlaneseq
    %v1996 = vshrl.u32 %v1995, 7
    %v1997 = vsub.s32 5, %v1996
    %v1998 = vrot.slane %v1241, %v1997
    %1999 = vmatprep.subr.mxu0 0.0
    %2000 = vmatpush1.msra.mxu0 %v1272
    %2001 = vmatprep.subr.mxu0 0.0
    %2002 = vmatpush1.msra.mxu0 %v1271
    %2003 = vmatprep.subr.mxu0 0.0
    %2004 = vmatpush1.msra.mxu0 %v1270
    %2005 = vmatprep.subr.mxu0 0.0
    %2006 = vmatpush1.msra.mxu0 %v1269
    %2007 = vmatprep.subr.mxu0 0.0
    %2008 = vmatpush1.msra.mxu0 %v1268
    %2009 = vmatprep.subr.mxu0 0.0
    %2010 = vmatpush1.msra.mxu0 %v1267
    %2011 = vmatprep.subr.mxu0 0.0
    %2012 = vmatpush1.msra.mxu0 %v1266
    %2013 = vmatprep.subr.mxu0 0.0
    %2014 = vmatpush1.msra.mxu0 %v1265
    %2015 = vmatprep.subr.mxu0 0.0
    %2016 = vmatpush1.msra.mxu0 %v1264
    %2017 = vmatprep.subr.mxu0 0.0
    %2018 = vmatpush1.msra.mxu0 %v1263
    %2019 = vmatprep.subr.mxu0 0.0
    %2020 = vmatpush1.msra.mxu0 %v1262
    %2021 = vmatprep.subr.mxu0 0.0
    %2022 = vmatpush1.msra.mxu0 %v1261
    %2023 = vmatprep.subr.mxu0 0.0
    %2024 = vmatpush1.msra.mxu0 %v1260
    %2025 = vmatprep.subr.mxu0 0.0
    %2026 = vmatpush1.msra.mxu0 %v1259
    %2027 = vmatprep.subr.mxu0 0.0
    %2028 = vmatpush1.msra.mxu0 %v1258
    %2029 = vmatprep.subr.mxu0 0.0
    %2030 = vmatpush1.msra.mxu0 %v1257
    %2031 = vmatprep.subr.mxu0 0.0
    %2032 = vmatpush2.msra.mxu0 0.0
    %2033 = vmatprep.subr.mxu0 0.0
    %2034 = vmatpush2.msra.mxu0 0.0
    %2035 = vmatprep.subr.mxu0 0.0
    %2036 = vmatpush2.msra.mxu0 0.0
    %2037 = vmatprep.subr.mxu0 0.0
    %2038 = vmatpush2.msra.mxu0 0.0
    %2039 = vmatprep.subr.mxu0 0.0
    %2040 = vmatpush2.msra.mxu0 0.0
    %2041 = vmatprep.subr.mxu0 0.0
    %2042 = vmatpush2.msra.mxu0 0.0
    %2043 = vmatprep.subr.mxu0 0.0
    %2044 = vmatpush2.msra.mxu0 0.0
    %2045 = vmatprep.subr.mxu0 0.0
    %2046 = vmatpush2.msra.mxu0 0.0
    %2047 = vmatprep.subr.mxu0 0.0
    %2048 = vmatpush2.msra.mxu0 0.0
    %2049 = vmatprep.subr.mxu0 0.0
    %2050 = vmatpush2.msra.mxu0 0.0
    %2051 = vmatprep.subr.mxu0 0.0
    %2052 = vmatpush2.msra.mxu0 0.0
    %2053 = vmatprep.subr.mxu0 0.0
    %2054 = vmatpush2.msra.mxu0 0.0
    %2055 = vmatprep.subr.mxu0 0.0
    %2056 = vmatpush2.msra.mxu0 0.0
    %2057 = vmatprep.subr.mxu0 0.0
    %2058 = vmatpush2.msra.mxu0 0.0
    %2059 = vmatprep.subr.mxu0 0.0
    %2060 = vmatpush2.msra.mxu0 0.0
    %2061 = vmatprep.subr.mxu0 0.0
    %2062 = vmatpush2.msra.mxu0 0.0
    %2063 = vmatprep.mubr.f32.mxu0 0.0
    %2064 = vmatmul.mubr.f32.gmra.mxu0 %v1993
    %v2065 = vpop.f32.mrf.mxu0
    %v2066 = vadd.f32 %v1998, %v2065
    %v2067 = vpop.f32.mrf.mxu0
    %2068 = vmatprep.mubr.f32.mxu0 0.0
    %2069 = vmatmul.mubr.f32.gmra.mxu0 %v1994
    %v2070 = vpop.f32.mrf.mxu0
    %v2071 = vadd.f32 %v1998, %v2070
    %v2072 = vpop.f32.mrf.mxu0
    %2073 = vdwg.mxu0
    %v2074 = vadd.f32 %v1906, %v2066
    %v2075 = vadd.f32 %v1907, %v2071
    %v2076 = vsel %vm87, %v2074, 0.0
    %2077 = vadd.xlane.f32.xlu0 %v2076
    %v2078 = vpop.xlane.xlu0 %2077
    %v2079 = vsel %vm87, %v2075, 0.0
    %2080 = vadd.xlane.f32.xlu0 %v2079
    %v2081 = vpop.xlane.xlu0 %2080
    %v2082 = vmul.f32 %v2078, %v991
    %v2083 = vmul.f32 %v2081, %v991
    %v2084 = vmul.f32 %v2074, %v2074
    %v2085 = vmul.f32 %v2075, %v2075
    %v2086 = vsel %vm87, %v2084, 0.0
    %2087 = vadd.xlane.f32.xlu0 %v2086
    %v2088 = vpop.xlane.xlu0 %2087
    %v2089 = vsel %vm87, %v2085, 0.0
    %2090 = vadd.xlane.f32.xlu0 %v2089
    %v2091 = vpop.xlane.xlu0 %2090
    %v2092 = vmul.f32 %v2088, %v991
    %v2093 = vmul.f32 %v2091, %v991
    %v2094 = vmul.f32 %v2082, %v2082
    %v2095 = vmul.f32 %v2083, %v2083
    %v2096 = vsub.f32 %v2092, %v2094
    %v2097 = vsub.f32 %v2093, %v2095
    %v2098 = vsub.f32 %v2074, %v2082
    %v2099 = vsub.f32 %v2075, %v2083
    %v2100 = vadd.f32 %v2096, 1e-05
    %v2101 = vadd.f32 %v2097, 1e-05
    %v2102 = vrsqrt.pop %v2100
    %v2103 = vrsqrt.pop %v2101
    %v2104 = vmul.f32 %v2098, %v2102
    %v2105 = vmul.f32 %v2099, %v2103
    %v2106 = vlaneseq
    %v2107 = vshrl.u32 %v2106, 7
    %v2108 = vsub.s32 6, %v2107
    %v2109 = vrot.slane %v1241, %v2108
    %v2110 = vmul.f32 %v2104, %v2109
    %v2111 = vmul.f32 %v2105, %v2109
    %v2112 = vlaneseq
    %v2113 = vshrl.u32 %v2112, 7
    %v2114 = vsub.s32 7, %v2113
    %v2115 = vrot.slane %v1241, %v2114
    %v2116 = vadd.f32 %v2110, %v2115
    %v2117 = vadd.f32 %v2111, %v2115
    %s2118 = scalar_lea.vmem %s6, 16
    %v2119 = vld [vmem:[%s2118] sm:$0xff]
    %s2120 = scalar_lea.vmem %s3, 64
    %v2121 = vld [vmem:[%s2120] sm:$0xff]
    %v2122 = vld [vmem:[%s2120 + $0x8] sm:$0xff]
    %v2123 = vld [vmem:[%s2120 + $0x10] sm:$0xff]
    %v2124 = vld [vmem:[%s2120 + $0x18] sm:$0xff]
    %s2125 = scalar_lea.vmem %s5, 320
    %v2126 = vld [vmem:[%s2125] sm:$0xff]
    %v2127 = vld [vmem:[%s2125 + $0x8] sm:$0xff]
    %v2128 = vld [vmem:[%s2125 + $0x10] sm:$0xff]
    %v2129 = vld [vmem:[%s2125 + $0x18] sm:$0xff]
    %s2130 = scalar_lea.vmem %s4, 64
    %v2131 = vld [vmem:[%s2130] sm:$0xff]
    %v2132 = vld [vmem:[%s2130 + $0x8] sm:$0xff]
    %v2133 = vld [vmem:[%s2130 + $0x10] sm:$0xff]
    %v2134 = vld [vmem:[%s2130 + $0x18] sm:$0xff]
    %v2135 = vld [vmem:[%s2125 + $0x20] sm:$0xff]
    %v2136 = vld [vmem:[%s2125 + $0x28] sm:$0xff]
    %v2137 = vld [vmem:[%s2125 + $0x30] sm:$0xff]
    %v2138 = vld [vmem:[%s2125 + $0x38] sm:$0xff]
    %v2139 = vld [vmem:[%s2125 + $0x40] sm:$0xff]
    %v2140 = vld [vmem:[%s2125 + $0x48] sm:$0xff]
    %v2141 = vld [vmem:[%s2125 + $0x50] sm:$0xff]
    %v2142 = vld [vmem:[%s2125 + $0x58] sm:$0xff]
    %v2143 = vld [vmem:[%s2125 + $0x60] sm:$0xff]
    %v2144 = vld [vmem:[%s2125 + $0x68] sm:$0xff]
    %v2145 = vld [vmem:[%s2125 + $0x70] sm:$0xff]
    %v2146 = vld [vmem:[%s2125 + $0x78] sm:$0xff]
    %v2147 = vld [vmem:[%s2125 + $0x80] sm:$0xff]
    %v2148 = vld [vmem:[%s2125 + $0x88] sm:$0xff]
    %v2149 = vld [vmem:[%s2125 + $0x90] sm:$0xff]
    %v2150 = vld [vmem:[%s2125 + $0x98] sm:$0xff]
    %v2151 = vlaneseq
    %v2152 = vshrl.u32 %v2151, 7
    %v2153 = vsub.s32 0, %v2152
    %v2154 = vrot.slane %v2119, %v2153
    %v2156 = vsel %vm87, %v2116, 0
    %v2159 = vsel %vm87, %v2117, 0
    %2161 = vmatprep.subr.mxu0 0.0
    %2162 = vmatpush1.msra.mxu0 0.0
    %2163 = vmatprep.subr.mxu0 0.0
    %2164 = vmatpush1.msra.mxu0 0.0
    %2165 = vmatprep.subr.mxu0 0.0
    %2166 = vmatpush1.msra.mxu0 0.0
    %2167 = vmatprep.subr.mxu0 0.0
    %2168 = vmatpush1.msra.mxu0 0.0
    %2169 = vmatprep.subr.mxu0 0.0
    %2170 = vmatpush1.msra.mxu0 0.0
    %2171 = vmatprep.subr.mxu0 0.0
    %2172 = vmatpush1.msra.mxu0 0.0
    %2173 = vmatprep.subr.mxu0 0.0
    %2174 = vmatpush1.msra.mxu0 0.0
    %2175 = vmatprep.subr.mxu0 0.0
    %2176 = vmatpush1.msra.mxu0 0.0
    %2177 = vmatprep.subr.mxu0 0.0
    %2178 = vmatpush1.msra.mxu0 0.0
    %2179 = vmatprep.subr.mxu0 0.0
    %2180 = vmatpush1.msra.mxu0 0.0
    %2181 = vmatprep.subr.mxu0 0.0
    %2182 = vmatpush1.msra.mxu0 0.0
    %2183 = vmatprep.subr.mxu0 0.0
    %2184 = vmatpush1.msra.mxu0 0.0
    %2185 = vmatprep.subr.mxu0 0.0
    %2186 = vmatpush1.msra.mxu0 %v2124
    %2187 = vmatprep.subr.mxu0 0.0
    %2188 = vmatpush1.msra.mxu0 %v2123
    %2189 = vmatprep.subr.mxu0 0.0
    %2190 = vmatpush1.msra.mxu0 %v2122
    %2191 = vmatprep.subr.mxu0 0.0
    %2192 = vmatpush1.msra.mxu0 %v2121
    %2193 = vmatprep.subr.mxu0 0.0
    %2194 = vmatpush2.msra.mxu0 0.0
    %2195 = vmatprep.subr.mxu0 0.0
    %2196 = vmatpush2.msra.mxu0 0.0
    %2197 = vmatprep.subr.mxu0 0.0
    %2198 = vmatpush2.msra.mxu0 0.0
    %2199 = vmatprep.subr.mxu0 0.0
    %2200 = vmatpush2.msra.mxu0 0.0
    %2201 = vmatprep.subr.mxu0 0.0
    %2202 = vmatpush2.msra.mxu0 0.0
    %2203 = vmatprep.subr.mxu0 0.0
    %2204 = vmatpush2.msra.mxu0 0.0
    %2205 = vmatprep.subr.mxu0 0.0
    %2206 = vmatpush2.msra.mxu0 0.0
    %2207 = vmatprep.subr.mxu0 0.0
    %2208 = vmatpush2.msra.mxu0 0.0
    %2209 = vmatprep.subr.mxu0 0.0
    %2210 = vmatpush2.msra.mxu0 0.0
    %2211 = vmatprep.subr.mxu0 0.0
    %2212 = vmatpush2.msra.mxu0 0.0
    %2213 = vmatprep.subr.mxu0 0.0
    %2214 = vmatpush2.msra.mxu0 0.0
    %2215 = vmatprep.subr.mxu0 0.0
    %2216 = vmatpush2.msra.mxu0 0.0
    %2217 = vmatprep.subr.mxu0 0.0
    %2218 = vmatpush2.msra.mxu0 0.0
    %2219 = vmatprep.subr.mxu0 0.0
    %2220 = vmatpush2.msra.mxu0 0.0
    %2221 = vmatprep.subr.mxu0 0.0
    %2222 = vmatpush2.msra.mxu0 0.0
    %2223 = vmatprep.subr.mxu0 0.0
    %2224 = vmatpush2.msra.mxu0 0.0
    %2225 = vmatprep.mubr.f32.mxu0 0.0
    %2226 = vmatmul.mubr.f32.gmra.mxu0 %v2156
    %v2227 = vpop.f32.mrf.mxu0
    %v2228 = vadd.f32 %v2154, %v2227
    %v2229 = vpop.f32.mrf.mxu0
    %2230 = vmatprep.mubr.f32.mxu0 0.0
    %2231 = vmatmul.mubr.f32.gmra.mxu0 %v2159
    %v2232 = vpop.f32.mrf.mxu0
    %v2233 = vadd.f32 %v2154, %v2232
    %v2234 = vpop.f32.mrf.mxu0
    %2235 = vdwg.mxu0
    %v2236 = vmul.f32 %v2228, %v382
    %v2237 = vmul.f32 %v2233, %v384
    %v2238 = vmul.f32 %v2228, %v386
    %v2239 = vmul.f32 %v2233, %v388
    %v2240 = vmul.f32 %v2228, %v390
    %v2241 = vmul.f32 %v2233, %v392
    %v2242 = vmul.f32 %v2228, %v394
    %v2243 = vmul.f32 %v2233, %v396
    %v2244 = vmul.f32 %v2228, %v398
    %v2245 = vmul.f32 %v2233, %v400
    %v2246 = vmul.f32 %v2228, %v402
    %v2247 = vmul.f32 %v2233, %v404
    %v2248 = vmul.f32 %v2228, %v406
    %v2249 = vmul.f32 %v2233, %v408
    %v2250 = vmul.f32 %v2228, %v410
    %v2251 = vmul.f32 %v2233, %v412
    %v2252 = vmul.f32 %v2228, %v446
    %v2253 = vmul.f32 %v2233, %v448
    %v2254 = vmul.f32 %v2228, %v450
    %v2255 = vmul.f32 %v2233, %v452
    %v2256 = vmul.f32 %v2228, %v454
    %v2257 = vmul.f32 %v2233, %v456
    %v2258 = vmul.f32 %v2228, %v458
    %v2259 = vmul.f32 %v2233, %v460
    %v2260 = vmul.f32 %v2228, %v462
    %v2261 = vmul.f32 %v2233, %v464
    %v2262 = vmul.f32 %v2228, %v466
    %v2263 = vmul.f32 %v2233, %v468
    %v2264 = vmul.f32 %v2228, %v470
    %v2265 = vmul.f32 %v2233, %v472
    %v2266 = vmul.f32 %v2228, %v474
    %v2267 = vmul.f32 %v2233, %v476
    %2284 = vrot.lane.b32.xlu0 %v2236, 96
    %v2285 = vpop.permute.xlu0 %2284
    %2286 = vrot.lane.b32.xlu0 %v2237, 96
    %v2287 = vpop.permute.xlu0 %2286
    %2288 = vrot.lane.b32.xlu0 %v2238, 96
    %v2289 = vpop.permute.xlu0 %2288
    %2290 = vrot.lane.b32.xlu0 %v2239, 96
    %v2291 = vpop.permute.xlu0 %2290
    %2292 = vrot.lane.b32.xlu0 %v2240, 96
    %v2293 = vpop.permute.xlu0 %2292
    %2294 = vrot.lane.b32.xlu0 %v2241, 96
    %v2295 = vpop.permute.xlu0 %2294
    %2296 = vrot.lane.b32.xlu0 %v2242, 96
    %v2297 = vpop.permute.xlu0 %2296
    %2298 = vrot.lane.b32.xlu0 %v2243, 96
    %v2299 = vpop.permute.xlu0 %2298
    %2300 = vrot.lane.b32.xlu0 %v2244, 96
    %v2301 = vpop.permute.xlu0 %2300
    %2302 = vrot.lane.b32.xlu0 %v2245, 96
    %v2303 = vpop.permute.xlu0 %2302
    %2304 = vrot.lane.b32.xlu0 %v2246, 96
    %v2305 = vpop.permute.xlu0 %2304
    %2306 = vrot.lane.b32.xlu0 %v2247, 96
    %v2307 = vpop.permute.xlu0 %2306
    %2308 = vrot.lane.b32.xlu0 %v2248, 96
    %v2309 = vpop.permute.xlu0 %2308
    %2310 = vrot.lane.b32.xlu0 %v2249, 96
    %v2311 = vpop.permute.xlu0 %2310
    %2312 = vrot.lane.b32.xlu0 %v2250, 96
    %v2313 = vpop.permute.xlu0 %2312
    %2314 = vrot.lane.b32.xlu0 %v2251, 96
    %v2315 = vpop.permute.xlu0 %2314
    %v2317 = vsel %vm87, %v2228, 0
    %v2320 = vsel %vm87, %v2233, 0
    %v2322 = vsel %vm87, %v2285, 0
    %v2324 = vsel %vm87, %v2287, 0
    %v2326 = vsel %vm87, %v2289, 0
    %v2328 = vsel %vm87, %v2291, 0
    %v2330 = vsel %vm87, %v2293, 0
    %v2332 = vsel %vm87, %v2295, 0
    %v2334 = vsel %vm87, %v2297, 0
    %v2336 = vsel %vm87, %v2299, 0
    %v2338 = vsel %vm87, %v2301, 0
    %v2340 = vsel %vm87, %v2303, 0
    %v2342 = vsel %vm87, %v2305, 0
    %v2344 = vsel %vm87, %v2307, 0
    %v2346 = vsel %vm87, %v2309, 0
    %v2348 = vsel %vm87, %v2311, 0
    %v2350 = vsel %vm87, %v2313, 0
    %v2352 = vsel %vm87, %v2315, 0
    %2354 = vmatprep.subr.mxu0 0.0
    %2355 = vmatpush1.xpose.msra.mxu0 %v2352
    %2356 = vmatprep.subr.mxu0 0.0
    %2357 = vmatpush1.xpose.msra.mxu0 %v2350
    %2358 = vmatprep.subr.mxu0 0.0
    %2359 = vmatpush1.xpose.msra.mxu0 %v2348
    %2360 = vmatprep.subr.mxu0 0.0
    %2361 = vmatpush1.xpose.msra.mxu0 %v2346
    %2362 = vmatprep.subr.mxu0 0.0
    %2363 = vmatpush1.xpose.msra.mxu0 %v2344
    %2364 = vmatprep.subr.mxu0 0.0
    %2365 = vmatpush1.xpose.msra.mxu0 %v2342
    %2366 = vmatprep.subr.mxu0 0.0
    %2367 = vmatpush1.xpose.msra.mxu0 %v2340
    %2368 = vmatprep.subr.mxu0 0.0
    %2369 = vmatpush1.xpose.msra.mxu0 %v2338
    %2370 = vmatprep.subr.mxu0 0.0
    %2371 = vmatpush1.xpose.msra.mxu0 %v2336
    %2372 = vmatprep.subr.mxu0 0.0
    %2373 = vmatpush1.xpose.msra.mxu0 %v2334
    %2374 = vmatprep.subr.mxu0 0.0
    %2375 = vmatpush1.xpose.msra.mxu0 %v2332
    %2376 = vmatprep.subr.mxu0 0.0
    %2377 = vmatpush1.xpose.msra.mxu0 %v2330
    %2378 = vmatprep.subr.mxu0 0.0
    %2379 = vmatpush1.xpose.msra.mxu0 %v2328
    %2380 = vmatprep.subr.mxu0 0.0
    %2381 = vmatpush1.xpose.msra.mxu0 %v2326
    %2382 = vmatprep.subr.mxu0 0.0
    %2383 = vmatpush1.xpose.msra.mxu0 %v2324
    %2384 = vmatprep.subr.mxu0 0.0
    %2385 = vmatpush1.xpose.msra.mxu0 %v2322
    %2386 = vmatprep.subr.mxu0 0.0
    %2387 = vmatpush2.xpose.msra.mxu0 0.0
    %2388 = vmatprep.subr.mxu0 0.0
    %2389 = vmatpush2.xpose.msra.mxu0 0.0
    %2390 = vmatprep.subr.mxu0 0.0
    %2391 = vmatpush2.xpose.msra.mxu0 0.0
    %2392 = vmatprep.subr.mxu0 0.0
    %2393 = vmatpush2.xpose.msra.mxu0 0.0
    %2394 = vmatprep.subr.mxu0 0.0
    %2395 = vmatpush2.xpose.msra.mxu0 0.0
    %2396 = vmatprep.subr.mxu0 0.0
    %2397 = vmatpush2.xpose.msra.mxu0 0.0
    %2398 = vmatprep.subr.mxu0 0.0
    %2399 = vmatpush2.xpose.msra.mxu0 0.0
    %2400 = vmatprep.subr.mxu0 0.0
    %2401 = vmatpush2.xpose.msra.mxu0 0.0
    %2402 = vmatprep.subr.mxu0 0.0
    %2403 = vmatpush2.xpose.msra.mxu0 0.0
    %2404 = vmatprep.subr.mxu0 0.0
    %2405 = vmatpush2.xpose.msra.mxu0 0.0
    %2406 = vmatprep.subr.mxu0 0.0
    %2407 = vmatpush2.xpose.msra.mxu0 0.0
    %2408 = vmatprep.subr.mxu0 0.0
    %2409 = vmatpush2.xpose.msra.mxu0 0.0
    %2410 = vmatprep.subr.mxu0 0.0
    %2411 = vmatpush2.xpose.msra.mxu0 0.0
    %2412 = vmatprep.subr.mxu0 0.0
    %2413 = vmatpush2.xpose.msra.mxu0 0.0
    %2414 = vmatprep.subr.mxu0 0.0
    %2415 = vmatpush2.xpose.msra.mxu0 0.0
    %2416 = vmatprep.subr.mxu0 0.0
    %2417 = vmatpush2.xpose.msra.mxu0 0.0
    %2418 = vmatprep.mubr.f32.mxu0 0.0
    %2419 = vmatmul.mubr.f32.gmra.mxu0 %v2317
    %v2420 = vpop.f32.mrf.mxu0
    %v2421 = vadd.f32 %v67, %v2420
    %v2422 = vpop.f32.mrf.mxu0
    %2423 = vmatprep.mubr.f32.mxu0 0.0
    %2424 = vmatmul.mubr.f32.gmra.mxu0 %v2320
    %v2425 = vpop.f32.mrf.mxu0
    %v2426 = vadd.f32 %v68, %v2425
    %v2427 = vpop.f32.mrf.mxu0
    %2428 = vdwg.mxu0
    %2429 = vmax.xlane.f32.xlu0 %v2421
    %v2430 = vpop.xlane.xlu0 %2429
    %2431 = vmax.xlane.f32.xlu0 %v2426
    %v2432 = vpop.xlane.xlu0 %2431
    %v2433 = vsub.f32 %v2421, %v2430
    %v2434 = vsub.f32 %v2426, %v2432
    %v2435 = vmul.f32 %v2433, 1.442695
    %v2436 = vpow.pop %v2435
    %v2437 = vmul.f32 %v2434, 1.442695
    %v2438 = vpow.pop %v2437
    %2439 = vmatprep.subr.mxu0 0.0
    %2440 = vmatpush1.msra.mxu0 %v48
    %2441 = vmatprep.subr.mxu0 0.0
    %2442 = vmatpush1.msra.mxu0 %v47
    %2443 = vmatprep.subr.mxu0 0.0
    %2444 = vmatpush1.msra.mxu0 %v46
    %2445 = vmatprep.subr.mxu0 0.0
    %2446 = vmatpush1.msra.mxu0 %v45
    %2447 = vmatprep.subr.mxu0 0.0
    %2448 = vmatpush1.msra.mxu0 %v44
    %2449 = vmatprep.subr.mxu0 0.0
    %2450 = vmatpush1.msra.mxu0 %v43
    %2451 = vmatprep.subr.mxu0 0.0
    %2452 = vmatpush1.msra.mxu0 %v42
    %2453 = vmatprep.subr.mxu0 0.0
    %2454 = vmatpush1.msra.mxu0 %v41
    %2455 = vmatprep.subr.mxu0 0.0
    %2456 = vmatpush1.msra.mxu0 %v40
    %2457 = vmatprep.subr.mxu0 0.0
    %2458 = vmatpush1.msra.mxu0 %v39
    %2459 = vmatprep.subr.mxu0 0.0
    %2460 = vmatpush1.msra.mxu0 %v38
    %2461 = vmatprep.subr.mxu0 0.0
    %2462 = vmatpush1.msra.mxu0 %v37
    %2463 = vmatprep.subr.mxu0 0.0
    %2464 = vmatpush1.msra.mxu0 %v36
    %2465 = vmatprep.subr.mxu0 0.0
    %2466 = vmatpush1.msra.mxu0 %v35
    %2467 = vmatprep.subr.mxu0 0.0
    %2468 = vmatpush1.msra.mxu0 %v34
    %2469 = vmatprep.subr.mxu0 0.0
    %2470 = vmatpush1.msra.mxu0 %v33
    %2471 = vmatprep.subr.mxu0 0.0
    %2472 = vmatpush2.msra.mxu0 0.0
    %2473 = vmatprep.subr.mxu0 0.0
    %2474 = vmatpush2.msra.mxu0 0.0
    %2475 = vmatprep.subr.mxu0 0.0
    %2476 = vmatpush2.msra.mxu0 0.0
    %2477 = vmatprep.subr.mxu0 0.0
    %2478 = vmatpush2.msra.mxu0 0.0
    %2479 = vmatprep.subr.mxu0 0.0
    %2480 = vmatpush2.msra.mxu0 0.0
    %2481 = vmatprep.subr.mxu0 0.0
    %2482 = vmatpush2.msra.mxu0 0.0
    %2483 = vmatprep.subr.mxu0 0.0
    %2484 = vmatpush2.msra.mxu0 0.0
    %2485 = vmatprep.subr.mxu0 0.0
    %2486 = vmatpush2.msra.mxu0 0.0
    %2487 = vmatprep.subr.mxu0 0.0
    %2488 = vmatpush2.msra.mxu0 0.0
    %2489 = vmatprep.subr.mxu0 0.0
    %2490 = vmatpush2.msra.mxu0 0.0
    %2491 = vmatprep.subr.mxu0 0.0
    %2492 = vmatpush2.msra.mxu0 0.0
    %2493 = vmatprep.subr.mxu0 0.0
    %2494 = vmatpush2.msra.mxu0 0.0
    %2495 = vmatprep.subr.mxu0 0.0
    %2496 = vmatpush2.msra.mxu0 0.0
    %2497 = vmatprep.subr.mxu0 0.0
    %2498 = vmatpush2.msra.mxu0 0.0
    %2499 = vmatprep.subr.mxu0 0.0
    %2500 = vmatpush2.msra.mxu0 0.0
    %2501 = vmatprep.subr.mxu0 0.0
    %2502 = vmatpush2.msra.mxu0 0.0
    %2503 = vmatprep.mubr.f32.mxu0 0.0
    %2504 = vmatmul.mubr.f32.gmra.mxu0 %v2436
    %v2505 = vpop.f32.mrf.mxu0
    %v2506 = vadd.f32 0.0, %v2505
    %v2507 = vpop.f32.mrf.mxu0
    %2508 = vmatprep.mubr.f32.mxu0 0.0
    %2509 = vmatmul.mubr.f32.gmra.mxu0 %v2438
    %v2510 = vpop.f32.mrf.mxu0
    %v2511 = vadd.f32 0.0, %v2510
    %v2512 = vpop.f32.mrf.mxu0
    %2513 = vdwg.mxu0
    %v2514 = vrcp.pop %v2506
    %v2515 = vrcp.pop %v2511
    %v2516 = vmul.f32 %v2436, %v2514
    %v2517 = vmul.f32 %v2438, %v2515
    %2534 = vrot.lane.b32.xlu0 %v2252, 64
    %v2535 = vpop.permute.xlu0 %2534
    %2536 = vrot.lane.b32.xlu0 %v2253, 64
    %v2537 = vpop.permute.xlu0 %2536
    %2538 = vrot.lane.b32.xlu0 %v2254, 64
    %v2539 = vpop.permute.xlu0 %2538
    %2540 = vrot.lane.b32.xlu0 %v2255, 64
    %v2541 = vpop.permute.xlu0 %2540
    %2542 = vrot.lane.b32.xlu0 %v2256, 64
    %v2543 = vpop.permute.xlu0 %2542
    %2544 = vrot.lane.b32.xlu0 %v2257, 64
    %v2545 = vpop.permute.xlu0 %2544
    %2546 = vrot.lane.b32.xlu0 %v2258, 64
    %v2547 = vpop.permute.xlu0 %2546
    %2548 = vrot.lane.b32.xlu0 %v2259, 64
    %v2549 = vpop.permute.xlu0 %2548
    %2550 = vrot.lane.b32.xlu0 %v2260, 64
    %v2551 = vpop.permute.xlu0 %2550
    %2552 = vrot.lane.b32.xlu0 %v2261, 64
    %v2553 = vpop.permute.xlu0 %2552
    %2554 = vrot.lane.b32.xlu0 %v2262, 64
    %v2555 = vpop.permute.xlu0 %2554
    %2556 = vrot.lane.b32.xlu0 %v2263, 64
    %v2557 = vpop.permute.xlu0 %2556
    %2558 = vrot.lane.b32.xlu0 %v2264, 64
    %v2559 = vpop.permute.xlu0 %2558
    %2560 = vrot.lane.b32.xlu0 %v2265, 64
    %v2561 = vpop.permute.xlu0 %2560
    %2562 = vrot.lane.b32.xlu0 %v2266, 64
    %v2563 = vpop.permute.xlu0 %2562
    %2564 = vrot.lane.b32.xlu0 %v2267, 64
    %v2565 = vpop.permute.xlu0 %2564
    %2582 = vmatprep.subr.mxu0 0.0
    %2583 = vmatpush1.msra.mxu0 %v2565
    %2584 = vmatprep.subr.mxu0 0.0
    %2585 = vmatpush1.msra.mxu0 %v2563
    %2586 = vmatprep.subr.mxu0 0.0
    %2587 = vmatpush1.msra.mxu0 %v2561
    %2588 = vmatprep.subr.mxu0 0.0
    %2589 = vmatpush1.msra.mxu0 %v2559
    %2590 = vmatprep.subr.mxu0 0.0
    %2591 = vmatpush1.msra.mxu0 %v2557
    %2592 = vmatprep.subr.mxu0 0.0
    %2593 = vmatpush1.msra.mxu0 %v2555
    %2594 = vmatprep.subr.mxu0 0.0
    %2595 = vmatpush1.msra.mxu0 %v2553
    %2596 = vmatprep.subr.mxu0 0.0
    %2597 = vmatpush1.msra.mxu0 %v2551
    %2598 = vmatprep.subr.mxu0 0.0
    %2599 = vmatpush1.msra.mxu0 %v2549
    %2600 = vmatprep.subr.mxu0 0.0
    %2601 = vmatpush1.msra.mxu0 %v2547
    %2602 = vmatprep.subr.mxu0 0.0
    %2603 = vmatpush1.msra.mxu0 %v2545
    %2604 = vmatprep.subr.mxu0 0.0
    %2605 = vmatpush1.msra.mxu0 %v2543
    %2606 = vmatprep.subr.mxu0 0.0
    %2607 = vmatpush1.msra.mxu0 %v2541
    %2608 = vmatprep.subr.mxu0 0.0
    %2609 = vmatpush1.msra.mxu0 %v2539
    %2610 = vmatprep.subr.mxu0 0.0
    %2611 = vmatpush1.msra.mxu0 %v2537
    %2612 = vmatprep.subr.mxu0 0.0
    %2613 = vmatpush1.msra.mxu0 %v2535
    %2614 = vmatprep.subr.mxu0 0.0
    %2615 = vmatpush2.msra.mxu0 0.0
    %2616 = vmatprep.subr.mxu0 0.0
    %2617 = vmatpush2.msra.mxu0 0.0
    %2618 = vmatprep.subr.mxu0 0.0
    %2619 = vmatpush2.msra.mxu0 0.0
    %2620 = vmatprep.subr.mxu0 0.0
    %2621 = vmatpush2.msra.mxu0 0.0
    %2622 = vmatprep.subr.mxu0 0.0
    %2623 = vmatpush2.msra.mxu0 0.0
    %2624 = vmatprep.subr.mxu0 0.0
    %2625 = vmatpush2.msra.mxu0 0.0
    %2626 = vmatprep.subr.mxu0 0.0
    %2627 = vmatpush2.msra.mxu0 0.0
    %2628 = vmatprep.subr.mxu0 0.0
    %2629 = vmatpush2.msra.mxu0 0.0
    %2630 = vmatprep.subr.mxu0 0.0
    %2631 = vmatpush2.msra.mxu0 0.0
    %2632 = vmatprep.subr.mxu0 0.0
    %2633 = vmatpush2.msra.mxu0 0.0
    %2634 = vmatprep.subr.mxu0 0.0
    %2635 = vmatpush2.msra.mxu0 0.0
    %2636 = vmatprep.subr.mxu0 0.0
    %2637 = vmatpush2.msra.mxu0 0.0
    %2638 = vmatprep.subr.mxu0 0.0
    %2639 = vmatpush2.msra.mxu0 0.0
    %2640 = vmatprep.subr.mxu0 0.0
    %2641 = vmatpush2.msra.mxu0 0.0
    %2642 = vmatprep.subr.mxu0 0.0
    %2643 = vmatpush2.msra.mxu0 0.0
    %2644 = vmatprep.subr.mxu0 0.0
    %2645 = vmatpush2.msra.mxu0 0.0
    %2646 = vmatprep.mubr.f32.mxu0 0.0
    %2647 = vmatmul.mubr.f32.gmra.mxu0 %v2516
    %v2648 = vpop.f32.mrf.mxu0
    %v2649 = vadd.f32 0.0, %v2648
    %v2650 = vpop.f32.mrf.mxu0
    %2651 = vmatprep.mubr.f32.mxu0 0.0
    %2652 = vmatmul.mubr.f32.gmra.mxu0 %v2517
    %v2653 = vpop.f32.mrf.mxu0
    %v2654 = vadd.f32 0.0, %v2653
    %v2655 = vpop.f32.mrf.mxu0
    %2656 = vdwg.mxu0
    %v2657 = vlaneseq
    %v2658 = vshrl.u32 %v2657, 7
    %v2659 = vsub.s32 1, %v2658
    %v2660 = vrot.slane %v2119, %v2659
    %v2662 = vsel %vm87, %v2649, 0
    %v2665 = vsel %vm87, %v2654, 0
    %2667 = vmatprep.subr.mxu0 0.0
    %2668 = vmatpush1.msra.mxu0 0.0
    %2669 = vmatprep.subr.mxu0 0.0
    %2670 = vmatpush1.msra.mxu0 0.0
    %2671 = vmatprep.subr.mxu0 0.0
    %2672 = vmatpush1.msra.mxu0 0.0
    %2673 = vmatprep.subr.mxu0 0.0
    %2674 = vmatpush1.msra.mxu0 0.0
    %2675 = vmatprep.subr.mxu0 0.0
    %2676 = vmatpush1.msra.mxu0 0.0
    %2677 = vmatprep.subr.mxu0 0.0
    %2678 = vmatpush1.msra.mxu0 0.0
    %2679 = vmatprep.subr.mxu0 0.0
    %2680 = vmatpush1.msra.mxu0 0.0
    %2681 = vmatprep.subr.mxu0 0.0
    %2682 = vmatpush1.msra.mxu0 0.0
    %2683 = vmatprep.subr.mxu0 0.0
    %2684 = vmatpush1.msra.mxu0 0.0
    %2685 = vmatprep.subr.mxu0 0.0
    %2686 = vmatpush1.msra.mxu0 0.0
    %2687 = vmatprep.subr.mxu0 0.0
    %2688 = vmatpush1.msra.mxu0 0.0
    %2689 = vmatprep.subr.mxu0 0.0
    %2690 = vmatpush1.msra.mxu0 0.0
    %2691 = vmatprep.subr.mxu0 0.0
    %2692 = vmatpush1.msra.mxu0 %v2129
    %2693 = vmatprep.subr.mxu0 0.0
    %2694 = vmatpush1.msra.mxu0 %v2128
    %2695 = vmatprep.subr.mxu0 0.0
    %2696 = vmatpush1.msra.mxu0 %v2127
    %2697 = vmatprep.subr.mxu0 0.0
    %2698 = vmatpush1.msra.mxu0 %v2126
    %2699 = vmatprep.subr.mxu0 0.0
    %2700 = vmatpush2.msra.mxu0 0.0
    %2701 = vmatprep.subr.mxu0 0.0
    %2702 = vmatpush2.msra.mxu0 0.0
    %2703 = vmatprep.subr.mxu0 0.0
    %2704 = vmatpush2.msra.mxu0 0.0
    %2705 = vmatprep.subr.mxu0 0.0
    %2706 = vmatpush2.msra.mxu0 0.0
    %2707 = vmatprep.subr.mxu0 0.0
    %2708 = vmatpush2.msra.mxu0 0.0
    %2709 = vmatprep.subr.mxu0 0.0
    %2710 = vmatpush2.msra.mxu0 0.0
    %2711 = vmatprep.subr.mxu0 0.0
    %2712 = vmatpush2.msra.mxu0 0.0
    %2713 = vmatprep.subr.mxu0 0.0
    %2714 = vmatpush2.msra.mxu0 0.0
    %2715 = vmatprep.subr.mxu0 0.0
    %2716 = vmatpush2.msra.mxu0 0.0
    %2717 = vmatprep.subr.mxu0 0.0
    %2718 = vmatpush2.msra.mxu0 0.0
    %2719 = vmatprep.subr.mxu0 0.0
    %2720 = vmatpush2.msra.mxu0 0.0
    %2721 = vmatprep.subr.mxu0 0.0
    %2722 = vmatpush2.msra.mxu0 0.0
    %2723 = vmatprep.subr.mxu0 0.0
    %2724 = vmatpush2.msra.mxu0 0.0
    %2725 = vmatprep.subr.mxu0 0.0
    %2726 = vmatpush2.msra.mxu0 0.0
    %2727 = vmatprep.subr.mxu0 0.0
    %2728 = vmatpush2.msra.mxu0 0.0
    %2729 = vmatprep.subr.mxu0 0.0
    %2730 = vmatpush2.msra.mxu0 0.0
    %2731 = vmatprep.mubr.f32.mxu0 0.0
    %2732 = vmatmul.mubr.f32.gmra.mxu0 %v2662
    %v2733 = vpop.f32.mrf.mxu0
    %v2734 = vadd.f32 %v2660, %v2733
    %v2735 = vpop.f32.mrf.mxu0
    %2736 = vmatprep.mubr.f32.mxu0 0.0
    %2737 = vmatmul.mubr.f32.gmra.mxu0 %v2665
    %v2738 = vpop.f32.mrf.mxu0
    %v2739 = vadd.f32 %v2660, %v2738
    %v2740 = vpop.f32.mrf.mxu0
    %2741 = vdwg.mxu0
    %v2742 = vadd.f32 %v2116, %v2734
    %v2743 = vadd.f32 %v2117, %v2739
    %v2744 = vsel %vm87, %v2742, 0.0
    %2745 = vadd.xlane.f32.xlu0 %v2744
    %v2746 = vpop.xlane.xlu0 %2745
    %v2747 = vsel %vm87, %v2743, 0.0
    %2748 = vadd.xlane.f32.xlu0 %v2747
    %v2749 = vpop.xlane.xlu0 %2748
    %v2750 = vmul.f32 %v2746, %v991
    %v2751 = vmul.f32 %v2749, %v991
    %v2752 = vmul.f32 %v2742, %v2742
    %v2753 = vmul.f32 %v2743, %v2743
    %v2754 = vsel %vm87, %v2752, 0.0
    %2755 = vadd.xlane.f32.xlu0 %v2754
    %v2756 = vpop.xlane.xlu0 %2755
    %v2757 = vsel %vm87, %v2753, 0.0
    %2758 = vadd.xlane.f32.xlu0 %v2757
    %v2759 = vpop.xlane.xlu0 %2758
    %v2760 = vmul.f32 %v2756, %v991
    %v2761 = vmul.f32 %v2759, %v991
    %v2762 = vmul.f32 %v2750, %v2750
    %v2763 = vmul.f32 %v2751, %v2751
    %v2764 = vsub.f32 %v2760, %v2762
    %v2765 = vsub.f32 %v2761, %v2763
    %v2766 = vsub.f32 %v2742, %v2750
    %v2767 = vsub.f32 %v2743, %v2751
    %v2768 = vadd.f32 %v2764, 1e-05
    %v2769 = vadd.f32 %v2765, 1e-05
    %v2770 = vrsqrt.pop %v2768
    %v2771 = vrsqrt.pop %v2769
    %v2772 = vmul.f32 %v2766, %v2770
    %v2773 = vmul.f32 %v2767, %v2771
    %v2774 = vlaneseq
    %v2775 = vshrl.u32 %v2774, 7
    %v2776 = vsub.s32 2, %v2775
    %v2777 = vrot.slane %v2119, %v2776
    %v2778 = vmul.f32 %v2772, %v2777
    %v2779 = vmul.f32 %v2773, %v2777
    %v2780 = vlaneseq
    %v2781 = vshrl.u32 %v2780, 7
    %v2782 = vsub.s32 3, %v2781
    %v2783 = vrot.slane %v2119, %v2782
    %v2784 = vadd.f32 %v2778, %v2783
    %v2785 = vadd.f32 %v2779, %v2783
    %v2786 = vlaneseq
    %v2787 = vshrl.u32 %v2786, 7
    %v2788 = vsub.s32 4, %v2787
    %v2789 = vrot.slane %v2119, %v2788
    %v2791 = vsel %vm87, %v2784, 0
    %v2794 = vsel %vm87, %v2785, 0
    %2796 = vmatprep.subr.mxu0 0.0
    %2797 = vmatpush1.msra.mxu0 0.0
    %2798 = vmatprep.subr.mxu0 0.0
    %2799 = vmatpush1.msra.mxu0 0.0
    %2800 = vmatprep.subr.mxu0 0.0
    %2801 = vmatpush1.msra.mxu0 0.0
    %2802 = vmatprep.subr.mxu0 0.0
    %2803 = vmatpush1.msra.mxu0 0.0
    %2804 = vmatprep.subr.mxu0 0.0
    %2805 = vmatpush1.msra.mxu0 0.0
    %2806 = vmatprep.subr.mxu0 0.0
    %2807 = vmatpush1.msra.mxu0 0.0
    %2808 = vmatprep.subr.mxu0 0.0
    %2809 = vmatpush1.msra.mxu0 0.0
    %2810 = vmatprep.subr.mxu0 0.0
    %2811 = vmatpush1.msra.mxu0 0.0
    %2812 = vmatprep.subr.mxu0 0.0
    %2813 = vmatpush1.msra.mxu0 0.0
    %2814 = vmatprep.subr.mxu0 0.0
    %2815 = vmatpush1.msra.mxu0 0.0
    %2816 = vmatprep.subr.mxu0 0.0
    %2817 = vmatpush1.msra.mxu0 0.0
    %2818 = vmatprep.subr.mxu0 0.0
    %2819 = vmatpush1.msra.mxu0 0.0
    %2820 = vmatprep.subr.mxu0 0.0
    %2821 = vmatpush1.msra.mxu0 %v2134
    %2822 = vmatprep.subr.mxu0 0.0
    %2823 = vmatpush1.msra.mxu0 %v2133
    %2824 = vmatprep.subr.mxu0 0.0
    %2825 = vmatpush1.msra.mxu0 %v2132
    %2826 = vmatprep.subr.mxu0 0.0
    %2827 = vmatpush1.msra.mxu0 %v2131
    %2828 = vmatprep.subr.mxu0 0.0
    %2829 = vmatpush2.msra.mxu0 0.0
    %2830 = vmatprep.subr.mxu0 0.0
    %2831 = vmatpush2.msra.mxu0 0.0
    %2832 = vmatprep.subr.mxu0 0.0
    %2833 = vmatpush2.msra.mxu0 0.0
    %2834 = vmatprep.subr.mxu0 0.0
    %2835 = vmatpush2.msra.mxu0 0.0
    %2836 = vmatprep.subr.mxu0 0.0
    %2837 = vmatpush2.msra.mxu0 0.0
    %2838 = vmatprep.subr.mxu0 0.0
    %2839 = vmatpush2.msra.mxu0 0.0
    %2840 = vmatprep.subr.mxu0 0.0
    %2841 = vmatpush2.msra.mxu0 0.0
    %2842 = vmatprep.subr.mxu0 0.0
    %2843 = vmatpush2.msra.mxu0 0.0
    %2844 = vmatprep.subr.mxu0 0.0
    %2845 = vmatpush2.msra.mxu0 0.0
    %2846 = vmatprep.subr.mxu0 0.0
    %2847 = vmatpush2.msra.mxu0 0.0
    %2848 = vmatprep.subr.mxu0 0.0
    %2849 = vmatpush2.msra.mxu0 0.0
    %2850 = vmatprep.subr.mxu0 0.0
    %2851 = vmatpush2.msra.mxu0 0.0
    %2852 = vmatprep.subr.mxu0 0.0
    %2853 = vmatpush2.msra.mxu0 0.0
    %2854 = vmatprep.subr.mxu0 0.0
    %2855 = vmatpush2.msra.mxu0 0.0
    %2856 = vmatprep.subr.mxu0 0.0
    %2857 = vmatpush2.msra.mxu0 0.0
    %2858 = vmatprep.subr.mxu0 0.0
    %2859 = vmatpush2.msra.mxu0 0.0
    %2860 = vmatprep.mubr.f32.mxu0 0.0
    %2861 = vmatmul.mubr.f32.gmra.mxu0 %v2791
    %v2862 = vpop.f32.mrf.mxu0
    %v2863 = vadd.f32 %v2789, %v2862
    %v2864 = vpop.f32.mrf.mxu0
    %2865 = vmatprep.mubr.f32.mxu0 0.0
    %2866 = vmatmul.mubr.f32.gmra.mxu0 %v2794
    %v2867 = vpop.f32.mrf.mxu0
    %v2868 = vadd.f32 %v2789, %v2867
    %v2869 = vpop.f32.mrf.mxu0
    %2870 = vdwg.mxu0
    %v2871 = vmax.f32 %v2863, 0.0
    %v2872 = vmax.f32 %v2868, 0.0
    %v2873 = vlaneseq
    %v2874 = vshrl.u32 %v2873, 7
    %v2875 = vsub.s32 5, %v2874
    %v2876 = vrot.slane %v2119, %v2875
    %2877 = vmatprep.subr.mxu0 0.0
    %2878 = vmatpush1.msra.mxu0 %v2150
    %2879 = vmatprep.subr.mxu0 0.0
    %2880 = vmatpush1.msra.mxu0 %v2149
    %2881 = vmatprep.subr.mxu0 0.0
    %2882 = vmatpush1.msra.mxu0 %v2148
    %2883 = vmatprep.subr.mxu0 0.0
    %2884 = vmatpush1.msra.mxu0 %v2147
    %2885 = vmatprep.subr.mxu0 0.0
    %2886 = vmatpush1.msra.mxu0 %v2146
    %2887 = vmatprep.subr.mxu0 0.0
    %2888 = vmatpush1.msra.mxu0 %v2145
    %2889 = vmatprep.subr.mxu0 0.0
    %2890 = vmatpush1.msra.mxu0 %v2144
    %2891 = vmatprep.subr.mxu0 0.0
    %2892 = vmatpush1.msra.mxu0 %v2143
    %2893 = vmatprep.subr.mxu0 0.0
    %2894 = vmatpush1.msra.mxu0 %v2142
    %2895 = vmatprep.subr.mxu0 0.0
    %2896 = vmatpush1.msra.mxu0 %v2141
    %2897 = vmatprep.subr.mxu0 0.0
    %2898 = vmatpush1.msra.mxu0 %v2140
    %2899 = vmatprep.subr.mxu0 0.0
    %2900 = vmatpush1.msra.mxu0 %v2139
    %2901 = vmatprep.subr.mxu0 0.0
    %2902 = vmatpush1.msra.mxu0 %v2138
    %2903 = vmatprep.subr.mxu0 0.0
    %2904 = vmatpush1.msra.mxu0 %v2137
    %2905 = vmatprep.subr.mxu0 0.0
    %2906 = vmatpush1.msra.mxu0 %v2136
    %2907 = vmatprep.subr.mxu0 0.0
    %2908 = vmatpush1.msra.mxu0 %v2135
    %2909 = vmatprep.subr.mxu0 0.0
    %2910 = vmatpush2.msra.mxu0 0.0
    %2911 = vmatprep.subr.mxu0 0.0
    %2912 = vmatpush2.msra.mxu0 0.0
    %2913 = vmatprep.subr.mxu0 0.0
    %2914 = vmatpush2.msra.mxu0 0.0
    %2915 = vmatprep.subr.mxu0 0.0
    %2916 = vmatpush2.msra.mxu0 0.0
    %2917 = vmatprep.subr.mxu0 0.0
    %2918 = vmatpush2.msra.mxu0 0.0
    %2919 = vmatprep.subr.mxu0 0.0
    %2920 = vmatpush2.msra.mxu0 0.0
    %2921 = vmatprep.subr.mxu0 0.0
    %2922 = vmatpush2.msra.mxu0 0.0
    %2923 = vmatprep.subr.mxu0 0.0
    %2924 = vmatpush2.msra.mxu0 0.0
    %2925 = vmatprep.subr.mxu0 0.0
    %2926 = vmatpush2.msra.mxu0 0.0
    %2927 = vmatprep.subr.mxu0 0.0
    %2928 = vmatpush2.msra.mxu0 0.0
    %2929 = vmatprep.subr.mxu0 0.0
    %2930 = vmatpush2.msra.mxu0 0.0
    %2931 = vmatprep.subr.mxu0 0.0
    %2932 = vmatpush2.msra.mxu0 0.0
    %2933 = vmatprep.subr.mxu0 0.0
    %2934 = vmatpush2.msra.mxu0 0.0
    %2935 = vmatprep.subr.mxu0 0.0
    %2936 = vmatpush2.msra.mxu0 0.0
    %2937 = vmatprep.subr.mxu0 0.0
    %2938 = vmatpush2.msra.mxu0 0.0
    %2939 = vmatprep.subr.mxu0 0.0
    %2940 = vmatpush2.msra.mxu0 0.0
    %2941 = vmatprep.mubr.f32.mxu0 0.0
    %2942 = vmatmul.mubr.f32.gmra.mxu0 %v2871
    %v2943 = vpop.f32.mrf.mxu0
    %v2944 = vadd.f32 %v2876, %v2943
    %v2945 = vpop.f32.mrf.mxu0
    %2946 = vmatprep.mubr.f32.mxu0 0.0
    %2947 = vmatmul.mubr.f32.gmra.mxu0 %v2872
    %v2948 = vpop.f32.mrf.mxu0
    %v2949 = vadd.f32 %v2876, %v2948
    %v2950 = vpop.f32.mrf.mxu0
    %2951 = vdwg.mxu0
    %v2952 = vadd.f32 %v2784, %v2944
    %v2953 = vadd.f32 %v2785, %v2949
    %v2954 = vsel %vm87, %v2952, 0.0
    %2955 = vadd.xlane.f32.xlu0 %v2954
    %v2956 = vpop.xlane.xlu0 %2955
    %v2957 = vsel %vm87, %v2953, 0.0
    %2958 = vadd.xlane.f32.xlu0 %v2957
    %v2959 = vpop.xlane.xlu0 %2958
    %v2960 = vmul.f32 %v2956, %v991
    %v2961 = vmul.f32 %v2959, %v991
    %v2962 = vmul.f32 %v2952, %v2952
    %v2963 = vmul.f32 %v2953, %v2953
    %v2964 = vsel %vm87, %v2962, 0.0
    %2965 = vadd.xlane.f32.xlu0 %v2964
    %v2966 = vpop.xlane.xlu0 %2965
    %v2967 = vsel %vm87, %v2963, 0.0
    %2968 = vadd.xlane.f32.xlu0 %v2967
    %v2969 = vpop.xlane.xlu0 %2968
    %v2970 = vmul.f32 %v2966, %v991
    %v2971 = vmul.f32 %v2969, %v991
    %v2972 = vmul.f32 %v2960, %v2960
    %v2973 = vmul.f32 %v2961, %v2961
    %v2974 = vsub.f32 %v2970, %v2972
    %v2975 = vsub.f32 %v2971, %v2973
    %v2976 = vsub.f32 %v2952, %v2960
    %v2977 = vsub.f32 %v2953, %v2961
    %v2978 = vadd.f32 %v2974, 1e-05
    %v2979 = vadd.f32 %v2975, 1e-05
    %v2980 = vrsqrt.pop %v2978
    %v2981 = vrsqrt.pop %v2979
    %v2982 = vmul.f32 %v2976, %v2980
    %v2983 = vmul.f32 %v2977, %v2981
    %v2984 = vlaneseq
    %v2985 = vshrl.u32 %v2984, 7
    %v2986 = vsub.s32 6, %v2985
    %v2987 = vrot.slane %v2119, %v2986
    %v2988 = vmul.f32 %v2982, %v2987
    %v2989 = vmul.f32 %v2983, %v2987
    %v2990 = vlaneseq
    %v2991 = vshrl.u32 %v2990, 7
    %v2992 = vsub.s32 7, %v2991
    %v2993 = vrot.slane %v2119, %v2992
    %v2994 = vadd.f32 %v2988, %v2993
    %v2995 = vadd.f32 %v2989, %v2993
    %s2996 = scalar_lea.vmem %s6, 24
    %v2997 = vld [vmem:[%s2996] sm:$0xff]
    %s2998 = scalar_lea.vmem %s3, 96
    %v2999 = vld [vmem:[%s2998] sm:$0xff]
    %v3000 = vld [vmem:[%s2998 + $0x8] sm:$0xff]
    %v3001 = vld [vmem:[%s2998 + $0x10] sm:$0xff]
    %v3002 = vld [vmem:[%s2998 + $0x18] sm:$0xff]
    %s3003 = scalar_lea.vmem %s5, 480
    %v3004 = vld [vmem:[%s3003] sm:$0xff]
    %v3005 = vld [vmem:[%s3003 + $0x8] sm:$0xff]
    %v3006 = vld [vmem:[%s3003 + $0x10] sm:$0xff]
    %v3007 = vld [vmem:[%s3003 + $0x18] sm:$0xff]
    %s3008 = scalar_lea.vmem %s4, 96
    %v3009 = vld [vmem:[%s3008] sm:$0xff]
    %v3010 = vld [vmem:[%s3008 + $0x8] sm:$0xff]
    %v3011 = vld [vmem:[%s3008 + $0x10] sm:$0xff]
    %v3012 = vld [vmem:[%s3008 + $0x18] sm:$0xff]
    %v3013 = vld [vmem:[%s3003 + $0x20] sm:$0xff]
    %v3014 = vld [vmem:[%s3003 + $0x28] sm:$0xff]
    %v3015 = vld [vmem:[%s3003 + $0x30] sm:$0xff]
    %v3016 = vld [vmem:[%s3003 + $0x38] sm:$0xff]
    %v3017 = vld [vmem:[%s3003 + $0x40] sm:$0xff]
    %v3018 = vld [vmem:[%s3003 + $0x48] sm:$0xff]
    %v3019 = vld [vmem:[%s3003 + $0x50] sm:$0xff]
    %v3020 = vld [vmem:[%s3003 + $0x58] sm:$0xff]
    %v3021 = vld [vmem:[%s3003 + $0x60] sm:$0xff]
    %v3022 = vld [vmem:[%s3003 + $0x68] sm:$0xff]
    %v3023 = vld [vmem:[%s3003 + $0x70] sm:$0xff]
    %v3024 = vld [vmem:[%s3003 + $0x78] sm:$0xff]
    %v3025 = vld [vmem:[%s3003 + $0x80] sm:$0xff]
    %v3026 = vld [vmem:[%s3003 + $0x88] sm:$0xff]
    %v3027 = vld [vmem:[%s3003 + $0x90] sm:$0xff]
    %v3028 = vld [vmem:[%s3003 + $0x98] sm:$0xff]
    %v3029 = vlaneseq
    %v3030 = vshrl.u32 %v3029, 7
    %v3031 = vsub.s32 0, %v3030
    %v3032 = vrot.slane %v2997, %v3031
    %v3034 = vsel %vm87, %v2994, 0
    %v3037 = vsel %vm87, %v2995, 0
    %3039 = vmatprep.subr.mxu0 0.0
    %3040 = vmatpush1.msra.mxu0 0.0
    %3041 = vmatprep.subr.mxu0 0.0
    %3042 = vmatpush1.msra.mxu0 0.0
    %3043 = vmatprep.subr.mxu0 0.0
    %3044 = vmatpush1.msra.mxu0 0.0
    %3045 = vmatprep.subr.mxu0 0.0
    %3046 = vmatpush1.msra.mxu0 0.0
    %3047 = vmatprep.subr.mxu0 0.0
    %3048 = vmatpush1.msra.mxu0 0.0
    %3049 = vmatprep.subr.mxu0 0.0
    %3050 = vmatpush1.msra.mxu0 0.0
    %3051 = vmatprep.subr.mxu0 0.0
    %3052 = vmatpush1.msra.mxu0 0.0
    %3053 = vmatprep.subr.mxu0 0.0
    %3054 = vmatpush1.msra.mxu0 0.0
    %3055 = vmatprep.subr.mxu0 0.0
    %3056 = vmatpush1.msra.mxu0 0.0
    %3057 = vmatprep.subr.mxu0 0.0
    %3058 = vmatpush1.msra.mxu0 0.0
    %3059 = vmatprep.subr.mxu0 0.0
    %3060 = vmatpush1.msra.mxu0 0.0
    %3061 = vmatprep.subr.mxu0 0.0
    %3062 = vmatpush1.msra.mxu0 0.0
    %3063 = vmatprep.subr.mxu0 0.0
    %3064 = vmatpush1.msra.mxu0 %v3002
    %3065 = vmatprep.subr.mxu0 0.0
    %3066 = vmatpush1.msra.mxu0 %v3001
    %3067 = vmatprep.subr.mxu0 0.0
    %3068 = vmatpush1.msra.mxu0 %v3000
    %3069 = vmatprep.subr.mxu0 0.0
    %3070 = vmatpush1.msra.mxu0 %v2999
    %3071 = vmatprep.subr.mxu0 0.0
    %3072 = vmatpush2.msra.mxu0 0.0
    %3073 = vmatprep.subr.mxu0 0.0
    %3074 = vmatpush2.msra.mxu0 0.0
    %3075 = vmatprep.subr.mxu0 0.0
    %3076 = vmatpush2.msra.mxu0 0.0
    %3077 = vmatprep.subr.mxu0 0.0
    %3078 = vmatpush2.msra.mxu0 0.0
    %3079 = vmatprep.subr.mxu0 0.0
    %3080 = vmatpush2.msra.mxu0 0.0
    %3081 = vmatprep.subr.mxu0 0.0
    %3082 = vmatpush2.msra.mxu0 0.0
    %3083 = vmatprep.subr.mxu0 0.0
    %3084 = vmatpush2.msra.mxu0 0.0
    %3085 = vmatprep.subr.mxu0 0.0
    %3086 = vmatpush2.msra.mxu0 0.0
    %3087 = vmatprep.subr.mxu0 0.0
    %3088 = vmatpush2.msra.mxu0 0.0
    %3089 = vmatprep.subr.mxu0 0.0
    %3090 = vmatpush2.msra.mxu0 0.0
    %3091 = vmatprep.subr.mxu0 0.0
    %3092 = vmatpush2.msra.mxu0 0.0
    %3093 = vmatprep.subr.mxu0 0.0
    %3094 = vmatpush2.msra.mxu0 0.0
    %3095 = vmatprep.subr.mxu0 0.0
    %3096 = vmatpush2.msra.mxu0 0.0
    %3097 = vmatprep.subr.mxu0 0.0
    %3098 = vmatpush2.msra.mxu0 0.0
    %3099 = vmatprep.subr.mxu0 0.0
    %3100 = vmatpush2.msra.mxu0 0.0
    %3101 = vmatprep.subr.mxu0 0.0
    %3102 = vmatpush2.msra.mxu0 0.0
    %3103 = vmatprep.mubr.f32.mxu0 0.0
    %3104 = vmatmul.mubr.f32.gmra.mxu0 %v3034
    %v3105 = vpop.f32.mrf.mxu0
    %v3106 = vadd.f32 %v3032, %v3105
    %v3107 = vpop.f32.mrf.mxu0
    %3108 = vmatprep.mubr.f32.mxu0 0.0
    %3109 = vmatmul.mubr.f32.gmra.mxu0 %v3037
    %v3110 = vpop.f32.mrf.mxu0
    %v3111 = vadd.f32 %v3032, %v3110
    %v3112 = vpop.f32.mrf.mxu0
    %3113 = vdwg.mxu0
    %v3114 = vmul.f32 %v3106, %v382
    %v3115 = vmul.f32 %v3111, %v384
    %v3116 = vmul.f32 %v3106, %v386
    %v3117 = vmul.f32 %v3111, %v388
    %v3118 = vmul.f32 %v3106, %v390
    %v3119 = vmul.f32 %v3111, %v392
    %v3120 = vmul.f32 %v3106, %v394
    %v3121 = vmul.f32 %v3111, %v396
    %v3122 = vmul.f32 %v3106, %v398
    %v3123 = vmul.f32 %v3111, %v400
    %v3124 = vmul.f32 %v3106, %v402
    %v3125 = vmul.f32 %v3111, %v404
    %v3126 = vmul.f32 %v3106, %v406
    %v3127 = vmul.f32 %v3111, %v408
    %v3128 = vmul.f32 %v3106, %v410
    %v3129 = vmul.f32 %v3111, %v412
    %v3130 = vmul.f32 %v3106, %v446
    %v3131 = vmul.f32 %v3111, %v448
    %v3132 = vmul.f32 %v3106, %v450
    %v3133 = vmul.f32 %v3111, %v452
    %v3134 = vmul.f32 %v3106, %v454
    %v3135 = vmul.f32 %v3111, %v456
    %v3136 = vmul.f32 %v3106, %v458
    %v3137 = vmul.f32 %v3111, %v460
    %v3138 = vmul.f32 %v3106, %v462
    %v3139 = vmul.f32 %v3111, %v464
    %v3140 = vmul.f32 %v3106, %v466
    %v3141 = vmul.f32 %v3111, %v468
    %v3142 = vmul.f32 %v3106, %v470
    %v3143 = vmul.f32 %v3111, %v472
    %v3144 = vmul.f32 %v3106, %v474
    %v3145 = vmul.f32 %v3111, %v476
    %3162 = vrot.lane.b32.xlu0 %v3114, 96
    %v3163 = vpop.permute.xlu0 %3162
    %3164 = vrot.lane.b32.xlu0 %v3115, 96
    %v3165 = vpop.permute.xlu0 %3164
    %3166 = vrot.lane.b32.xlu0 %v3116, 96
    %v3167 = vpop.permute.xlu0 %3166
    %3168 = vrot.lane.b32.xlu0 %v3117, 96
    %v3169 = vpop.permute.xlu0 %3168
    %3170 = vrot.lane.b32.xlu0 %v3118, 96
    %v3171 = vpop.permute.xlu0 %3170
    %3172 = vrot.lane.b32.xlu0 %v3119, 96
    %v3173 = vpop.permute.xlu0 %3172
    %3174 = vrot.lane.b32.xlu0 %v3120, 96
    %v3175 = vpop.permute.xlu0 %3174
    %3176 = vrot.lane.b32.xlu0 %v3121, 96
    %v3177 = vpop.permute.xlu0 %3176
    %3178 = vrot.lane.b32.xlu0 %v3122, 96
    %v3179 = vpop.permute.xlu0 %3178
    %3180 = vrot.lane.b32.xlu0 %v3123, 96
    %v3181 = vpop.permute.xlu0 %3180
    %3182 = vrot.lane.b32.xlu0 %v3124, 96
    %v3183 = vpop.permute.xlu0 %3182
    %3184 = vrot.lane.b32.xlu0 %v3125, 96
    %v3185 = vpop.permute.xlu0 %3184
    %3186 = vrot.lane.b32.xlu0 %v3126, 96
    %v3187 = vpop.permute.xlu0 %3186
    %3188 = vrot.lane.b32.xlu0 %v3127, 96
    %v3189 = vpop.permute.xlu0 %3188
    %3190 = vrot.lane.b32.xlu0 %v3128, 96
    %v3191 = vpop.permute.xlu0 %3190
    %3192 = vrot.lane.b32.xlu0 %v3129, 96
    %v3193 = vpop.permute.xlu0 %3192
    %v3195 = vsel %vm87, %v3106, 0
    %v3198 = vsel %vm87, %v3111, 0
    %v3200 = vsel %vm87, %v3163, 0
    %v3202 = vsel %vm87, %v3165, 0
    %v3204 = vsel %vm87, %v3167, 0
    %v3206 = vsel %vm87, %v3169, 0
    %v3208 = vsel %vm87, %v3171, 0
    %v3210 = vsel %vm87, %v3173, 0
    %v3212 = vsel %vm87, %v3175, 0
    %v3214 = vsel %vm87, %v3177, 0
    %v3216 = vsel %vm87, %v3179, 0
    %v3218 = vsel %vm87, %v3181, 0
    %v3220 = vsel %vm87, %v3183, 0
    %v3222 = vsel %vm87, %v3185, 0
    %v3224 = vsel %vm87, %v3187, 0
    %v3226 = vsel %vm87, %v3189, 0
    %v3228 = vsel %vm87, %v3191, 0
    %v3230 = vsel %vm87, %v3193, 0
    %3232 = vmatprep.subr.mxu0 0.0
    %3233 = vmatpush1.xpose.msra.mxu0 %v3230
    %3234 = vmatprep.subr.mxu0 0.0
    %3235 = vmatpush1.xpose.msra.mxu0 %v3228
    %3236 = vmatprep.subr.mxu0 0.0
    %3237 = vmatpush1.xpose.msra.mxu0 %v3226
    %3238 = vmatprep.subr.mxu0 0.0
    %3239 = vmatpush1.xpose.msra.mxu0 %v3224
    %3240 = vmatprep.subr.mxu0 0.0
    %3241 = vmatpush1.xpose.msra.mxu0 %v3222
    %3242 = vmatprep.subr.mxu0 0.0
    %3243 = vmatpush1.xpose.msra.mxu0 %v3220
    %3244 = vmatprep.subr.mxu0 0.0
    %3245 = vmatpush1.xpose.msra.mxu0 %v3218
    %3246 = vmatprep.subr.mxu0 0.0
    %3247 = vmatpush1.xpose.msra.mxu0 %v3216
    %3248 = vmatprep.subr.mxu0 0.0
    %3249 = vmatpush1.xpose.msra.mxu0 %v3214
    %3250 = vmatprep.subr.mxu0 0.0
    %3251 = vmatpush1.xpose.msra.mxu0 %v3212
    %3252 = vmatprep.subr.mxu0 0.0
    %3253 = vmatpush1.xpose.msra.mxu0 %v3210
    %3254 = vmatprep.subr.mxu0 0.0
    %3255 = vmatpush1.xpose.msra.mxu0 %v3208
    %3256 = vmatprep.subr.mxu0 0.0
    %3257 = vmatpush1.xpose.msra.mxu0 %v3206
    %3258 = vmatprep.subr.mxu0 0.0
    %3259 = vmatpush1.xpose.msra.mxu0 %v3204
    %3260 = vmatprep.subr.mxu0 0.0
    %3261 = vmatpush1.xpose.msra.mxu0 %v3202
    %3262 = vmatprep.subr.mxu0 0.0
    %3263 = vmatpush1.xpose.msra.mxu0 %v3200
    %3264 = vmatprep.subr.mxu0 0.0
    %3265 = vmatpush2.xpose.msra.mxu0 0.0
    %3266 = vmatprep.subr.mxu0 0.0
    %3267 = vmatpush2.xpose.msra.mxu0 0.0
    %3268 = vmatprep.subr.mxu0 0.0
    %3269 = vmatpush2.xpose.msra.mxu0 0.0
    %3270 = vmatprep.subr.mxu0 0.0
    %3271 = vmatpush2.xpose.msra.mxu0 0.0
    %3272 = vmatprep.subr.mxu0 0.0
    %3273 = vmatpush2.xpose.msra.mxu0 0.0
    %3274 = vmatprep.subr.mxu0 0.0
    %3275 = vmatpush2.xpose.msra.mxu0 0.0
    %3276 = vmatprep.subr.mxu0 0.0
    %3277 = vmatpush2.xpose.msra.mxu0 0.0
    %3278 = vmatprep.subr.mxu0 0.0
    %3279 = vmatpush2.xpose.msra.mxu0 0.0
    %3280 = vmatprep.subr.mxu0 0.0
    %3281 = vmatpush2.xpose.msra.mxu0 0.0
    %3282 = vmatprep.subr.mxu0 0.0
    %3283 = vmatpush2.xpose.msra.mxu0 0.0
    %3284 = vmatprep.subr.mxu0 0.0
    %3285 = vmatpush2.xpose.msra.mxu0 0.0
    %3286 = vmatprep.subr.mxu0 0.0
    %3287 = vmatpush2.xpose.msra.mxu0 0.0
    %3288 = vmatprep.subr.mxu0 0.0
    %3289 = vmatpush2.xpose.msra.mxu0 0.0
    %3290 = vmatprep.subr.mxu0 0.0
    %3291 = vmatpush2.xpose.msra.mxu0 0.0
    %3292 = vmatprep.subr.mxu0 0.0
    %3293 = vmatpush2.xpose.msra.mxu0 0.0
    %3294 = vmatprep.subr.mxu0 0.0
    %3295 = vmatpush2.xpose.msra.mxu0 0.0
    %3296 = vmatprep.mubr.f32.mxu0 0.0
    %3297 = vmatmul.mubr.f32.gmra.mxu0 %v3195
    %v3298 = vpop.f32.mrf.mxu0
    %v3299 = vadd.f32 %v67, %v3298
    %v3300 = vpop.f32.mrf.mxu0
    %3301 = vmatprep.mubr.f32.mxu0 0.0
    %3302 = vmatmul.mubr.f32.gmra.mxu0 %v3198
    %v3303 = vpop.f32.mrf.mxu0
    %v3304 = vadd.f32 %v68, %v3303
    %v3305 = vpop.f32.mrf.mxu0
    %3306 = vdwg.mxu0
    %3307 = vmax.xlane.f32.xlu0 %v3299
    %v3308 = vpop.xlane.xlu0 %3307
    %3309 = vmax.xlane.f32.xlu0 %v3304
    %v3310 = vpop.xlane.xlu0 %3309
    %v3311 = vsub.f32 %v3299, %v3308
    %v3312 = vsub.f32 %v3304, %v3310
    %v3313 = vmul.f32 %v3311, 1.442695
    %v3314 = vpow.pop %v3313
    %v3315 = vmul.f32 %v3312, 1.442695
    %v3316 = vpow.pop %v3315
    %3317 = vmatprep.subr.mxu0 0.0
    %3318 = vmatpush1.msra.mxu0 %v48
    %3319 = vmatprep.subr.mxu0 0.0
    %3320 = vmatpush1.msra.mxu0 %v47
    %3321 = vmatprep.subr.mxu0 0.0
    %3322 = vmatpush1.msra.mxu0 %v46
    %3323 = vmatprep.subr.mxu0 0.0
    %3324 = vmatpush1.msra.mxu0 %v45
    %3325 = vmatprep.subr.mxu0 0.0
    %3326 = vmatpush1.msra.mxu0 %v44
    %3327 = vmatprep.subr.mxu0 0.0
    %3328 = vmatpush1.msra.mxu0 %v43
    %3329 = vmatprep.subr.mxu0 0.0
    %3330 = vmatpush1.msra.mxu0 %v42
    %3331 = vmatprep.subr.mxu0 0.0
    %3332 = vmatpush1.msra.mxu0 %v41
    %3333 = vmatprep.subr.mxu0 0.0
    %3334 = vmatpush1.msra.mxu0 %v40
    %3335 = vmatprep.subr.mxu0 0.0
    %3336 = vmatpush1.msra.mxu0 %v39
    %3337 = vmatprep.subr.mxu0 0.0
    %3338 = vmatpush1.msra.mxu0 %v38
    %3339 = vmatprep.subr.mxu0 0.0
    %3340 = vmatpush1.msra.mxu0 %v37
    %3341 = vmatprep.subr.mxu0 0.0
    %3342 = vmatpush1.msra.mxu0 %v36
    %3343 = vmatprep.subr.mxu0 0.0
    %3344 = vmatpush1.msra.mxu0 %v35
    %3345 = vmatprep.subr.mxu0 0.0
    %3346 = vmatpush1.msra.mxu0 %v34
    %3347 = vmatprep.subr.mxu0 0.0
    %3348 = vmatpush1.msra.mxu0 %v33
    %3349 = vmatprep.subr.mxu0 0.0
    %3350 = vmatpush2.msra.mxu0 0.0
    %3351 = vmatprep.subr.mxu0 0.0
    %3352 = vmatpush2.msra.mxu0 0.0
    %3353 = vmatprep.subr.mxu0 0.0
    %3354 = vmatpush2.msra.mxu0 0.0
    %3355 = vmatprep.subr.mxu0 0.0
    %3356 = vmatpush2.msra.mxu0 0.0
    %3357 = vmatprep.subr.mxu0 0.0
    %3358 = vmatpush2.msra.mxu0 0.0
    %3359 = vmatprep.subr.mxu0 0.0
    %3360 = vmatpush2.msra.mxu0 0.0
    %3361 = vmatprep.subr.mxu0 0.0
    %3362 = vmatpush2.msra.mxu0 0.0
    %3363 = vmatprep.subr.mxu0 0.0
    %3364 = vmatpush2.msra.mxu0 0.0
    %3365 = vmatprep.subr.mxu0 0.0
    %3366 = vmatpush2.msra.mxu0 0.0
    %3367 = vmatprep.subr.mxu0 0.0
    %3368 = vmatpush2.msra.mxu0 0.0
    %3369 = vmatprep.subr.mxu0 0.0
    %3370 = vmatpush2.msra.mxu0 0.0
    %3371 = vmatprep.subr.mxu0 0.0
    %3372 = vmatpush2.msra.mxu0 0.0
    %3373 = vmatprep.subr.mxu0 0.0
    %3374 = vmatpush2.msra.mxu0 0.0
    %3375 = vmatprep.subr.mxu0 0.0
    %3376 = vmatpush2.msra.mxu0 0.0
    %3377 = vmatprep.subr.mxu0 0.0
    %3378 = vmatpush2.msra.mxu0 0.0
    %3379 = vmatprep.subr.mxu0 0.0
    %3380 = vmatpush2.msra.mxu0 0.0
    %3381 = vmatprep.mubr.f32.mxu0 0.0
    %3382 = vmatmul.mubr.f32.gmra.mxu0 %v3314
    %v3383 = vpop.f32.mrf.mxu0
    %v3384 = vadd.f32 0.0, %v3383
    %v3385 = vpop.f32.mrf.mxu0
    %3386 = vmatprep.mubr.f32.mxu0 0.0
    %3387 = vmatmul.mubr.f32.gmra.mxu0 %v3316
    %v3388 = vpop.f32.mrf.mxu0
    %v3389 = vadd.f32 0.0, %v3388
    %v3390 = vpop.f32.mrf.mxu0
    %3391 = vdwg.mxu0
    %v3392 = vrcp.pop %v3384
    %v3393 = vrcp.pop %v3389
    %v3394 = vmul.f32 %v3314, %v3392
    %v3395 = vmul.f32 %v3316, %v3393
    %3412 = vrot.lane.b32.xlu0 %v3130, 64
    %v3413 = vpop.permute.xlu0 %3412
    %3414 = vrot.lane.b32.xlu0 %v3131, 64
    %v3415 = vpop.permute.xlu0 %3414
    %3416 = vrot.lane.b32.xlu0 %v3132, 64
    %v3417 = vpop.permute.xlu0 %3416
    %3418 = vrot.lane.b32.xlu0 %v3133, 64
    %v3419 = vpop.permute.xlu0 %3418
    %3420 = vrot.lane.b32.xlu0 %v3134, 64
    %v3421 = vpop.permute.xlu0 %3420
    %3422 = vrot.lane.b32.xlu0 %v3135, 64
    %v3423 = vpop.permute.xlu0 %3422
    %3424 = vrot.lane.b32.xlu0 %v3136, 64
    %v3425 = vpop.permute.xlu0 %3424
    %3426 = vrot.lane.b32.xlu0 %v3137, 64
    %v3427 = vpop.permute.xlu0 %3426
    %3428 = vrot.lane.b32.xlu0 %v3138, 64
    %v3429 = vpop.permute.xlu0 %3428
    %3430 = vrot.lane.b32.xlu0 %v3139, 64
    %v3431 = vpop.permute.xlu0 %3430
    %3432 = vrot.lane.b32.xlu0 %v3140, 64
    %v3433 = vpop.permute.xlu0 %3432
    %3434 = vrot.lane.b32.xlu0 %v3141, 64
    %v3435 = vpop.permute.xlu0 %3434
    %3436 = vrot.lane.b32.xlu0 %v3142, 64
    %v3437 = vpop.permute.xlu0 %3436
    %3438 = vrot.lane.b32.xlu0 %v3143, 64
    %v3439 = vpop.permute.xlu0 %3438
    %3440 = vrot.lane.b32.xlu0 %v3144, 64
    %v3441 = vpop.permute.xlu0 %3440
    %3442 = vrot.lane.b32.xlu0 %v3145, 64
    %v3443 = vpop.permute.xlu0 %3442
    %3460 = vmatprep.subr.mxu0 0.0
    %3461 = vmatpush1.msra.mxu0 %v3443
    %3462 = vmatprep.subr.mxu0 0.0
    %3463 = vmatpush1.msra.mxu0 %v3441
    %3464 = vmatprep.subr.mxu0 0.0
    %3465 = vmatpush1.msra.mxu0 %v3439
    %3466 = vmatprep.subr.mxu0 0.0
    %3467 = vmatpush1.msra.mxu0 %v3437
    %3468 = vmatprep.subr.mxu0 0.0
    %3469 = vmatpush1.msra.mxu0 %v3435
    %3470 = vmatprep.subr.mxu0 0.0
    %3471 = vmatpush1.msra.mxu0 %v3433
    %3472 = vmatprep.subr.mxu0 0.0
    %3473 = vmatpush1.msra.mxu0 %v3431
    %3474 = vmatprep.subr.mxu0 0.0
    %3475 = vmatpush1.msra.mxu0 %v3429
    %3476 = vmatprep.subr.mxu0 0.0
    %3477 = vmatpush1.msra.mxu0 %v3427
    %3478 = vmatprep.subr.mxu0 0.0
    %3479 = vmatpush1.msra.mxu0 %v3425
    %3480 = vmatprep.subr.mxu0 0.0
    %3481 = vmatpush1.msra.mxu0 %v3423
    %3482 = vmatprep.subr.mxu0 0.0
    %3483 = vmatpush1.msra.mxu0 %v3421
    %3484 = vmatprep.subr.mxu0 0.0
    %3485 = vmatpush1.msra.mxu0 %v3419
    %3486 = vmatprep.subr.mxu0 0.0
    %3487 = vmatpush1.msra.mxu0 %v3417
    %3488 = vmatprep.subr.mxu0 0.0
    %3489 = vmatpush1.msra.mxu0 %v3415
    %3490 = vmatprep.subr.mxu0 0.0
    %3491 = vmatpush1.msra.mxu0 %v3413
    %3492 = vmatprep.subr.mxu0 0.0
    %3493 = vmatpush2.msra.mxu0 0.0
    %3494 = vmatprep.subr.mxu0 0.0
    %3495 = vmatpush2.msra.mxu0 0.0
    %3496 = vmatprep.subr.mxu0 0.0
    %3497 = vmatpush2.msra.mxu0 0.0
    %3498 = vmatprep.subr.mxu0 0.0
    %3499 = vmatpush2.msra.mxu0 0.0
    %3500 = vmatprep.subr.mxu0 0.0
    %3501 = vmatpush2.msra.mxu0 0.0
    %3502 = vmatprep.subr.mxu0 0.0
    %3503 = vmatpush2.msra.mxu0 0.0
    %3504 = vmatprep.subr.mxu0 0.0
    %3505 = vmatpush2.msra.mxu0 0.0
    %3506 = vmatprep.subr.mxu0 0.0
    %3507 = vmatpush2.msra.mxu0 0.0
    %3508 = vmatprep.subr.mxu0 0.0
    %3509 = vmatpush2.msra.mxu0 0.0
    %3510 = vmatprep.subr.mxu0 0.0
    %3511 = vmatpush2.msra.mxu0 0.0
    %3512 = vmatprep.subr.mxu0 0.0
    %3513 = vmatpush2.msra.mxu0 0.0
    %3514 = vmatprep.subr.mxu0 0.0
    %3515 = vmatpush2.msra.mxu0 0.0
    %3516 = vmatprep.subr.mxu0 0.0
    %3517 = vmatpush2.msra.mxu0 0.0
    %3518 = vmatprep.subr.mxu0 0.0
    %3519 = vmatpush2.msra.mxu0 0.0
    %3520 = vmatprep.subr.mxu0 0.0
    %3521 = vmatpush2.msra.mxu0 0.0
    %3522 = vmatprep.subr.mxu0 0.0
    %3523 = vmatpush2.msra.mxu0 0.0
    %3524 = vmatprep.mubr.f32.mxu0 0.0
    %3525 = vmatmul.mubr.f32.gmra.mxu0 %v3394
    %v3526 = vpop.f32.mrf.mxu0
    %v3527 = vadd.f32 0.0, %v3526
    %v3528 = vpop.f32.mrf.mxu0
    %3529 = vmatprep.mubr.f32.mxu0 0.0
    %3530 = vmatmul.mubr.f32.gmra.mxu0 %v3395
    %v3531 = vpop.f32.mrf.mxu0
    %v3532 = vadd.f32 0.0, %v3531
    %v3533 = vpop.f32.mrf.mxu0
    %3534 = vdwg.mxu0
    %v3535 = vlaneseq
    %v3536 = vshrl.u32 %v3535, 7
    %v3537 = vsub.s32 1, %v3536
    %v3538 = vrot.slane %v2997, %v3537
    %v3540 = vsel %vm87, %v3527, 0
    %v3543 = vsel %vm87, %v3532, 0
    %3545 = vmatprep.subr.mxu0 0.0
    %3546 = vmatpush1.msra.mxu0 0.0
    %3547 = vmatprep.subr.mxu0 0.0
    %3548 = vmatpush1.msra.mxu0 0.0
    %3549 = vmatprep.subr.mxu0 0.0
    %3550 = vmatpush1.msra.mxu0 0.0
    %3551 = vmatprep.subr.mxu0 0.0
    %3552 = vmatpush1.msra.mxu0 0.0
    %3553 = vmatprep.subr.mxu0 0.0
    %3554 = vmatpush1.msra.mxu0 0.0
    %3555 = vmatprep.subr.mxu0 0.0
    %3556 = vmatpush1.msra.mxu0 0.0
    %3557 = vmatprep.subr.mxu0 0.0
    %3558 = vmatpush1.msra.mxu0 0.0
    %3559 = vmatprep.subr.mxu0 0.0
    %3560 = vmatpush1.msra.mxu0 0.0
    %3561 = vmatprep.subr.mxu0 0.0
    %3562 = vmatpush1.msra.mxu0 0.0
    %3563 = vmatprep.subr.mxu0 0.0
    %3564 = vmatpush1.msra.mxu0 0.0
    %3565 = vmatprep.subr.mxu0 0.0
    %3566 = vmatpush1.msra.mxu0 0.0
    %3567 = vmatprep.subr.mxu0 0.0
    %3568 = vmatpush1.msra.mxu0 0.0
    %3569 = vmatprep.subr.mxu0 0.0
    %3570 = vmatpush1.msra.mxu0 %v3007
    %3571 = vmatprep.subr.mxu0 0.0
    %3572 = vmatpush1.msra.mxu0 %v3006
    %3573 = vmatprep.subr.mxu0 0.0
    %3574 = vmatpush1.msra.mxu0 %v3005
    %3575 = vmatprep.subr.mxu0 0.0
    %3576 = vmatpush1.msra.mxu0 %v3004
    %3577 = vmatprep.subr.mxu0 0.0
    %3578 = vmatpush2.msra.mxu0 0.0
    %3579 = vmatprep.subr.mxu0 0.0
    %3580 = vmatpush2.msra.mxu0 0.0
    %3581 = vmatprep.subr.mxu0 0.0
    %3582 = vmatpush2.msra.mxu0 0.0
    %3583 = vmatprep.subr.mxu0 0.0
    %3584 = vmatpush2.msra.mxu0 0.0
    %3585 = vmatprep.subr.mxu0 0.0
    %3586 = vmatpush2.msra.mxu0 0.0
    %3587 = vmatprep.subr.mxu0 0.0
    %3588 = vmatpush2.msra.mxu0 0.0
    %3589 = vmatprep.subr.mxu0 0.0
    %3590 = vmatpush2.msra.mxu0 0.0
    %3591 = vmatprep.subr.mxu0 0.0
    %3592 = vmatpush2.msra.mxu0 0.0
    %3593 = vmatprep.subr.mxu0 0.0
    %3594 = vmatpush2.msra.mxu0 0.0
    %3595 = vmatprep.subr.mxu0 0.0
    %3596 = vmatpush2.msra.mxu0 0.0
    %3597 = vmatprep.subr.mxu0 0.0
    %3598 = vmatpush2.msra.mxu0 0.0
    %3599 = vmatprep.subr.mxu0 0.0
    %3600 = vmatpush2.msra.mxu0 0.0
    %3601 = vmatprep.subr.mxu0 0.0
    %3602 = vmatpush2.msra.mxu0 0.0
    %3603 = vmatprep.subr.mxu0 0.0
    %3604 = vmatpush2.msra.mxu0 0.0
    %3605 = vmatprep.subr.mxu0 0.0
    %3606 = vmatpush2.msra.mxu0 0.0
    %3607 = vmatprep.subr.mxu0 0.0
    %3608 = vmatpush2.msra.mxu0 0.0
    %3609 = vmatprep.mubr.f32.mxu0 0.0
    %3610 = vmatmul.mubr.f32.gmra.mxu0 %v3540
    %v3611 = vpop.f32.mrf.mxu0
    %v3612 = vadd.f32 %v3538, %v3611
    %v3613 = vpop.f32.mrf.mxu0
    %3614 = vmatprep.mubr.f32.mxu0 0.0
    %3615 = vmatmul.mubr.f32.gmra.mxu0 %v3543
    %v3616 = vpop.f32.mrf.mxu0
    %v3617 = vadd.f32 %v3538, %v3616
    %v3618 = vpop.f32.mrf.mxu0
    %3619 = vdwg.mxu0
    %v3620 = vadd.f32 %v2994, %v3612
    %v3621 = vadd.f32 %v2995, %v3617
    %v3622 = vsel %vm87, %v3620, 0.0
    %3623 = vadd.xlane.f32.xlu0 %v3622
    %v3624 = vpop.xlane.xlu0 %3623
    %v3625 = vsel %vm87, %v3621, 0.0
    %3626 = vadd.xlane.f32.xlu0 %v3625
    %v3627 = vpop.xlane.xlu0 %3626
    %v3628 = vmul.f32 %v3624, %v991
    %v3629 = vmul.f32 %v3627, %v991
    %v3630 = vmul.f32 %v3620, %v3620
    %v3631 = vmul.f32 %v3621, %v3621
    %v3632 = vsel %vm87, %v3630, 0.0
    %3633 = vadd.xlane.f32.xlu0 %v3632
    %v3634 = vpop.xlane.xlu0 %3633
    %v3635 = vsel %vm87, %v3631, 0.0
    %3636 = vadd.xlane.f32.xlu0 %v3635
    %v3637 = vpop.xlane.xlu0 %3636
    %v3638 = vmul.f32 %v3634, %v991
    %v3639 = vmul.f32 %v3637, %v991
    %v3640 = vmul.f32 %v3628, %v3628
    %v3641 = vmul.f32 %v3629, %v3629
    %v3642 = vsub.f32 %v3638, %v3640
    %v3643 = vsub.f32 %v3639, %v3641
    %v3644 = vsub.f32 %v3620, %v3628
    %v3645 = vsub.f32 %v3621, %v3629
    %v3646 = vadd.f32 %v3642, 1e-05
    %v3647 = vadd.f32 %v3643, 1e-05
    %v3648 = vrsqrt.pop %v3646
    %v3649 = vrsqrt.pop %v3647
    %v3650 = vmul.f32 %v3644, %v3648
    %v3651 = vmul.f32 %v3645, %v3649
    %v3652 = vlaneseq
    %v3653 = vshrl.u32 %v3652, 7
    %v3654 = vsub.s32 2, %v3653
    %v3655 = vrot.slane %v2997, %v3654
    %v3656 = vmul.f32 %v3650, %v3655
    %v3657 = vmul.f32 %v3651, %v3655
    %v3658 = vlaneseq
    %v3659 = vshrl.u32 %v3658, 7
    %v3660 = vsub.s32 3, %v3659
    %v3661 = vrot.slane %v2997, %v3660
    %v3662 = vadd.f32 %v3656, %v3661
    %v3663 = vadd.f32 %v3657, %v3661
    %v3664 = vlaneseq
    %v3665 = vshrl.u32 %v3664, 7
    %v3666 = vsub.s32 4, %v3665
    %v3667 = vrot.slane %v2997, %v3666
    %v3669 = vsel %vm87, %v3662, 0
    %v3672 = vsel %vm87, %v3663, 0
    %3674 = vmatprep.subr.mxu0 0.0
    %3675 = vmatpush1.msra.mxu0 0.0
    %3676 = vmatprep.subr.mxu0 0.0
    %3677 = vmatpush1.msra.mxu0 0.0
    %3678 = vmatprep.subr.mxu0 0.0
    %3679 = vmatpush1.msra.mxu0 0.0
    %3680 = vmatprep.subr.mxu0 0.0
    %3681 = vmatpush1.msra.mxu0 0.0
    %3682 = vmatprep.subr.mxu0 0.0
    %3683 = vmatpush1.msra.mxu0 0.0
    %3684 = vmatprep.subr.mxu0 0.0
    %3685 = vmatpush1.msra.mxu0 0.0
    %3686 = vmatprep.subr.mxu0 0.0
    %3687 = vmatpush1.msra.mxu0 0.0
    %3688 = vmatprep.subr.mxu0 0.0
    %3689 = vmatpush1.msra.mxu0 0.0
    %3690 = vmatprep.subr.mxu0 0.0
    %3691 = vmatpush1.msra.mxu0 0.0
    %3692 = vmatprep.subr.mxu0 0.0
    %3693 = vmatpush1.msra.mxu0 0.0
    %3694 = vmatprep.subr.mxu0 0.0
    %3695 = vmatpush1.msra.mxu0 0.0
    %3696 = vmatprep.subr.mxu0 0.0
    %3697 = vmatpush1.msra.mxu0 0.0
    %3698 = vmatprep.subr.mxu0 0.0
    %3699 = vmatpush1.msra.mxu0 %v3012
    %3700 = vmatprep.subr.mxu0 0.0
    %3701 = vmatpush1.msra.mxu0 %v3011
    %3702 = vmatprep.subr.mxu0 0.0
    %3703 = vmatpush1.msra.mxu0 %v3010
    %3704 = vmatprep.subr.mxu0 0.0
    %3705 = vmatpush1.msra.mxu0 %v3009
    %3706 = vmatprep.subr.mxu0 0.0
    %3707 = vmatpush2.msra.mxu0 0.0
    %3708 = vmatprep.subr.mxu0 0.0
    %3709 = vmatpush2.msra.mxu0 0.0
    %3710 = vmatprep.subr.mxu0 0.0
    %3711 = vmatpush2.msra.mxu0 0.0
    %3712 = vmatprep.subr.mxu0 0.0
    %3713 = vmatpush2.msra.mxu0 0.0
    %3714 = vmatprep.subr.mxu0 0.0
    %3715 = vmatpush2.msra.mxu0 0.0
    %3716 = vmatprep.subr.mxu0 0.0
    %3717 = vmatpush2.msra.mxu0 0.0
    %3718 = vmatprep.subr.mxu0 0.0
    %3719 = vmatpush2.msra.mxu0 0.0
    %3720 = vmatprep.subr.mxu0 0.0
    %3721 = vmatpush2.msra.mxu0 0.0
    %3722 = vmatprep.subr.mxu0 0.0
    %3723 = vmatpush2.msra.mxu0 0.0
    %3724 = vmatprep.subr.mxu0 0.0
    %3725 = vmatpush2.msra.mxu0 0.0
    %3726 = vmatprep.subr.mxu0 0.0
    %3727 = vmatpush2.msra.mxu0 0.0
    %3728 = vmatprep.subr.mxu0 0.0
    %3729 = vmatpush2.msra.mxu0 0.0
    %3730 = vmatprep.subr.mxu0 0.0
    %3731 = vmatpush2.msra.mxu0 0.0
    %3732 = vmatprep.subr.mxu0 0.0
    %3733 = vmatpush2.msra.mxu0 0.0
    %3734 = vmatprep.subr.mxu0 0.0
    %3735 = vmatpush2.msra.mxu0 0.0
    %3736 = vmatprep.subr.mxu0 0.0
    %3737 = vmatpush2.msra.mxu0 0.0
    %3738 = vmatprep.mubr.f32.mxu0 0.0
    %3739 = vmatmul.mubr.f32.gmra.mxu0 %v3669
    %v3740 = vpop.f32.mrf.mxu0
    %v3741 = vadd.f32 %v3667, %v3740
    %v3742 = vpop.f32.mrf.mxu0
    %3743 = vmatprep.mubr.f32.mxu0 0.0
    %3744 = vmatmul.mubr.f32.gmra.mxu0 %v3672
    %v3745 = vpop.f32.mrf.mxu0
    %v3746 = vadd.f32 %v3667, %v3745
    %v3747 = vpop.f32.mrf.mxu0
    %3748 = vdwg.mxu0
    %v3749 = vmax.f32 %v3741, 0.0
    %v3750 = vmax.f32 %v3746, 0.0
    %v3751 = vlaneseq
    %v3752 = vshrl.u32 %v3751, 7
    %v3753 = vsub.s32 5, %v3752
    %v3754 = vrot.slane %v2997, %v3753
    %3755 = vmatprep.subr.mxu0 0.0
    %3756 = vmatpush1.msra.mxu0 %v3028
    %3757 = vmatprep.subr.mxu0 0.0
    %3758 = vmatpush1.msra.mxu0 %v3027
    %3759 = vmatprep.subr.mxu0 0.0
    %3760 = vmatpush1.msra.mxu0 %v3026
    %3761 = vmatprep.subr.mxu0 0.0
    %3762 = vmatpush1.msra.mxu0 %v3025
    %3763 = vmatprep.subr.mxu0 0.0
    %3764 = vmatpush1.msra.mxu0 %v3024
    %3765 = vmatprep.subr.mxu0 0.0
    %3766 = vmatpush1.msra.mxu0 %v3023
    %3767 = vmatprep.subr.mxu0 0.0
    %3768 = vmatpush1.msra.mxu0 %v3022
    %3769 = vmatprep.subr.mxu0 0.0
    %3770 = vmatpush1.msra.mxu0 %v3021
    %3771 = vmatprep.subr.mxu0 0.0
    %3772 = vmatpush1.msra.mxu0 %v3020
    %3773 = vmatprep.subr.mxu0 0.0
    %3774 = vmatpush1.msra.mxu0 %v3019
    %3775 = vmatprep.subr.mxu0 0.0
    %3776 = vmatpush1.msra.mxu0 %v3018
    %3777 = vmatprep.subr.mxu0 0.0
    %3778 = vmatpush1.msra.mxu0 %v3017
    %3779 = vmatprep.subr.mxu0 0.0
    %3780 = vmatpush1.msra.mxu0 %v3016
    %3781 = vmatprep.subr.mxu0 0.0
    %3782 = vmatpush1.msra.mxu0 %v3015
    %3783 = vmatprep.subr.mxu0 0.0
    %3784 = vmatpush1.msra.mxu0 %v3014
    %3785 = vmatprep.subr.mxu0 0.0
    %3786 = vmatpush1.msra.mxu0 %v3013
    %3787 = vmatprep.subr.mxu0 0.0
    %3788 = vmatpush2.msra.mxu0 0.0
    %3789 = vmatprep.subr.mxu0 0.0
    %3790 = vmatpush2.msra.mxu0 0.0
    %3791 = vmatprep.subr.mxu0 0.0
    %3792 = vmatpush2.msra.mxu0 0.0
    %3793 = vmatprep.subr.mxu0 0.0
    %3794 = vmatpush2.msra.mxu0 0.0
    %3795 = vmatprep.subr.mxu0 0.0
    %3796 = vmatpush2.msra.mxu0 0.0
    %3797 = vmatprep.subr.mxu0 0.0
    %3798 = vmatpush2.msra.mxu0 0.0
    %3799 = vmatprep.subr.mxu0 0.0
    %3800 = vmatpush2.msra.mxu0 0.0
    %3801 = vmatprep.subr.mxu0 0.0
    %3802 = vmatpush2.msra.mxu0 0.0
    %3803 = vmatprep.subr.mxu0 0.0
    %3804 = vmatpush2.msra.mxu0 0.0
    %3805 = vmatprep.subr.mxu0 0.0
    %3806 = vmatpush2.msra.mxu0 0.0
    %3807 = vmatprep.subr.mxu0 0.0
    %3808 = vmatpush2.msra.mxu0 0.0
    %3809 = vmatprep.subr.mxu0 0.0
    %3810 = vmatpush2.msra.mxu0 0.0
    %3811 = vmatprep.subr.mxu0 0.0
    %3812 = vmatpush2.msra.mxu0 0.0
    %3813 = vmatprep.subr.mxu0 0.0
    %3814 = vmatpush2.msra.mxu0 0.0
    %3815 = vmatprep.subr.mxu0 0.0
    %3816 = vmatpush2.msra.mxu0 0.0
    %3817 = vmatprep.subr.mxu0 0.0
    %3818 = vmatpush2.msra.mxu0 0.0
    %3819 = vmatprep.mubr.f32.mxu0 0.0
    %3820 = vmatmul.mubr.f32.gmra.mxu0 %v3749
    %v3821 = vpop.f32.mrf.mxu0
    %v3822 = vadd.f32 %v3754, %v3821
    %v3823 = vpop.f32.mrf.mxu0
    %3824 = vmatprep.mubr.f32.mxu0 0.0
    %3825 = vmatmul.mubr.f32.gmra.mxu0 %v3750
    %v3826 = vpop.f32.mrf.mxu0
    %v3827 = vadd.f32 %v3754, %v3826
    %v3828 = vpop.f32.mrf.mxu0
    %3829 = vdwg.mxu0
    %v3830 = vadd.f32 %v3662, %v3822
    %v3831 = vadd.f32 %v3663, %v3827
    %v3832 = vsel %vm87, %v3830, 0.0
    %3833 = vadd.xlane.f32.xlu0 %v3832
    %v3834 = vpop.xlane.xlu0 %3833
    %v3835 = vsel %vm87, %v3831, 0.0
    %3836 = vadd.xlane.f32.xlu0 %v3835
    %v3837 = vpop.xlane.xlu0 %3836
    %v3838 = vmul.f32 %v3834, %v991
    %v3839 = vmul.f32 %v3837, %v991
    %v3840 = vmul.f32 %v3830, %v3830
    %v3841 = vmul.f32 %v3831, %v3831
    %v3842 = vsel %vm87, %v3840, 0.0
    %3843 = vadd.xlane.f32.xlu0 %v3842
    %v3844 = vpop.xlane.xlu0 %3843
    %v3845 = vsel %vm87, %v3841, 0.0
    %3846 = vadd.xlane.f32.xlu0 %v3845
    %v3847 = vpop.xlane.xlu0 %3846
    %v3848 = vmul.f32 %v3844, %v991
    %v3849 = vmul.f32 %v3847, %v991
    %v3850 = vmul.f32 %v3838, %v3838
    %v3851 = vmul.f32 %v3839, %v3839
    %v3852 = vsub.f32 %v3848, %v3850
    %v3853 = vsub.f32 %v3849, %v3851
    %v3854 = vsub.f32 %v3830, %v3838
    %v3855 = vsub.f32 %v3831, %v3839
    %v3856 = vadd.f32 %v3852, 1e-05
    %v3857 = vadd.f32 %v3853, 1e-05
    %v3858 = vrsqrt.pop %v3856
    %v3859 = vrsqrt.pop %v3857
    %v3860 = vmul.f32 %v3854, %v3858
    %v3861 = vmul.f32 %v3855, %v3859
    %v3862 = vlaneseq
    %v3863 = vshrl.u32 %v3862, 7
    %v3864 = vsub.s32 6, %v3863
    %v3865 = vrot.slane %v2997, %v3864
    %v3866 = vmul.f32 %v3860, %v3865
    %v3867 = vmul.f32 %v3861, %v3865
    %v3868 = vlaneseq
    %v3869 = vshrl.u32 %v3868, 7
    %v3870 = vsub.s32 7, %v3869
    %v3871 = vrot.slane %v2997, %v3870
    %v3872 = vadd.f32 %v3866, %v3871
    %v3873 = vadd.f32 %v3867, %v3871
    %s3874 = scalar_lea.vmem %s6, 32
    %v3875 = vld [vmem:[%s3874] sm:$0xff]
    %s3876 = scalar_lea.vmem %s3, 128
    %v3877 = vld [vmem:[%s3876] sm:$0xff]
    %v3878 = vld [vmem:[%s3876 + $0x8] sm:$0xff]
    %v3879 = vld [vmem:[%s3876 + $0x10] sm:$0xff]
    %v3880 = vld [vmem:[%s3876 + $0x18] sm:$0xff]
    %s3881 = scalar_lea.vmem %s5, 640
    %v3882 = vld [vmem:[%s3881] sm:$0xff]
    %v3883 = vld [vmem:[%s3881 + $0x8] sm:$0xff]
    %v3884 = vld [vmem:[%s3881 + $0x10] sm:$0xff]
    %v3885 = vld [vmem:[%s3881 + $0x18] sm:$0xff]
    %s3886 = scalar_lea.vmem %s4, 128
    %v3887 = vld [vmem:[%s3886] sm:$0xff]
    %v3888 = vld [vmem:[%s3886 + $0x8] sm:$0xff]
    %v3889 = vld [vmem:[%s3886 + $0x10] sm:$0xff]
    %v3890 = vld [vmem:[%s3886 + $0x18] sm:$0xff]
    %v3891 = vld [vmem:[%s3881 + $0x20] sm:$0xff]
    %v3892 = vld [vmem:[%s3881 + $0x28] sm:$0xff]
    %v3893 = vld [vmem:[%s3881 + $0x30] sm:$0xff]
    %v3894 = vld [vmem:[%s3881 + $0x38] sm:$0xff]
    %v3895 = vld [vmem:[%s3881 + $0x40] sm:$0xff]
    %v3896 = vld [vmem:[%s3881 + $0x48] sm:$0xff]
    %v3897 = vld [vmem:[%s3881 + $0x50] sm:$0xff]
    %v3898 = vld [vmem:[%s3881 + $0x58] sm:$0xff]
    %v3899 = vld [vmem:[%s3881 + $0x60] sm:$0xff]
    %v3900 = vld [vmem:[%s3881 + $0x68] sm:$0xff]
    %v3901 = vld [vmem:[%s3881 + $0x70] sm:$0xff]
    %v3902 = vld [vmem:[%s3881 + $0x78] sm:$0xff]
    %v3903 = vld [vmem:[%s3881 + $0x80] sm:$0xff]
    %v3904 = vld [vmem:[%s3881 + $0x88] sm:$0xff]
    %v3905 = vld [vmem:[%s3881 + $0x90] sm:$0xff]
    %v3906 = vld [vmem:[%s3881 + $0x98] sm:$0xff]
    %v3907 = vlaneseq
    %v3908 = vshrl.u32 %v3907, 7
    %v3909 = vsub.s32 0, %v3908
    %v3910 = vrot.slane %v3875, %v3909
    %v3912 = vsel %vm87, %v3872, 0
    %v3915 = vsel %vm87, %v3873, 0
    %3917 = vmatprep.subr.mxu0 0.0
    %3918 = vmatpush1.msra.mxu0 0.0
    %3919 = vmatprep.subr.mxu0 0.0
    %3920 = vmatpush1.msra.mxu0 0.0
    %3921 = vmatprep.subr.mxu0 0.0
    %3922 = vmatpush1.msra.mxu0 0.0
    %3923 = vmatprep.subr.mxu0 0.0
    %3924 = vmatpush1.msra.mxu0 0.0
    %3925 = vmatprep.subr.mxu0 0.0
    %3926 = vmatpush1.msra.mxu0 0.0
    %3927 = vmatprep.subr.mxu0 0.0
    %3928 = vmatpush1.msra.mxu0 0.0
    %3929 = vmatprep.subr.mxu0 0.0
    %3930 = vmatpush1.msra.mxu0 0.0
    %3931 = vmatprep.subr.mxu0 0.0
    %3932 = vmatpush1.msra.mxu0 0.0
    %3933 = vmatprep.subr.mxu0 0.0
    %3934 = vmatpush1.msra.mxu0 0.0
    %3935 = vmatprep.subr.mxu0 0.0
    %3936 = vmatpush1.msra.mxu0 0.0
    %3937 = vmatprep.subr.mxu0 0.0
    %3938 = vmatpush1.msra.mxu0 0.0
    %3939 = vmatprep.subr.mxu0 0.0
    %3940 = vmatpush1.msra.mxu0 0.0
    %3941 = vmatprep.subr.mxu0 0.0
    %3942 = vmatpush1.msra.mxu0 %v3880
    %3943 = vmatprep.subr.mxu0 0.0
    %3944 = vmatpush1.msra.mxu0 %v3879
    %3945 = vmatprep.subr.mxu0 0.0
    %3946 = vmatpush1.msra.mxu0 %v3878
    %3947 = vmatprep.subr.mxu0 0.0
    %3948 = vmatpush1.msra.mxu0 %v3877
    %3949 = vmatprep.subr.mxu0 0.0
    %3950 = vmatpush2.msra.mxu0 0.0
    %3951 = vmatprep.subr.mxu0 0.0
    %3952 = vmatpush2.msra.mxu0 0.0
    %3953 = vmatprep.subr.mxu0 0.0
    %3954 = vmatpush2.msra.mxu0 0.0
    %3955 = vmatprep.subr.mxu0 0.0
    %3956 = vmatpush2.msra.mxu0 0.0
    %3957 = vmatprep.subr.mxu0 0.0
    %3958 = vmatpush2.msra.mxu0 0.0
    %3959 = vmatprep.subr.mxu0 0.0
    %3960 = vmatpush2.msra.mxu0 0.0
    %3961 = vmatprep.subr.mxu0 0.0
    %3962 = vmatpush2.msra.mxu0 0.0
    %3963 = vmatprep.subr.mxu0 0.0
    %3964 = vmatpush2.msra.mxu0 0.0
    %3965 = vmatprep.subr.mxu0 0.0
    %3966 = vmatpush2.msra.mxu0 0.0
    %3967 = vmatprep.subr.mxu0 0.0
    %3968 = vmatpush2.msra.mxu0 0.0
    %3969 = vmatprep.subr.mxu0 0.0
    %3970 = vmatpush2.msra.mxu0 0.0
    %3971 = vmatprep.subr.mxu0 0.0
    %3972 = vmatpush2.msra.mxu0 0.0
    %3973 = vmatprep.subr.mxu0 0.0
    %3974 = vmatpush2.msra.mxu0 0.0
    %3975 = vmatprep.subr.mxu0 0.0
    %3976 = vmatpush2.msra.mxu0 0.0
    %3977 = vmatprep.subr.mxu0 0.0
    %3978 = vmatpush2.msra.mxu0 0.0
    %3979 = vmatprep.subr.mxu0 0.0
    %3980 = vmatpush2.msra.mxu0 0.0
    %3981 = vmatprep.mubr.f32.mxu0 0.0
    %3982 = vmatmul.mubr.f32.gmra.mxu0 %v3912
    %v3983 = vpop.f32.mrf.mxu0
    %v3984 = vadd.f32 %v3910, %v3983
    %v3985 = vpop.f32.mrf.mxu0
    %3986 = vmatprep.mubr.f32.mxu0 0.0
    %3987 = vmatmul.mubr.f32.gmra.mxu0 %v3915
    %v3988 = vpop.f32.mrf.mxu0
    %v3989 = vadd.f32 %v3910, %v3988
    %v3990 = vpop.f32.mrf.mxu0
    %3991 = vdwg.mxu0
    %v3992 = vmul.f32 %v3984, %v382
    %v3993 = vmul.f32 %v3989, %v384
    %v3994 = vmul.f32 %v3984, %v386
    %v3995 = vmul.f32 %v3989, %v388
    %v3996 = vmul.f32 %v3984, %v390
    %v3997 = vmul.f32 %v3989, %v392
    %v3998 = vmul.f32 %v3984, %v394
    %v3999 = vmul.f32 %v3989, %v396
    %v4000 = vmul.f32 %v3984, %v398
    %v4001 = vmul.f32 %v3989, %v400
    %v4002 = vmul.f32 %v3984, %v402
    %v4003 = vmul.f32 %v3989, %v404
    %v4004 = vmul.f32 %v3984, %v406
    %v4005 = vmul.f32 %v3989, %v408
    %v4006 = vmul.f32 %v3984, %v410
    %v4007 = vmul.f32 %v3989, %v412
    %v4008 = vmul.f32 %v3984, %v446
    %v4009 = vmul.f32 %v3989, %v448
    %v4010 = vmul.f32 %v3984, %v450
    %v4011 = vmul.f32 %v3989, %v452
    %v4012 = vmul.f32 %v3984, %v454
    %v4013 = vmul.f32 %v3989, %v456
    %v4014 = vmul.f32 %v3984, %v458
    %v4015 = vmul.f32 %v3989, %v460
    %v4016 = vmul.f32 %v3984, %v462
    %v4017 = vmul.f32 %v3989, %v464
    %v4018 = vmul.f32 %v3984, %v466
    %v4019 = vmul.f32 %v3989, %v468
    %v4020 = vmul.f32 %v3984, %v470
    %v4021 = vmul.f32 %v3989, %v472
    %v4022 = vmul.f32 %v3984, %v474
    %v4023 = vmul.f32 %v3989, %v476
    %4040 = vrot.lane.b32.xlu0 %v3992, 96
    %v4041 = vpop.permute.xlu0 %4040
    %4042 = vrot.lane.b32.xlu0 %v3993, 96
    %v4043 = vpop.permute.xlu0 %4042
    %4044 = vrot.lane.b32.xlu0 %v3994, 96
    %v4045 = vpop.permute.xlu0 %4044
    %4046 = vrot.lane.b32.xlu0 %v3995, 96
    %v4047 = vpop.permute.xlu0 %4046
    %4048 = vrot.lane.b32.xlu0 %v3996, 96
    %v4049 = vpop.permute.xlu0 %4048
    %4050 = vrot.lane.b32.xlu0 %v3997, 96
    %v4051 = vpop.permute.xlu0 %4050
    %4052 = vrot.lane.b32.xlu0 %v3998, 96
    %v4053 = vpop.permute.xlu0 %4052
    %4054 = vrot.lane.b32.xlu0 %v3999, 96
    %v4055 = vpop.permute.xlu0 %4054
    %4056 = vrot.lane.b32.xlu0 %v4000, 96
    %v4057 = vpop.permute.xlu0 %4056
    %4058 = vrot.lane.b32.xlu0 %v4001, 96
    %v4059 = vpop.permute.xlu0 %4058
    %4060 = vrot.lane.b32.xlu0 %v4002, 96
    %v4061 = vpop.permute.xlu0 %4060
    %4062 = vrot.lane.b32.xlu0 %v4003, 96
    %v4063 = vpop.permute.xlu0 %4062
    %4064 = vrot.lane.b32.xlu0 %v4004, 96
    %v4065 = vpop.permute.xlu0 %4064
    %4066 = vrot.lane.b32.xlu0 %v4005, 96
    %v4067 = vpop.permute.xlu0 %4066
    %4068 = vrot.lane.b32.xlu0 %v4006, 96
    %v4069 = vpop.permute.xlu0 %4068
    %4070 = vrot.lane.b32.xlu0 %v4007, 96
    %v4071 = vpop.permute.xlu0 %4070
    %v4073 = vsel %vm87, %v3984, 0
    %v4076 = vsel %vm87, %v3989, 0
    %v4078 = vsel %vm87, %v4041, 0
    %v4080 = vsel %vm87, %v4043, 0
    %v4082 = vsel %vm87, %v4045, 0
    %v4084 = vsel %vm87, %v4047, 0
    %v4086 = vsel %vm87, %v4049, 0
    %v4088 = vsel %vm87, %v4051, 0
    %v4090 = vsel %vm87, %v4053, 0
    %v4092 = vsel %vm87, %v4055, 0
    %v4094 = vsel %vm87, %v4057, 0
    %v4096 = vsel %vm87, %v4059, 0
    %v4098 = vsel %vm87, %v4061, 0
    %v4100 = vsel %vm87, %v4063, 0
    %v4102 = vsel %vm87, %v4065, 0
    %v4104 = vsel %vm87, %v4067, 0
    %v4106 = vsel %vm87, %v4069, 0
    %v4108 = vsel %vm87, %v4071, 0
    %4110 = vmatprep.subr.mxu0 0.0
    %4111 = vmatpush1.xpose.msra.mxu0 %v4108
    %4112 = vmatprep.subr.mxu0 0.0
    %4113 = vmatpush1.xpose.msra.mxu0 %v4106
    %4114 = vmatprep.subr.mxu0 0.0
    %4115 = vmatpush1.xpose.msra.mxu0 %v4104
    %4116 = vmatprep.subr.mxu0 0.0
    %4117 = vmatpush1.xpose.msra.mxu0 %v4102
    %4118 = vmatprep.subr.mxu0 0.0
    %4119 = vmatpush1.xpose.msra.mxu0 %v4100
    %4120 = vmatprep.subr.mxu0 0.0
    %4121 = vmatpush1.xpose.msra.mxu0 %v4098
    %4122 = vmatprep.subr.mxu0 0.0
    %4123 = vmatpush1.xpose.msra.mxu0 %v4096
    %4124 = vmatprep.subr.mxu0 0.0
    %4125 = vmatpush1.xpose.msra.mxu0 %v4094
    %4126 = vmatprep.subr.mxu0 0.0
    %4127 = vmatpush1.xpose.msra.mxu0 %v4092
    %4128 = vmatprep.subr.mxu0 0.0
    %4129 = vmatpush1.xpose.msra.mxu0 %v4090
    %4130 = vmatprep.subr.mxu0 0.0
    %4131 = vmatpush1.xpose.msra.mxu0 %v4088
    %4132 = vmatprep.subr.mxu0 0.0
    %4133 = vmatpush1.xpose.msra.mxu0 %v4086
    %4134 = vmatprep.subr.mxu0 0.0
    %4135 = vmatpush1.xpose.msra.mxu0 %v4084
    %4136 = vmatprep.subr.mxu0 0.0
    %4137 = vmatpush1.xpose.msra.mxu0 %v4082
    %4138 = vmatprep.subr.mxu0 0.0
    %4139 = vmatpush1.xpose.msra.mxu0 %v4080
    %4140 = vmatprep.subr.mxu0 0.0
    %4141 = vmatpush1.xpose.msra.mxu0 %v4078
    %4142 = vmatprep.subr.mxu0 0.0
    %4143 = vmatpush2.xpose.msra.mxu0 0.0
    %4144 = vmatprep.subr.mxu0 0.0
    %4145 = vmatpush2.xpose.msra.mxu0 0.0
    %4146 = vmatprep.subr.mxu0 0.0
    %4147 = vmatpush2.xpose.msra.mxu0 0.0
    %4148 = vmatprep.subr.mxu0 0.0
    %4149 = vmatpush2.xpose.msra.mxu0 0.0
    %4150 = vmatprep.subr.mxu0 0.0
    %4151 = vmatpush2.xpose.msra.mxu0 0.0
    %4152 = vmatprep.subr.mxu0 0.0
    %4153 = vmatpush2.xpose.msra.mxu0 0.0
    %4154 = vmatprep.subr.mxu0 0.0
    %4155 = vmatpush2.xpose.msra.mxu0 0.0
    %4156 = vmatprep.subr.mxu0 0.0
    %4157 = vmatpush2.xpose.msra.mxu0 0.0
    %4158 = vmatprep.subr.mxu0 0.0
    %4159 = vmatpush2.xpose.msra.mxu0 0.0
    %4160 = vmatprep.subr.mxu0 0.0
    %4161 = vmatpush2.xpose.msra.mxu0 0.0
    %4162 = vmatprep.subr.mxu0 0.0
    %4163 = vmatpush2.xpose.msra.mxu0 0.0
    %4164 = vmatprep.subr.mxu0 0.0
    %4165 = vmatpush2.xpose.msra.mxu0 0.0
    %4166 = vmatprep.subr.mxu0 0.0
    %4167 = vmatpush2.xpose.msra.mxu0 0.0
    %4168 = vmatprep.subr.mxu0 0.0
    %4169 = vmatpush2.xpose.msra.mxu0 0.0
    %4170 = vmatprep.subr.mxu0 0.0
    %4171 = vmatpush2.xpose.msra.mxu0 0.0
    %4172 = vmatprep.subr.mxu0 0.0
    %4173 = vmatpush2.xpose.msra.mxu0 0.0
    %4174 = vmatprep.mubr.f32.mxu0 0.0
    %4175 = vmatmul.mubr.f32.gmra.mxu0 %v4073
    %v4176 = vpop.f32.mrf.mxu0
    %v4177 = vadd.f32 %v67, %v4176
    %v4178 = vpop.f32.mrf.mxu0
    %4179 = vmatprep.mubr.f32.mxu0 0.0
    %4180 = vmatmul.mubr.f32.gmra.mxu0 %v4076
    %v4181 = vpop.f32.mrf.mxu0
    %v4182 = vadd.f32 %v68, %v4181
    %v4183 = vpop.f32.mrf.mxu0
    %4184 = vdwg.mxu0
    %4185 = vmax.xlane.f32.xlu0 %v4177
    %v4186 = vpop.xlane.xlu0 %4185
    %4187 = vmax.xlane.f32.xlu0 %v4182
    %v4188 = vpop.xlane.xlu0 %4187
    %v4189 = vsub.f32 %v4177, %v4186
    %v4190 = vsub.f32 %v4182, %v4188
    %v4191 = vmul.f32 %v4189, 1.442695
    %v4192 = vpow.pop %v4191
    %v4193 = vmul.f32 %v4190, 1.442695
    %v4194 = vpow.pop %v4193
    %4195 = vmatprep.subr.mxu0 0.0
    %4196 = vmatpush1.msra.mxu0 %v48
    %4197 = vmatprep.subr.mxu0 0.0
    %4198 = vmatpush1.msra.mxu0 %v47
    %4199 = vmatprep.subr.mxu0 0.0
    %4200 = vmatpush1.msra.mxu0 %v46
    %4201 = vmatprep.subr.mxu0 0.0
    %4202 = vmatpush1.msra.mxu0 %v45
    %4203 = vmatprep.subr.mxu0 0.0
    %4204 = vmatpush1.msra.mxu0 %v44
    %4205 = vmatprep.subr.mxu0 0.0
    %4206 = vmatpush1.msra.mxu0 %v43
    %4207 = vmatprep.subr.mxu0 0.0
    %4208 = vmatpush1.msra.mxu0 %v42
    %4209 = vmatprep.subr.mxu0 0.0
    %4210 = vmatpush1.msra.mxu0 %v41
    %4211 = vmatprep.subr.mxu0 0.0
    %4212 = vmatpush1.msra.mxu0 %v40
    %4213 = vmatprep.subr.mxu0 0.0
    %4214 = vmatpush1.msra.mxu0 %v39
    %4215 = vmatprep.subr.mxu0 0.0
    %4216 = vmatpush1.msra.mxu0 %v38
    %4217 = vmatprep.subr.mxu0 0.0
    %4218 = vmatpush1.msra.mxu0 %v37
    %4219 = vmatprep.subr.mxu0 0.0
    %4220 = vmatpush1.msra.mxu0 %v36
    %4221 = vmatprep.subr.mxu0 0.0
    %4222 = vmatpush1.msra.mxu0 %v35
    %4223 = vmatprep.subr.mxu0 0.0
    %4224 = vmatpush1.msra.mxu0 %v34
    %4225 = vmatprep.subr.mxu0 0.0
    %4226 = vmatpush1.msra.mxu0 %v33
    %4227 = vmatprep.subr.mxu0 0.0
    %4228 = vmatpush2.msra.mxu0 0.0
    %4229 = vmatprep.subr.mxu0 0.0
    %4230 = vmatpush2.msra.mxu0 0.0
    %4231 = vmatprep.subr.mxu0 0.0
    %4232 = vmatpush2.msra.mxu0 0.0
    %4233 = vmatprep.subr.mxu0 0.0
    %4234 = vmatpush2.msra.mxu0 0.0
    %4235 = vmatprep.subr.mxu0 0.0
    %4236 = vmatpush2.msra.mxu0 0.0
    %4237 = vmatprep.subr.mxu0 0.0
    %4238 = vmatpush2.msra.mxu0 0.0
    %4239 = vmatprep.subr.mxu0 0.0
    %4240 = vmatpush2.msra.mxu0 0.0
    %4241 = vmatprep.subr.mxu0 0.0
    %4242 = vmatpush2.msra.mxu0 0.0
    %4243 = vmatprep.subr.mxu0 0.0
    %4244 = vmatpush2.msra.mxu0 0.0
    %4245 = vmatprep.subr.mxu0 0.0
    %4246 = vmatpush2.msra.mxu0 0.0
    %4247 = vmatprep.subr.mxu0 0.0
    %4248 = vmatpush2.msra.mxu0 0.0
    %4249 = vmatprep.subr.mxu0 0.0
    %4250 = vmatpush2.msra.mxu0 0.0
    %4251 = vmatprep.subr.mxu0 0.0
    %4252 = vmatpush2.msra.mxu0 0.0
    %4253 = vmatprep.subr.mxu0 0.0
    %4254 = vmatpush2.msra.mxu0 0.0
    %4255 = vmatprep.subr.mxu0 0.0
    %4256 = vmatpush2.msra.mxu0 0.0
    %4257 = vmatprep.subr.mxu0 0.0
    %4258 = vmatpush2.msra.mxu0 0.0
    %4259 = vmatprep.mubr.f32.mxu0 0.0
    %4260 = vmatmul.mubr.f32.gmra.mxu0 %v4192
    %v4261 = vpop.f32.mrf.mxu0
    %v4262 = vadd.f32 0.0, %v4261
    %v4263 = vpop.f32.mrf.mxu0
    %4264 = vmatprep.mubr.f32.mxu0 0.0
    %4265 = vmatmul.mubr.f32.gmra.mxu0 %v4194
    %v4266 = vpop.f32.mrf.mxu0
    %v4267 = vadd.f32 0.0, %v4266
    %v4268 = vpop.f32.mrf.mxu0
    %4269 = vdwg.mxu0
    %v4270 = vrcp.pop %v4262
    %v4271 = vrcp.pop %v4267
    %v4272 = vmul.f32 %v4192, %v4270
    %v4273 = vmul.f32 %v4194, %v4271
    %4290 = vrot.lane.b32.xlu0 %v4008, 64
    %v4291 = vpop.permute.xlu0 %4290
    %4292 = vrot.lane.b32.xlu0 %v4009, 64
    %v4293 = vpop.permute.xlu0 %4292
    %4294 = vrot.lane.b32.xlu0 %v4010, 64
    %v4295 = vpop.permute.xlu0 %4294
    %4296 = vrot.lane.b32.xlu0 %v4011, 64
    %v4297 = vpop.permute.xlu0 %4296
    %4298 = vrot.lane.b32.xlu0 %v4012, 64
    %v4299 = vpop.permute.xlu0 %4298
    %4300 = vrot.lane.b32.xlu0 %v4013, 64
    %v4301 = vpop.permute.xlu0 %4300
    %4302 = vrot.lane.b32.xlu0 %v4014, 64
    %v4303 = vpop.permute.xlu0 %4302
    %4304 = vrot.lane.b32.xlu0 %v4015, 64
    %v4305 = vpop.permute.xlu0 %4304
    %4306 = vrot.lane.b32.xlu0 %v4016, 64
    %v4307 = vpop.permute.xlu0 %4306
    %4308 = vrot.lane.b32.xlu0 %v4017, 64
    %v4309 = vpop.permute.xlu0 %4308
    %4310 = vrot.lane.b32.xlu0 %v4018, 64
    %v4311 = vpop.permute.xlu0 %4310
    %4312 = vrot.lane.b32.xlu0 %v4019, 64
    %v4313 = vpop.permute.xlu0 %4312
    %4314 = vrot.lane.b32.xlu0 %v4020, 64
    %v4315 = vpop.permute.xlu0 %4314
    %4316 = vrot.lane.b32.xlu0 %v4021, 64
    %v4317 = vpop.permute.xlu0 %4316
    %4318 = vrot.lane.b32.xlu0 %v4022, 64
    %v4319 = vpop.permute.xlu0 %4318
    %4320 = vrot.lane.b32.xlu0 %v4023, 64
    %v4321 = vpop.permute.xlu0 %4320
    %4338 = vmatprep.subr.mxu0 0.0
    %4339 = vmatpush1.msra.mxu0 %v4321
    %4340 = vmatprep.subr.mxu0 0.0
    %4341 = vmatpush1.msra.mxu0 %v4319
    %4342 = vmatprep.subr.mxu0 0.0
    %4343 = vmatpush1.msra.mxu0 %v4317
    %4344 = vmatprep.subr.mxu0 0.0
    %4345 = vmatpush1.msra.mxu0 %v4315
    %4346 = vmatprep.subr.mxu0 0.0
    %4347 = vmatpush1.msra.mxu0 %v4313
    %4348 = vmatprep.subr.mxu0 0.0
    %4349 = vmatpush1.msra.mxu0 %v4311
    %4350 = vmatprep.subr.mxu0 0.0
    %4351 = vmatpush1.msra.mxu0 %v4309
    %4352 = vmatprep.subr.mxu0 0.0
    %4353 = vmatpush1.msra.mxu0 %v4307
    %4354 = vmatprep.subr.mxu0 0.0
    %4355 = vmatpush1.msra.mxu0 %v4305
    %4356 = vmatprep.subr.mxu0 0.0
    %4357 = vmatpush1.msra.mxu0 %v4303
    %4358 = vmatprep.subr.mxu0 0.0
    %4359 = vmatpush1.msra.mxu0 %v4301
    %4360 = vmatprep.subr.mxu0 0.0
    %4361 = vmatpush1.msra.mxu0 %v4299
    %4362 = vmatprep.subr.mxu0 0.0
    %4363 = vmatpush1.msra.mxu0 %v4297
    %4364 = vmatprep.subr.mxu0 0.0
    %4365 = vmatpush1.msra.mxu0 %v4295
    %4366 = vmatprep.subr.mxu0 0.0
    %4367 = vmatpush1.msra.mxu0 %v4293
    %4368 = vmatprep.subr.mxu0 0.0
    %4369 = vmatpush1.msra.mxu0 %v4291
    %4370 = vmatprep.subr.mxu0 0.0
    %4371 = vmatpush2.msra.mxu0 0.0
    %4372 = vmatprep.subr.mxu0 0.0
    %4373 = vmatpush2.msra.mxu0 0.0
    %4374 = vmatprep.subr.mxu0 0.0
    %4375 = vmatpush2.msra.mxu0 0.0
    %4376 = vmatprep.subr.mxu0 0.0
    %4377 = vmatpush2.msra.mxu0 0.0
    %4378 = vmatprep.subr.mxu0 0.0
    %4379 = vmatpush2.msra.mxu0 0.0
    %4380 = vmatprep.subr.mxu0 0.0
    %4381 = vmatpush2.msra.mxu0 0.0
    %4382 = vmatprep.subr.mxu0 0.0
    %4383 = vmatpush2.msra.mxu0 0.0
    %4384 = vmatprep.subr.mxu0 0.0
    %4385 = vmatpush2.msra.mxu0 0.0
    %4386 = vmatprep.subr.mxu0 0.0
    %4387 = vmatpush2.msra.mxu0 0.0
    %4388 = vmatprep.subr.mxu0 0.0
    %4389 = vmatpush2.msra.mxu0 0.0
    %4390 = vmatprep.subr.mxu0 0.0
    %4391 = vmatpush2.msra.mxu0 0.0
    %4392 = vmatprep.subr.mxu0 0.0
    %4393 = vmatpush2.msra.mxu0 0.0
    %4394 = vmatprep.subr.mxu0 0.0
    %4395 = vmatpush2.msra.mxu0 0.0
    %4396 = vmatprep.subr.mxu0 0.0
    %4397 = vmatpush2.msra.mxu0 0.0
    %4398 = vmatprep.subr.mxu0 0.0
    %4399 = vmatpush2.msra.mxu0 0.0
    %4400 = vmatprep.subr.mxu0 0.0
    %4401 = vmatpush2.msra.mxu0 0.0
    %4402 = vmatprep.mubr.f32.mxu0 0.0
    %4403 = vmatmul.mubr.f32.gmra.mxu0 %v4272
    %v4404 = vpop.f32.mrf.mxu0
    %v4405 = vadd.f32 0.0, %v4404
    %v4406 = vpop.f32.mrf.mxu0
    %4407 = vmatprep.mubr.f32.mxu0 0.0
    %4408 = vmatmul.mubr.f32.gmra.mxu0 %v4273
    %v4409 = vpop.f32.mrf.mxu0
    %v4410 = vadd.f32 0.0, %v4409
    %v4411 = vpop.f32.mrf.mxu0
    %4412 = vdwg.mxu0
    %v4413 = vlaneseq
    %v4414 = vshrl.u32 %v4413, 7
    %v4415 = vsub.s32 1, %v4414
    %v4416 = vrot.slane %v3875, %v4415
    %v4418 = vsel %vm87, %v4405, 0
    %v4421 = vsel %vm87, %v4410, 0
    %4423 = vmatprep.subr.mxu0 0.0
    %4424 = vmatpush1.msra.mxu0 0.0
    %4425 = vmatprep.subr.mxu0 0.0
    %4426 = vmatpush1.msra.mxu0 0.0
    %4427 = vmatprep.subr.mxu0 0.0
    %4428 = vmatpush1.msra.mxu0 0.0
    %4429 = vmatprep.subr.mxu0 0.0
    %4430 = vmatpush1.msra.mxu0 0.0
    %4431 = vmatprep.subr.mxu0 0.0
    %4432 = vmatpush1.msra.mxu0 0.0
    %4433 = vmatprep.subr.mxu0 0.0
    %4434 = vmatpush1.msra.mxu0 0.0
    %4435 = vmatprep.subr.mxu0 0.0
    %4436 = vmatpush1.msra.mxu0 0.0
    %4437 = vmatprep.subr.mxu0 0.0
    %4438 = vmatpush1.msra.mxu0 0.0
    %4439 = vmatprep.subr.mxu0 0.0
    %4440 = vmatpush1.msra.mxu0 0.0
    %4441 = vmatprep.subr.mxu0 0.0
    %4442 = vmatpush1.msra.mxu0 0.0
    %4443 = vmatprep.subr.mxu0 0.0
    %4444 = vmatpush1.msra.mxu0 0.0
    %4445 = vmatprep.subr.mxu0 0.0
    %4446 = vmatpush1.msra.mxu0 0.0
    %4447 = vmatprep.subr.mxu0 0.0
    %4448 = vmatpush1.msra.mxu0 %v3885
    %4449 = vmatprep.subr.mxu0 0.0
    %4450 = vmatpush1.msra.mxu0 %v3884
    %4451 = vmatprep.subr.mxu0 0.0
    %4452 = vmatpush1.msra.mxu0 %v3883
    %4453 = vmatprep.subr.mxu0 0.0
    %4454 = vmatpush1.msra.mxu0 %v3882
    %4455 = vmatprep.subr.mxu0 0.0
    %4456 = vmatpush2.msra.mxu0 0.0
    %4457 = vmatprep.subr.mxu0 0.0
    %4458 = vmatpush2.msra.mxu0 0.0
    %4459 = vmatprep.subr.mxu0 0.0
    %4460 = vmatpush2.msra.mxu0 0.0
    %4461 = vmatprep.subr.mxu0 0.0
    %4462 = vmatpush2.msra.mxu0 0.0
    %4463 = vmatprep.subr.mxu0 0.0
    %4464 = vmatpush2.msra.mxu0 0.0
    %4465 = vmatprep.subr.mxu0 0.0
    %4466 = vmatpush2.msra.mxu0 0.0
    %4467 = vmatprep.subr.mxu0 0.0
    %4468 = vmatpush2.msra.mxu0 0.0
    %4469 = vmatprep.subr.mxu0 0.0
    %4470 = vmatpush2.msra.mxu0 0.0
    %4471 = vmatprep.subr.mxu0 0.0
    %4472 = vmatpush2.msra.mxu0 0.0
    %4473 = vmatprep.subr.mxu0 0.0
    %4474 = vmatpush2.msra.mxu0 0.0
    %4475 = vmatprep.subr.mxu0 0.0
    %4476 = vmatpush2.msra.mxu0 0.0
    %4477 = vmatprep.subr.mxu0 0.0
    %4478 = vmatpush2.msra.mxu0 0.0
    %4479 = vmatprep.subr.mxu0 0.0
    %4480 = vmatpush2.msra.mxu0 0.0
    %4481 = vmatprep.subr.mxu0 0.0
    %4482 = vmatpush2.msra.mxu0 0.0
    %4483 = vmatprep.subr.mxu0 0.0
    %4484 = vmatpush2.msra.mxu0 0.0
    %4485 = vmatprep.subr.mxu0 0.0
    %4486 = vmatpush2.msra.mxu0 0.0
    %4487 = vmatprep.mubr.f32.mxu0 0.0
    %4488 = vmatmul.mubr.f32.gmra.mxu0 %v4418
    %v4489 = vpop.f32.mrf.mxu0
    %v4490 = vadd.f32 %v4416, %v4489
    %v4491 = vpop.f32.mrf.mxu0
    %4492 = vmatprep.mubr.f32.mxu0 0.0
    %4493 = vmatmul.mubr.f32.gmra.mxu0 %v4421
    %v4494 = vpop.f32.mrf.mxu0
    %v4495 = vadd.f32 %v4416, %v4494
    %v4496 = vpop.f32.mrf.mxu0
    %4497 = vdwg.mxu0
    %v4498 = vadd.f32 %v3872, %v4490
    %v4499 = vadd.f32 %v3873, %v4495
    %v4500 = vsel %vm87, %v4498, 0.0
    %4501 = vadd.xlane.f32.xlu0 %v4500
    %v4502 = vpop.xlane.xlu0 %4501
    %v4503 = vsel %vm87, %v4499, 0.0
    %4504 = vadd.xlane.f32.xlu0 %v4503
    %v4505 = vpop.xlane.xlu0 %4504
    %v4506 = vmul.f32 %v4502, %v991
    %v4507 = vmul.f32 %v4505, %v991
    %v4508 = vmul.f32 %v4498, %v4498
    %v4509 = vmul.f32 %v4499, %v4499
    %v4510 = vsel %vm87, %v4508, 0.0
    %4511 = vadd.xlane.f32.xlu0 %v4510
    %v4512 = vpop.xlane.xlu0 %4511
    %v4513 = vsel %vm87, %v4509, 0.0
    %4514 = vadd.xlane.f32.xlu0 %v4513
    %v4515 = vpop.xlane.xlu0 %4514
    %v4516 = vmul.f32 %v4512, %v991
    %v4517 = vmul.f32 %v4515, %v991
    %v4518 = vmul.f32 %v4506, %v4506
    %v4519 = vmul.f32 %v4507, %v4507
    %v4520 = vsub.f32 %v4516, %v4518
    %v4521 = vsub.f32 %v4517, %v4519
    %v4522 = vsub.f32 %v4498, %v4506
    %v4523 = vsub.f32 %v4499, %v4507
    %v4524 = vadd.f32 %v4520, 1e-05
    %v4525 = vadd.f32 %v4521, 1e-05
    %v4526 = vrsqrt.pop %v4524
    %v4527 = vrsqrt.pop %v4525
    %v4528 = vmul.f32 %v4522, %v4526
    %v4529 = vmul.f32 %v4523, %v4527
    %v4530 = vlaneseq
    %v4531 = vshrl.u32 %v4530, 7
    %v4532 = vsub.s32 2, %v4531
    %v4533 = vrot.slane %v3875, %v4532
    %v4534 = vmul.f32 %v4528, %v4533
    %v4535 = vmul.f32 %v4529, %v4533
    %v4536 = vlaneseq
    %v4537 = vshrl.u32 %v4536, 7
    %v4538 = vsub.s32 3, %v4537
    %v4539 = vrot.slane %v3875, %v4538
    %v4540 = vadd.f32 %v4534, %v4539
    %v4541 = vadd.f32 %v4535, %v4539
    %v4542 = vlaneseq
    %v4543 = vshrl.u32 %v4542, 7
    %v4544 = vsub.s32 4, %v4543
    %v4545 = vrot.slane %v3875, %v4544
    %v4547 = vsel %vm87, %v4540, 0
    %v4550 = vsel %vm87, %v4541, 0
    %4552 = vmatprep.subr.mxu0 0.0
    %4553 = vmatpush1.msra.mxu0 0.0
    %4554 = vmatprep.subr.mxu0 0.0
    %4555 = vmatpush1.msra.mxu0 0.0
    %4556 = vmatprep.subr.mxu0 0.0
    %4557 = vmatpush1.msra.mxu0 0.0
    %4558 = vmatprep.subr.mxu0 0.0
    %4559 = vmatpush1.msra.mxu0 0.0
    %4560 = vmatprep.subr.mxu0 0.0
    %4561 = vmatpush1.msra.mxu0 0.0
    %4562 = vmatprep.subr.mxu0 0.0
    %4563 = vmatpush1.msra.mxu0 0.0
    %4564 = vmatprep.subr.mxu0 0.0
    %4565 = vmatpush1.msra.mxu0 0.0
    %4566 = vmatprep.subr.mxu0 0.0
    %4567 = vmatpush1.msra.mxu0 0.0
    %4568 = vmatprep.subr.mxu0 0.0
    %4569 = vmatpush1.msra.mxu0 0.0
    %4570 = vmatprep.subr.mxu0 0.0
    %4571 = vmatpush1.msra.mxu0 0.0
    %4572 = vmatprep.subr.mxu0 0.0
    %4573 = vmatpush1.msra.mxu0 0.0
    %4574 = vmatprep.subr.mxu0 0.0
    %4575 = vmatpush1.msra.mxu0 0.0
    %4576 = vmatprep.subr.mxu0 0.0
    %4577 = vmatpush1.msra.mxu0 %v3890
    %4578 = vmatprep.subr.mxu0 0.0
    %4579 = vmatpush1.msra.mxu0 %v3889
    %4580 = vmatprep.subr.mxu0 0.0
    %4581 = vmatpush1.msra.mxu0 %v3888
    %4582 = vmatprep.subr.mxu0 0.0
    %4583 = vmatpush1.msra.mxu0 %v3887
    %4584 = vmatprep.subr.mxu0 0.0
    %4585 = vmatpush2.msra.mxu0 0.0
    %4586 = vmatprep.subr.mxu0 0.0
    %4587 = vmatpush2.msra.mxu0 0.0
    %4588 = vmatprep.subr.mxu0 0.0
    %4589 = vmatpush2.msra.mxu0 0.0
    %4590 = vmatprep.subr.mxu0 0.0
    %4591 = vmatpush2.msra.mxu0 0.0
    %4592 = vmatprep.subr.mxu0 0.0
    %4593 = vmatpush2.msra.mxu0 0.0
    %4594 = vmatprep.subr.mxu0 0.0
    %4595 = vmatpush2.msra.mxu0 0.0
    %4596 = vmatprep.subr.mxu0 0.0
    %4597 = vmatpush2.msra.mxu0 0.0
    %4598 = vmatprep.subr.mxu0 0.0
    %4599 = vmatpush2.msra.mxu0 0.0
    %4600 = vmatprep.subr.mxu0 0.0
    %4601 = vmatpush2.msra.mxu0 0.0
    %4602 = vmatprep.subr.mxu0 0.0
    %4603 = vmatpush2.msra.mxu0 0.0
    %4604 = vmatprep.subr.mxu0 0.0
    %4605 = vmatpush2.msra.mxu0 0.0
    %4606 = vmatprep.subr.mxu0 0.0
    %4607 = vmatpush2.msra.mxu0 0.0
    %4608 = vmatprep.subr.mxu0 0.0
    %4609 = vmatpush2.msra.mxu0 0.0
    %4610 = vmatprep.subr.mxu0 0.0
    %4611 = vmatpush2.msra.mxu0 0.0
    %4612 = vmatprep.subr.mxu0 0.0
    %4613 = vmatpush2.msra.mxu0 0.0
    %4614 = vmatprep.subr.mxu0 0.0
    %4615 = vmatpush2.msra.mxu0 0.0
    %4616 = vmatprep.mubr.f32.mxu0 0.0
    %4617 = vmatmul.mubr.f32.gmra.mxu0 %v4547
    %v4618 = vpop.f32.mrf.mxu0
    %v4619 = vadd.f32 %v4545, %v4618
    %v4620 = vpop.f32.mrf.mxu0
    %4621 = vmatprep.mubr.f32.mxu0 0.0
    %4622 = vmatmul.mubr.f32.gmra.mxu0 %v4550
    %v4623 = vpop.f32.mrf.mxu0
    %v4624 = vadd.f32 %v4545, %v4623
    %v4625 = vpop.f32.mrf.mxu0
    %4626 = vdwg.mxu0
    %v4627 = vmax.f32 %v4619, 0.0
    %v4628 = vmax.f32 %v4624, 0.0
    %v4629 = vlaneseq
    %v4630 = vshrl.u32 %v4629, 7
    %v4631 = vsub.s32 5, %v4630
    %v4632 = vrot.slane %v3875, %v4631
    %4633 = vmatprep.subr.mxu0 0.0
    %4634 = vmatpush1.msra.mxu0 %v3906
    %4635 = vmatprep.subr.mxu0 0.0
    %4636 = vmatpush1.msra.mxu0 %v3905
    %4637 = vmatprep.subr.mxu0 0.0
    %4638 = vmatpush1.msra.mxu0 %v3904
    %4639 = vmatprep.subr.mxu0 0.0
    %4640 = vmatpush1.msra.mxu0 %v3903
    %4641 = vmatprep.subr.mxu0 0.0
    %4642 = vmatpush1.msra.mxu0 %v3902
    %4643 = vmatprep.subr.mxu0 0.0
    %4644 = vmatpush1.msra.mxu0 %v3901
    %4645 = vmatprep.subr.mxu0 0.0
    %4646 = vmatpush1.msra.mxu0 %v3900
    %4647 = vmatprep.subr.mxu0 0.0
    %4648 = vmatpush1.msra.mxu0 %v3899
    %4649 = vmatprep.subr.mxu0 0.0
    %4650 = vmatpush1.msra.mxu0 %v3898
    %4651 = vmatprep.subr.mxu0 0.0
    %4652 = vmatpush1.msra.mxu0 %v3897
    %4653 = vmatprep.subr.mxu0 0.0
    %4654 = vmatpush1.msra.mxu0 %v3896
    %4655 = vmatprep.subr.mxu0 0.0
    %4656 = vmatpush1.msra.mxu0 %v3895
    %4657 = vmatprep.subr.mxu0 0.0
    %4658 = vmatpush1.msra.mxu0 %v3894
    %4659 = vmatprep.subr.mxu0 0.0
    %4660 = vmatpush1.msra.mxu0 %v3893
    %4661 = vmatprep.subr.mxu0 0.0
    %4662 = vmatpush1.msra.mxu0 %v3892
    %4663 = vmatprep.subr.mxu0 0.0
    %4664 = vmatpush1.msra.mxu0 %v3891
    %4665 = vmatprep.subr.mxu0 0.0
    %4666 = vmatpush2.msra.mxu0 0.0
    %4667 = vmatprep.subr.mxu0 0.0
    %4668 = vmatpush2.msra.mxu0 0.0
    %4669 = vmatprep.subr.mxu0 0.0
    %4670 = vmatpush2.msra.mxu0 0.0
    %4671 = vmatprep.subr.mxu0 0.0
    %4672 = vmatpush2.msra.mxu0 0.0
    %4673 = vmatprep.subr.mxu0 0.0
    %4674 = vmatpush2.msra.mxu0 0.0
    %4675 = vmatprep.subr.mxu0 0.0
    %4676 = vmatpush2.msra.mxu0 0.0
    %4677 = vmatprep.subr.mxu0 0.0
    %4678 = vmatpush2.msra.mxu0 0.0
    %4679 = vmatprep.subr.mxu0 0.0
    %4680 = vmatpush2.msra.mxu0 0.0
    %4681 = vmatprep.subr.mxu0 0.0
    %4682 = vmatpush2.msra.mxu0 0.0
    %4683 = vmatprep.subr.mxu0 0.0
    %4684 = vmatpush2.msra.mxu0 0.0
    %4685 = vmatprep.subr.mxu0 0.0
    %4686 = vmatpush2.msra.mxu0 0.0
    %4687 = vmatprep.subr.mxu0 0.0
    %4688 = vmatpush2.msra.mxu0 0.0
    %4689 = vmatprep.subr.mxu0 0.0
    %4690 = vmatpush2.msra.mxu0 0.0
    %4691 = vmatprep.subr.mxu0 0.0
    %4692 = vmatpush2.msra.mxu0 0.0
    %4693 = vmatprep.subr.mxu0 0.0
    %4694 = vmatpush2.msra.mxu0 0.0
    %4695 = vmatprep.subr.mxu0 0.0
    %4696 = vmatpush2.msra.mxu0 0.0
    %4697 = vmatprep.mubr.f32.mxu0 0.0
    %4698 = vmatmul.mubr.f32.gmra.mxu0 %v4627
    %v4699 = vpop.f32.mrf.mxu0
    %v4700 = vadd.f32 %v4632, %v4699
    %v4701 = vpop.f32.mrf.mxu0
    %4702 = vmatprep.mubr.f32.mxu0 0.0
    %4703 = vmatmul.mubr.f32.gmra.mxu0 %v4628
    %v4704 = vpop.f32.mrf.mxu0
    %v4705 = vadd.f32 %v4632, %v4704
    %v4706 = vpop.f32.mrf.mxu0
    %4707 = vdwg.mxu0
    %v4708 = vadd.f32 %v4540, %v4700
    %v4709 = vadd.f32 %v4541, %v4705
    %v4710 = vsel %vm87, %v4708, 0.0
    %4711 = vadd.xlane.f32.xlu0 %v4710
    %v4712 = vpop.xlane.xlu0 %4711
    %v4713 = vsel %vm87, %v4709, 0.0
    %4714 = vadd.xlane.f32.xlu0 %v4713
    %v4715 = vpop.xlane.xlu0 %4714
    %v4716 = vmul.f32 %v4712, %v991
    %v4717 = vmul.f32 %v4715, %v991
    %v4718 = vmul.f32 %v4708, %v4708
    %v4719 = vmul.f32 %v4709, %v4709
    %v4720 = vsel %vm87, %v4718, 0.0
    %4721 = vadd.xlane.f32.xlu0 %v4720
    %v4722 = vpop.xlane.xlu0 %4721
    %v4723 = vsel %vm87, %v4719, 0.0
    %4724 = vadd.xlane.f32.xlu0 %v4723
    %v4725 = vpop.xlane.xlu0 %4724
    %v4726 = vmul.f32 %v4722, %v991
    %v4727 = vmul.f32 %v4725, %v991
    %v4728 = vmul.f32 %v4716, %v4716
    %v4729 = vmul.f32 %v4717, %v4717
    %v4730 = vsub.f32 %v4726, %v4728
    %v4731 = vsub.f32 %v4727, %v4729
    %v4732 = vsub.f32 %v4708, %v4716
    %v4733 = vsub.f32 %v4709, %v4717
    %v4734 = vadd.f32 %v4730, 1e-05
    %v4735 = vadd.f32 %v4731, 1e-05
    %v4736 = vrsqrt.pop %v4734
    %v4737 = vrsqrt.pop %v4735
    %v4738 = vmul.f32 %v4732, %v4736
    %v4739 = vmul.f32 %v4733, %v4737
    %v4740 = vlaneseq
    %v4741 = vshrl.u32 %v4740, 7
    %v4742 = vsub.s32 6, %v4741
    %v4743 = vrot.slane %v3875, %v4742
    %v4744 = vmul.f32 %v4738, %v4743
    %v4745 = vmul.f32 %v4739, %v4743
    %v4746 = vlaneseq
    %v4747 = vshrl.u32 %v4746, 7
    %v4748 = vsub.s32 7, %v4747
    %v4749 = vrot.slane %v3875, %v4748
    %v4750 = vadd.f32 %v4744, %v4749
    %v4751 = vadd.f32 %v4745, %v4749
    %4752 = vst.msk [vmem:[#allocation6] sm:$0xff] %vm87, %v4750
    %4753 = vst.msk [vmem:[#allocation6 + $0x8] sm:$0xff] %vm87, %v4751
    %s4754 = scalar_lea.vmem %s2, 112
    %v4755 = vld [vmem:[%s4754] sm:$0xff]
    %v4756 = vld [vmem:[%s4754 + $0x8] sm:$0xff]
    %v4757 = vld [vmem:[%s4754 + $0x10] sm:$0xff]
    %v4758 = vld [vmem:[%s4754 + $0x18] sm:$0xff]
    %v4759 = vld [vmem:[%s4754 + $0x60] sm:$0x1]
    %v4760 = vld [vmem:[%s4754 + $0x20] sm:$0xff]
    %v4761 = vld [vmem:[%s4754 + $0x28] sm:$0xff]
    %v4762 = vld [vmem:[%s4754 + $0x30] sm:$0xff]
    %v4763 = vld [vmem:[%s4754 + $0x38] sm:$0xff]
    %v4764 = vld [vmem:[%s4754 + $0x40] sm:$0xff]
    %v4765 = vld [vmem:[%s4754 + $0x48] sm:$0xff]
    %v4766 = vld [vmem:[%s4754 + $0x50] sm:$0xff]
    %v4767 = vld [vmem:[%s4754 + $0x58] sm:$0xff]
    %v4768 = vld [vmem:[%s4754 + $0x68] sm:$0x1]
    %v4769 = vlaneseq
    %v4770 = vshrl.u32 %v4769, 7
    %v4771 = vsub.s32 0, %v4770
    %v4772 = vrot.slane %v4759, %v4771
    %v4774 = vsel %vm87, %v4750, 0
    %v4777 = vsel %vm87, %v4751, 0
    %4779 = vmatprep.subr.mxu0 0.0
    %4780 = vmatpush1.msra.mxu0 0.0
    %4781 = vmatprep.subr.mxu0 0.0
    %4782 = vmatpush1.msra.mxu0 0.0
    %4783 = vmatprep.subr.mxu0 0.0
    %4784 = vmatpush1.msra.mxu0 0.0
    %4785 = vmatprep.subr.mxu0 0.0
    %4786 = vmatpush1.msra.mxu0 0.0
    %4787 = vmatprep.subr.mxu0 0.0
    %4788 = vmatpush1.msra.mxu0 0.0
    %4789 = vmatprep.subr.mxu0 0.0
    %4790 = vmatpush1.msra.mxu0 0.0
    %4791 = vmatprep.subr.mxu0 0.0
    %4792 = vmatpush1.msra.mxu0 0.0
    %4793 = vmatprep.subr.mxu0 0.0
    %4794 = vmatpush1.msra.mxu0 0.0
    %4795 = vmatprep.subr.mxu0 0.0
    %4796 = vmatpush1.msra.mxu0 0.0
    %4797 = vmatprep.subr.mxu0 0.0
    %4798 = vmatpush1.msra.mxu0 0.0
    %4799 = vmatprep.subr.mxu0 0.0
    %4800 = vmatpush1.msra.mxu0 0.0
    %4801 = vmatprep.subr.mxu0 0.0
    %4802 = vmatpush1.msra.mxu0 0.0
    %4803 = vmatprep.subr.mxu0 0.0
    %4804 = vmatpush1.msra.mxu0 %v4758
    %4805 = vmatprep.subr.mxu0 0.0
    %4806 = vmatpush1.msra.mxu0 %v4757
    %4807 = vmatprep.subr.mxu0 0.0
    %4808 = vmatpush1.msra.mxu0 %v4756
    %4809 = vmatprep.subr.mxu0 0.0
    %4810 = vmatpush1.msra.mxu0 %v4755
    %4811 = vmatprep.subr.mxu0 0.0
    %4812 = vmatpush2.msra.mxu0 0.0
    %4813 = vmatprep.subr.mxu0 0.0
    %4814 = vmatpush2.msra.mxu0 0.0
    %4815 = vmatprep.subr.mxu0 0.0
    %4816 = vmatpush2.msra.mxu0 0.0
    %4817 = vmatprep.subr.mxu0 0.0
    %4818 = vmatpush2.msra.mxu0 0.0
    %4819 = vmatprep.subr.mxu0 0.0
    %4820 = vmatpush2.msra.mxu0 0.0
    %4821 = vmatprep.subr.mxu0 0.0
    %4822 = vmatpush2.msra.mxu0 0.0
    %4823 = vmatprep.subr.mxu0 0.0
    %4824 = vmatpush2.msra.mxu0 0.0
    %4825 = vmatprep.subr.mxu0 0.0
    %4826 = vmatpush2.msra.mxu0 0.0
    %4827 = vmatprep.subr.mxu0 0.0
    %4828 = vmatpush2.msra.mxu0 0.0
    %4829 = vmatprep.subr.mxu0 0.0
    %4830 = vmatpush2.msra.mxu0 0.0
    %4831 = vmatprep.subr.mxu0 0.0
    %4832 = vmatpush2.msra.mxu0 0.0
    %4833 = vmatprep.subr.mxu0 0.0
    %4834 = vmatpush2.msra.mxu0 0.0
    %4835 = vmatprep.subr.mxu0 0.0
    %4836 = vmatpush2.msra.mxu0 0.0
    %4837 = vmatprep.subr.mxu0 0.0
    %4838 = vmatpush2.msra.mxu0 0.0
    %4839 = vmatprep.subr.mxu0 0.0
    %4840 = vmatpush2.msra.mxu0 0.0
    %4841 = vmatprep.subr.mxu0 0.0
    %4842 = vmatpush2.msra.mxu0 0.0
    %4843 = vmatprep.mubr.f32.mxu0 0.0
    %4844 = vmatmul.mubr.f32.gmra.mxu0 %v4774
    %v4845 = vpop.f32.mrf.mxu0
    %v4846 = vadd.f32 %v4772, %v4845
    %v4847 = vpop.f32.mrf.mxu0
    %4848 = vmatprep.mubr.f32.mxu0 0.0
    %4849 = vmatmul.mubr.f32.gmra.mxu0 %v4777
    %v4850 = vpop.f32.mrf.mxu0
    %v4851 = vadd.f32 %v4772, %v4850
    %v4852 = vpop.f32.mrf.mxu0
    %4853 = vdwg.mxu0
    %v4854 = vmax.f32 %v4846, 0.0
    %v4855 = vmax.f32 %v4851, 0.0
    %v4856 = vlaneseq
    %v4857 = vshrl.u32 %v4856, 7
    %v4858 = vsub.s32 0, %v4857
    %v4859 = vrot.slane %v4768, %v4858
    %v4861 = vsel %vm175, %v4854, 0
    %v4864 = vsel %vm175, %v4855, 0
    %4866 = vmatprep.subr.mxu0 0.0
    %4867 = vmatpush1.msra.mxu0 0.0
    %4868 = vmatprep.subr.mxu0 0.0
    %4869 = vmatpush1.msra.mxu0 0.0
    %4870 = vmatprep.subr.mxu0 0.0
    %4871 = vmatpush1.msra.mxu0 0.0
    %4872 = vmatprep.subr.mxu0 0.0
    %4873 = vmatpush1.msra.mxu0 0.0
    %4874 = vmatprep.subr.mxu0 0.0
    %4875 = vmatpush1.msra.mxu0 0.0
    %4876 = vmatprep.subr.mxu0 0.0
    %4877 = vmatpush1.msra.mxu0 0.0
    %4878 = vmatprep.subr.mxu0 0.0
    %4879 = vmatpush1.msra.mxu0 0.0
    %4880 = vmatprep.subr.mxu0 0.0
    %4881 = vmatpush1.msra.mxu0 0.0
    %4882 = vmatprep.subr.mxu0 0.0
    %4883 = vmatpush1.msra.mxu0 %v4767
    %4884 = vmatprep.subr.mxu0 0.0
    %4885 = vmatpush1.msra.mxu0 %v4766
    %4886 = vmatprep.subr.mxu0 0.0
    %4887 = vmatpush1.msra.mxu0 %v4765
    %4888 = vmatprep.subr.mxu0 0.0
    %4889 = vmatpush1.msra.mxu0 %v4764
    %4890 = vmatprep.subr.mxu0 0.0
    %4891 = vmatpush1.msra.mxu0 %v4763
    %4892 = vmatprep.subr.mxu0 0.0
    %4893 = vmatpush1.msra.mxu0 %v4762
    %4894 = vmatprep.subr.mxu0 0.0
    %4895 = vmatpush1.msra.mxu0 %v4761
    %4896 = vmatprep.subr.mxu0 0.0
    %4897 = vmatpush1.msra.mxu0 %v4760
    %4898 = vmatprep.subr.mxu0 0.0
    %4899 = vmatpush2.msra.mxu0 0.0
    %4900 = vmatprep.subr.mxu0 0.0
    %4901 = vmatpush2.msra.mxu0 0.0
    %4902 = vmatprep.subr.mxu0 0.0
    %4903 = vmatpush2.msra.mxu0 0.0
    %4904 = vmatprep.subr.mxu0 0.0
    %4905 = vmatpush2.msra.mxu0 0.0
    %4906 = vmatprep.subr.mxu0 0.0
    %4907 = vmatpush2.msra.mxu0 0.0
    %4908 = vmatprep.subr.mxu0 0.0
    %4909 = vmatpush2.msra.mxu0 0.0
    %4910 = vmatprep.subr.mxu0 0.0
    %4911 = vmatpush2.msra.mxu0 0.0
    %4912 = vmatprep.subr.mxu0 0.0
    %4913 = vmatpush2.msra.mxu0 0.0
    %4914 = vmatprep.subr.mxu0 0.0
    %4915 = vmatpush2.msra.mxu0 0.0
    %4916 = vmatprep.subr.mxu0 0.0
    %4917 = vmatpush2.msra.mxu0 0.0
    %4918 = vmatprep.subr.mxu0 0.0
    %4919 = vmatpush2.msra.mxu0 0.0
    %4920 = vmatprep.subr.mxu0 0.0
    %4921 = vmatpush2.msra.mxu0 0.0
    %4922 = vmatprep.subr.mxu0 0.0
    %4923 = vmatpush2.msra.mxu0 0.0
    %4924 = vmatprep.subr.mxu0 0.0
    %4925 = vmatpush2.msra.mxu0 0.0
    %4926 = vmatprep.subr.mxu0 0.0
    %4927 = vmatpush2.msra.mxu0 0.0
    %4928 = vmatprep.subr.mxu0 0.0
    %4929 = vmatpush2.msra.mxu0 0.0
    %4930 = vmatprep.mubr.f32.mxu0 0.0
    %4931 = vmatmul.mubr.f32.gmra.mxu0 %v4861
    %v4932 = vpop.f32.mrf.mxu0
    %v4933 = vadd.f32 %v4859, %v4932
    %v4934 = vpop.f32.mrf.mxu0
    %4935 = vmatprep.mubr.f32.mxu0 0.0
    %4936 = vmatmul.mubr.f32.gmra.mxu0 %v4864
    %v4937 = vpop.f32.mrf.mxu0
    %v4938 = vadd.f32 %v4859, %v4937
    %v4939 = vpop.f32.mrf.mxu0
    %4940 = vdwg.mxu0
    %v4941 = vadd.f32 %v249, %v4933
    %v4942 = vadd.f32 %v254, %v4938
    %v4943 = vsub.f32 0.0, %v4941
    %v4944 = vsub.f32 0.0, %v4942
    %v4945 = vmul.f32 %v4943, 1.442695
    %v4946 = vpow.pop %v4945
    %v4947 = vmul.f32 %v4944, 1.442695
    %v4948 = vpow.pop %v4947
    %v4949 = vadd.f32 %v4946, 1.0
    %v4950 = vadd.f32 %v4948, 1.0
    %v4951 = vrcp.pop %v4949
    %v4952 = vrcp.pop %v4950
    %4953 = vst [vmem:[#allocation2] sm:$0xff] %v4951
    %4954 = vst [vmem:[#allocation2 + $0x8] sm:$0xff] %v4952
    // Predicated region
    $region30: #{tpu_custom_call.1} parent=1 // pred_check
      _
    $region31: #{tpu_custom_call.1} parent=1 // pred_check_branch
      %4956 = sbr.rel (0) target = $region33
    $region32: #{tpu_custom_call.1} parent=1 // pred_region
      %s4958 = ssub.s32 256, 256
      %4959 = vsyncadd [#allocation3], %s4958
      %s4960 = sshll.u32 [#allocation2], 4
      %s4961 = int_to_ptr.vmem [resolvable:$true] %s4960
      %4966 = dma.vmem_to_hbm [thread:$0]  %s4961, 256, %s7, [#allocation3], 128, 128, 8
    $region33: #{tpu_custom_call.1} parent=1 // pred_fallthru
      _
    // Predicated region
    $region34: #{tpu_custom_call.1} parent=1 // pred_check
      _
    $region35: #{tpu_custom_call.1} parent=1 // pred_check_branch
      %4968 = sbr.rel (0) target = $region37
    $region36: #{tpu_custom_call.1} parent=1 // pred_region
      %s4970 = ssub.s32 256, 256
      %4971 = vsyncadd [#allocation5], %s4970
      %s4972 = sshll.u32 [#allocation4], 4
      %s4973 = int_to_ptr.vmem [resolvable:$true] %s4972
      %4978 = dma.vmem_to_hbm [thread:$0]  %s4973, 256, %s8, [#allocation5], 128, 128, 8
    $region37: #{tpu_custom_call.1} parent=1 // pred_fallthru
      _
    // Predicated region
    $region38: #{tpu_custom_call.1} parent=1 // pred_check
      _
    $region39: #{tpu_custom_call.1} parent=1 // pred_check_branch
      %4980 = sbr.rel (0) target = $region41
    $region40: #{tpu_custom_call.1} parent=1 // pred_region
      %s4982 = ssub.s32 256, 256
      %4983 = vsyncadd [#allocation5], %s4982
      %s4984 = sshll.u32 [#allocation6], 4
      %s4985 = int_to_ptr.vmem [resolvable:$true] %s4984
      %4990 = dma.vmem_to_hbm [thread:$0]  %s4985, 256, %s9, [#allocation5], 128, 128, 8
    $region41: #{tpu_custom_call.1} parent=1 // pred_fallthru
      _
    // Predicated region
    $region42: #{tpu_custom_call.1} parent=1 // pred_check
      _
    $region43: #{tpu_custom_call.1} parent=1 // pred_check_branch
      %4992 = sbr.rel (0) target = $region45
    $region44: #{tpu_custom_call.1} parent=1 // pred_region
      %4993 = dma.done [#allocation3], 256
    $region45: #{tpu_custom_call.1} parent=1 // pred_fallthru
      _
    // Predicated region
    $region46: #{tpu_custom_call.1} parent=1 // pred_check
      _
    $region47: #{tpu_custom_call.1} parent=1 // pred_check_branch
      %4995 = sbr.rel (0) target = $region49
    $region48: #{tpu_custom_call.1} parent=1 // pred_region
      %4996 = dma.done [#allocation5], 256
    $region49: #{tpu_custom_call.1} parent=1 // pred_fallthru
      _
    // Predicated region
    $region50: #{tpu_custom_call.1} parent=1 // pred_check
      _
    $region51: #{tpu_custom_call.1} parent=1 // pred_check_branch
      %4998 = sbr.rel (0) target = $region53
    $region52: #{tpu_custom_call.1} parent=1 // pred_region
      %4999 = dma.done [#allocation5], 256
    $region53: #{tpu_custom_call.1} parent=1 // pred_fallthru
      _
    %5000 = vsyncpa [#allocation3], 1
    %5001 = vsyncpa [#allocation5], 1

</llo_original>
